<compile_context>
chip_gen: v7x
topology: tpu7x:2x2x1
jax: 0.10.0
libtpu: 0.0.40
codegen_flags: <defaults>
</compile_context>

<pallas_src>
import functools

import jax
import jax.numpy as jnp
from jax import lax
from jax.experimental import pallas as pl
from jax.experimental.pallas import tpu as pltpu

LOG_2PI = 1.8378770664093453


# ----------------------------------------------------------------------------
# Kernel 1: MLP transition net + Normal(mu, exp(logvar/2)) emission log-prob,
# computed feature-major (transposed) so every load/store is lane-dense.
#   packed : (Din + z_dim, N)   [history windows ; target z], N = length*B
#   w1t/b1t/w2t/b2t : transposed (and column-permuted) MLP weights
#   selt   : (C, C*z_dim)       block-diagonal 0/1 per-class-sum matrix
#   out    : (C, N)             emission log-probs, columns ordered (t, b)
# ----------------------------------------------------------------------------
def _mlp_emission_kernel(xz_ref, w1t_ref, b1t_ref, w2t_ref, b2t_ref, selt_ref,
                         o_ref, *, n_class, z_dim, d_in):
    xz = xz_ref[...]                                         # (Din + z_dim, TN)
    x = xz[:d_in, :]                                         # (Din, TN)
    zt = xz[d_in:, :]                                        # (z_dim, TN)
    h = jnp.dot(w1t_ref[...], x, preferred_element_type=jnp.float32) + b1t_ref[...]
    h = jnp.maximum(h, 0.0)
    # w2t/b2t rows were permuted in the wrapper to [all mu | all logvar]
    o = jnp.dot(w2t_ref[...], h, preferred_element_type=jnp.float32) + b2t_ref[...]
    cz = n_class * z_dim
    mu = o[:cz, :]                                           # (C*z_dim, TN)
    lv = o[cz:, :]                                           # (C*z_dim, TN)
    zrep = jnp.concatenate([zt] * n_class, axis=0)           # (C*z_dim, TN)
    diff = zrep - mu
    lp = -0.5 * (diff * diff * jnp.exp(-lv) + lv)            # (C*z_dim, TN)
    # per-class sum as one small MXU matmul (off the critical path) + constant
    o_ref[...] = (jnp.dot(selt_ref[...], lp, preferred_element_type=jnp.float32)
                  - 0.5 * LOG_2PI * float(z_dim))


def mlp_emission_t(packed, w1t, b1t, w2t, b2t, selt, *, n_class, z_dim, d_in,
                   tile_cols=2048):
    P, N = packed.shape
    H = w1t.shape[0]
    Dout = w2t.shape[0]
    cz = n_class * z_dim
    if N > tile_cols:
        TN = tile_cols                       # multiple of 128
    elif N >= 512 and N % 256 == 0:
        TN = N // 2                          # >=2 grid steps so both v7x cores work
    else:
        TN = N                               # single block (equals full dim)
    grid = (pl.cdiv(N, TN),)
    kern = functools.partial(_mlp_emission_kernel,
                             n_class=n_class, z_dim=z_dim, d_in=d_in)
    return pl.pallas_call(
        kern,
        out_shape=jax.ShapeDtypeStruct((n_class, N), jnp.float32),
        grid=grid,
        in_specs=[
            pl.BlockSpec((P, TN), lambda i: (0, i)),
            pl.BlockSpec((H, d_in), lambda i: (0, 0)),
            pl.BlockSpec((H, 1), lambda i: (0, 0)),
            pl.BlockSpec((Dout, H), lambda i: (0, 0)),
            pl.BlockSpec((Dout, 1), lambda i: (0, 0)),
            pl.BlockSpec((n_class, cz), lambda i: (0, 0)),
        ],
        out_specs=pl.BlockSpec((n_class, TN), lambda i: (0, i)),
        compiler_params=pltpu.CompilerParams(
            dimension_semantics=("parallel",),
            vmem_limit_bytes=64 * 1024 * 1024),
    )(packed, w1t, b1t, w2t, b2t, selt)


# ----------------------------------------------------------------------------
# Kernel 2: HMM scaled forward pass (logp_x = sum of log-scalers) + Viterbi.
# Batch-on-lanes layout; class dim C is fully unrolled (pure VPU/EUP per step).
#   lpc   : (T, C, B)  emission log-probs   (batch on lanes, T leading)
#   logA  : (C, C) SMEM   row-softmaxed transition       [from, to]
#   aprob : (C, C) SMEM   exp(logA)
#   logpi : (C,)   SMEM   softmaxed initial distribution
# outputs:
#   logp  : (1, B)
#   c     : (T, 1, B) int32 Viterbi path
# ----------------------------------------------------------------------------
def _hmm_fwd_viterbi_kernel(lpc_ref, logA_ref, aprob_ref, logpi_ref,
                            logp_ref, c_ref, psi_ref, *, T, C, unroll):
    # transition scalars: read once from SMEM, used as scalar operands of VPU ops
    logA = [[logA_ref[i, j] for j in range(C)] for i in range(C)]
    aprob = [[aprob_ref[i, j] for j in range(C)] for i in range(C)]
    logpi = [logpi_ref[c] for c in range(C)]

    def rows(ref, t):
        full = ref[t]                                        # (C, TILE_B)
        return [full[c:c + 1, :] for c in range(C)]

    def argmax_rows(rs):                                     # unrolled VPU argmax over C
        best = rs[0]
        idx = jnp.zeros(best.shape, jnp.int32)
        for i in range(1, C):
            take = rs[i] > best
            best = jnp.where(take, rs[i], best)
            idx = jnp.where(take, jnp.int32(i), idx)
        return best, idx

    def max_rows(rs):
        m = rs[0]
        for i in range(1, C):
            m = jnp.maximum(m, rs[i])
        return m

    def sum_rows(rs):
        s = rs[0]
        for i in range(1, C):
            s = s + rs[i]
        return s

    def rcp(s):
        r = pl.reciprocal(s, approx=True)                    # EUP, off the VPU slots
        return r * (2.0 - s * r)                             # one Newton step

    # ---- t = 0
    lpc0 = rows(lpc_ref, 0)
    a0 = [lpc0[c] + logpi[c] for c in range(C)]
    m0 = max_rows(a0)
    e0 = [jnp.exp(a0[c] - m0) for c in range(C)]
    s0 = sum_rows(e0)
    r0 = rcp(s0)
    alpha = tuple(e0[c] * r0 for c in range(C))              # normalized fwd probs
    scaler = m0 + jnp.log(s0)                                # running sum of log-scalers
    delta = tuple(a0[c] - m0 for c in range(C))              # Viterbi score (shifted)

    def body(t, carry):
        alpha, scaler, delta = carry
        lpct = rows(lpc_ref, t)
        # scaled forward recursion in probability space: scalar*vector FMAs only
        pred = []
        for j in range(C):
            pj = alpha[0] * aprob[0][j]
            for i in range(1, C):
                pj = pj + alpha[i] * aprob[i][j]
            pred.append(pj)
        m = max_rows(lpct)
        e = [jnp.exp(lpct[c] - m) * pred[c] for c in range(C)]
        s = sum_rows(e)
        r = rcp(s)
        alpha_new = tuple(e[c] * r for c in range(C))
        scaler_new = scaler + m + jnp.log(s)
        # Viterbi max-plus recursion, unrolled over classes
        d = []
        psis = []
        for j in range(C):
            cand = [delta[i] + logA[i][j] for i in range(C)]
            best, idx = argmax_rows(cand)
            d.append(best + lpct[j])
            psis.append(idx)
        psi_ref[t] = jnp.concatenate(psis, axis=0)           # (C, TILE_B) lane-dense
        dm = max_rows(d)
        delta_new = tuple(d[c] - dm for c in range(C))       # argmax-invariant shift
        return alpha_new, scaler_new, delta_new

    alpha, scaler, delta = lax.fori_loop(1, T, body, (alpha, scaler, delta),
                                         unroll=unroll)
    logp_ref[...] = scaler

    # ---- Viterbi backtrace (unrolled select chain over C, no gathers)
    _, c_last = argmax_rows(list(delta))
    c_ref[T - 1] = c_last

    def back_body(k, c_next):
        t = T - 2 - k
        psi_rows = rows(psi_ref, t + 1)
        c_t = psi_rows[0]
        for j in range(1, C):
            c_t = jnp.where(c_next == jnp.int32(j), psi_rows[j], c_t)
        c_ref[t] = c_t
        return c_t

    lax.fori_loop(0, T - 1, back_body, c_last, unroll=unroll)


def hmm_forward_viterbi(lpc_tcb, log_A_norm, A_prob, log_pi_norm, *, unroll=8):
    T, C, B = lpc_tcb.shape
    TILE_B = min(B, 128)
    grid = (pl.cdiv(B, TILE_B),)
    u = max(1, min(unroll, max(T - 1, 1)))
    kern = functools.partial(_hmm_fwd_viterbi_kernel, T=T, C=C, unroll=u)
    logp, c_t1b = pl.pallas_call(
        kern,
        out_shape=(jax.ShapeDtypeStruct((1, B), jnp.float32),
                   jax.ShapeDtypeStruct((T, 1, B), jnp.int32)),
        grid=grid,
        in_specs=[
            pl.BlockSpec((T, C, TILE_B), lambda b: (0, 0, b)),
            pl.BlockSpec(memory_space=pltpu.MemorySpace.SMEM),
            pl.BlockSpec(memory_space=pltpu.MemorySpace.SMEM),
            pl.BlockSpec(memory_space=pltpu.MemorySpace.SMEM),
        ],
        out_specs=(pl.BlockSpec((1, TILE_B), lambda b: (0, b)),
                   pl.BlockSpec((T, 1, TILE_B), lambda b: (0, 0, b))),
        scratch_shapes=[pltpu.VMEM((T, C, TILE_B), jnp.int32)],
        compiler_params=pltpu.CompilerParams(
            dimension_semantics=("parallel",),
            vmem_limit_bytes=64 * 1024 * 1024),
    )(lpc_tcb, log_A_norm, A_prob, log_pi_norm)
    return logp[0], jnp.transpose(c_t1b[:, 0, :], (1, 0))


# ----------------------------------------------------------------------------
# Full CartPoleHMMz.forward (action_case == 1)
# ----------------------------------------------------------------------------
def cartpole_hmmz_forward(params, z, a, *, n_class, lags, z_dim):
    B, T_total, _ = z.shape
    length = T_total - lags

    # glue: embedding lookup + concat + history unfold (matches torch.unfold
    # order), built feature-major with (t, b)-ordered columns and packed with
    # the target z into ONE lane-dense input stream.
    a_emb = params["a_emb"][a]                               # (B, T_total, action_dim)
    z_a = jnp.concatenate([z, a_emb], axis=-1)               # (B, T_total, D)
    D = z_a.shape[-1]
    d_in = lags * D
    z_a_H = jnp.stack([z_a[:, l:l + length] for l in range(lags)], axis=0)  # (lags,B,L,D)
    xT = jnp.transpose(z_a_H, (0, 3, 2, 1)).reshape(d_in, length * B)       # (Din, N)
    ztT = jnp.transpose(z[:, lags:, :], (2, 1, 0)).reshape(z_dim, length * B)
    packed = jnp.concatenate([xT, ztT], axis=0)              # (Din + z_dim, N)

    # permute MLP head rows: [c0 mu, c0 lv, c1 mu, ...] -> [all mu | all logvar]
    perm = ([c * 2 * z_dim + d for c in range(n_class) for d in range(z_dim)]
            + [c * 2 * z_dim + z_dim + d for c in range(n_class) for d in range(z_dim)])
    perm = jnp.asarray(perm, dtype=jnp.int32)
    w1t = params["w1"].T                                     # (H, Din)
    b1t = params["b1"].reshape(-1, 1)                        # (H, 1)
    w2t = params["w2"][:, perm].T                            # (Dout, H)
    b2t = params["b2"][:, perm].reshape(-1, 1)               # (Dout, 1)
    selt = jnp.kron(jnp.eye(n_class, dtype=jnp.float32),
                    jnp.ones((1, z_dim), jnp.float32))       # (C, C*z_dim)

    # hot path 1: MLP + emission log-prob (Pallas, lane-dense, "parallel")
    lpc_cn = mlp_emission_t(packed, w1t, b1t, w2t, b2t, selt,
                            n_class=n_class, z_dim=z_dim, d_in=d_in)
    # (C, N) -> (T, C, B): tiny XLA permute so kernel 2 indexes time on the
    # leading (untiled) dim.
    lpc_tcb = jnp.transpose(lpc_cn.reshape(n_class, length, B), (1, 0, 2))

    # hot path 2: HMM scaled forward + Viterbi (Pallas, batch-on-lanes)
    log_A_norm = jax.nn.log_softmax(params["log_A"], axis=1)
    A_prob = jnp.exp(log_A_norm)
    log_pi_norm = jax.nn.log_softmax(params["log_pi"], axis=0)
    logp_x, c_est = hmm_forward_viterbi(lpc_tcb, log_A_norm, A_prob, log_pi_norm)

    # standard-normal prior over the history steps
    z_H0 = z[:, :lags]
    logp_x_H = jnp.sum(-0.5 * z_H0 * z_H0 - 0.5 * LOG_2PI, axis=(-1, -2))
    return logp_x + logp_x_H, c_est


# ----------------------------------------------------------------------------
# Pure-JAX reference (mirrors the PyTorch module) for correctness checking.
# ----------------------------------------------------------------------------
def reference_forward(params, z, a, *, n_class, lags, z_dim):
    B, T_total, _ = z.shape
    length = T_total - lags
    a_emb = params["a_emb"][a]
    z_a = jnp.concatenate([z, a_emb], axis=-1)
    z_a_H = jnp.stack([z_a[:, l:l + length] for l in range(lags)], axis=2)
    x = z_a_H.reshape(B, length, -1)
    h = jnp.maximum(x @ params["w1"] + params["b1"][0], 0.0)
    o = (h @ params["w2"] + params["b2"][0]).reshape(B, length, n_class, 2 * z_dim)
    mu, lv = o[..., :z_dim], o[..., z_dim:]
    zt = z[:, lags:, None, :]
    lpc = jnp.sum(-0.5 * ((zt - mu) ** 2 * jnp.exp(-lv) + lv + LOG_2PI), axis=-1)
    log_A = jax.nn.log_softmax(params["log_A"], axis=1)
    log_pi = jax.nn.log_softmax(params["log_pi"], axis=0)

    lpc_t = jnp.moveaxis(lpc[:, 1:], 1, 0)                   # (L-1, B, C)

    def fwd_step(la, lpct):
        la_new = lpct + jax.scipy.special.logsumexp(la[:, :, None] + log_A[None], axis=1)
        return la_new, None

    la, _ = lax.scan(fwd_step, lpc[:, 0] + log_pi, lpc_t)
    logp = jax.scipy.special.logsumexp(la, axis=-1)

    def vit_step(d, lpct):
        m = d[:, :, None] + log_A[None]
        return jnp.max(m, axis=1) + lpct, jnp.argmax(m, axis=1)

    d_last, psi = lax.scan(vit_step, lpc[:, 0] + log_pi, lpc_t)
    c_last = jnp.argmax(d_last, axis=-1)

    def back_step(c_next, psi_t):
        c_t = jnp.take_along_axis(psi_t, c_next[:, None], axis=1)[:, 0]
        return c_t, c_t

    _, cs = lax.scan(back_step, c_last, psi, reverse=True)
    c = jnp.concatenate([cs, c_last[None]], axis=0).T        # (B, L)
    logp_H = jnp.sum(-0.5 * z[:, :lags] ** 2 - 0.5 * LOG_2PI, axis=(-1, -2))
    return logp + logp_H, c


def init_params(key, n_class, lags, z_dim, hidden_dim, action_num=2, action_dim=2):
    Din = (z_dim + action_dim) * lags
    Dout = n_class * z_dim * 2
    ks = jax.random.split(key, 5)
    return dict(
        log_A=jax.random.normal(ks[0], (n_class, n_class), jnp.float32),
        log_pi=jax.random.normal(ks[1], (n_class,), jnp.float32),
        a_emb=jax.random.normal(ks[2], (action_num, action_dim), jnp.float32),
        w1=jax.random.normal(ks[3], (Din, hidden_dim), jnp.float32) / jnp.sqrt(float(Din)),
        b1=jnp.zeros((1, hidden_dim), jnp.float32),
        w2=jax.random.normal(ks[4], (hidden_dim, Dout), jnp.float32) / jnp.sqrt(float(hidden_dim)),
        b2=jnp.zeros((1, Dout), jnp.float32),
    )


if __name__ == "__main__":
    n_class, lags, z_dim, hidden_dim = 4, 2, 4, 32
    B, length = 2, 8
    T_total = lags + length

    key = jax.random.PRNGKey(0)
    kp, kz, ka = jax.random.split(key, 3)
    params = init_params(kp, n_class, lags, z_dim, hidden_dim)
    z = jax.random.normal(kz, (B, T_total, z_dim), jnp.float32)
    a = jax.random.randint(ka, (B, T_total), 0, 2, dtype=jnp.int32)

    fwd = jax.jit(functools.partial(cartpole_hmmz_forward,
                                    n_class=n_class, lags=lags, z_dim=z_dim))
    logp, c_est = fwd(params, z, a)
    jax.block_until_ready((logp, c_est))

    assert logp.shape == (B,) and c_est.shape == (B, length)
    assert bool(jnp.all(jnp.isfinite(logp)))
    assert bool(jnp.all((c_est >= 0) & (c_est < n_class)))

    # correctness vs the pure-JAX reference (tolerance covers the prob-space
    # scaled forward + approx-reciprocal-with-Newton normalization)
    logp_ref, c_ref = jax.jit(functools.partial(reference_forward,
                                                n_class=n_class, lags=lags,
                                                z_dim=z_dim))(params, z, a)
    assert bool(jnp.allclose(logp, logp_ref, rtol=1e-4, atol=1e-2))
    assert bool(jnp.all(c_est == c_ref))
    print("KERNEL_OK")
</pallas_src>

<mosaic_0001>
module attributes {stable_mosaic.version = 11 : i64} {
  func.func @_mlp_emission_kernel(%arg0: i32, %arg1: memref<16x16xf32, #tpu.memory_space<vmem>>, %arg2: memref<32x12xf32, #tpu.memory_space<vmem>>, %arg3: memref<32x1xf32, #tpu.memory_space<vmem>>, %arg4: memref<32x32xf32, #tpu.memory_space<vmem>>, %arg5: memref<32x1xf32, #tpu.memory_space<vmem>>, %arg6: memref<4x16xf32, #tpu.memory_space<vmem>>, %arg7: memref<4x16xf32, #tpu.memory_space<vmem>>) attributes {dimension_semantics = [#tpu.dimension_semantics<parallel>], iteration_bounds = array<i64: 1>, scalar_prefetch = 0 : i64, scratch_operands = 0 : i64, tpu.core_type = #tpu.core_type<tc>, window_params = [{transform_indices = @transform_0, window_bounds = array<i64: 16, 16>}, {pipeline_mode = #tpu.pipeline_mode<synchronous>, transform_indices = @transform_1, window_bounds = array<i64: 32, 12>}, {pipeline_mode = #tpu.pipeline_mode<synchronous>, transform_indices = @transform_2, window_bounds = array<i64: 32, 1>}, {pipeline_mode = #tpu.pipeline_mode<synchronous>, transform_indices = @transform_3, window_bounds = array<i64: 32, 32>}, {pipeline_mode = #tpu.pipeline_mode<synchronous>, transform_indices = @transform_4, window_bounds = array<i64: 32, 1>}, {pipeline_mode = #tpu.pipeline_mode<synchronous>, transform_indices = @transform_5, window_bounds = array<i64: 4, 16>}, {transform_indices = @transform_6, window_bounds = array<i64: 4, 16>}]} {
    %c0 = arith.constant 0 : index
    %c0_0 = arith.constant 0 : index
    %0 = vector.load %arg1[%c0, %c0_0] : memref<16x16xf32, #tpu.memory_space<vmem>>, vector<16x16xf32>
    %1 = vector.extract_strided_slice %0 {offsets = [0, 0], sizes = [12, 16], strides = [1, 1]} : vector<16x16xf32> to vector<12x16xf32>
    %2 = vector.extract_strided_slice %0 {offsets = [12, 0], sizes = [4, 16], strides = [1, 1]} : vector<16x16xf32> to vector<4x16xf32>
    %c0_1 = arith.constant 0 : index
    %c0_2 = arith.constant 0 : index
    %3 = vector.load %arg2[%c0_1, %c0_2] : memref<32x12xf32, #tpu.memory_space<vmem>>, vector<32x12xf32>
    %cst = arith.constant dense<0.000000e+00> : vector<32x16xf32>
    %4 = tpu.matmul %3, %1, %cst {dimension_numbers = #tpu.dot_dimension_numbers<[1], [0], [0], [1], [0, 0, 1, 1], [], []>} : vector<32x12xf32>, vector<12x16xf32>, vector<32x16xf32> -> vector<32x16xf32>
    %c0_3 = arith.constant 0 : index
    %c0_4 = arith.constant 0 : index
    %5 = vector.load %arg3[%c0_3, %c0_4] : memref<32x1xf32, #tpu.memory_space<vmem>>, vector<32x1xf32>
    %6 = vector.broadcast %5 : vector<32x1xf32> to vector<32x16xf32>
    %7 = arith.addf %4, %6 : vector<32x16xf32>
    %cst_5 = arith.constant 0.000000e+00 : f32
    %8 = vector.broadcast %cst_5 : f32 to vector<32x16xf32>
    %9 = arith.maximumf %7, %8 : vector<32x16xf32>
    %c0_6 = arith.constant 0 : index
    %c0_7 = arith.constant 0 : index
    %10 = vector.load %arg4[%c0_6, %c0_7] : memref<32x32xf32, #tpu.memory_space<vmem>>, vector<32x32xf32>
    %cst_8 = arith.constant dense<0.000000e+00> : vector<32x16xf32>
    %11 = tpu.matmul %10, %9, %cst_8 {dimension_numbers = #tpu.dot_dimension_numbers<[1], [0], [0], [1], [0, 0, 1, 1], [], []>} : vector<32x32xf32>, vector<32x16xf32>, vector<32x16xf32> -> vector<32x16xf32>
    %c0_9 = arith.constant 0 : index
    %c0_10 = arith.constant 0 : index
    %12 = vector.load %arg5[%c0_9, %c0_10] : memref<32x1xf32, #tpu.memory_space<vmem>>, vector<32x1xf32>
    %13 = vector.broadcast %12 : vector<32x1xf32> to vector<32x16xf32>
    %14 = arith.addf %11, %13 : vector<32x16xf32>
    %15 = vector.extract_strided_slice %14 {offsets = [0, 0], sizes = [16, 16], strides = [1, 1]} : vector<32x16xf32> to vector<16x16xf32>
    %16 = vector.extract_strided_slice %14 {offsets = [16, 0], sizes = [16, 16], strides = [1, 1]} : vector<32x16xf32> to vector<16x16xf32>
    %17 = tpu.concatenate %2, %2, %2, %2 in 0 : vector<4x16xf32>, vector<4x16xf32>, vector<4x16xf32>, vector<4x16xf32> -> vector<16x16xf32>
    %18 = arith.subf %17, %15 : vector<16x16xf32>
    %19 = arith.mulf %18, %18 : vector<16x16xf32>
    %cst_11 = arith.constant 0.000000e+00 : f32
    %20 = vector.broadcast %cst_11 : f32 to vector<16x16xf32>
    %21 = arith.subf %20, %16 : vector<16x16xf32>
    %22 = math.exp %21 : vector<16x16xf32>
    %23 = arith.mulf %19, %22 : vector<16x16xf32>
    %24 = arith.addf %23, %16 : vector<16x16xf32>
    %cst_12 = arith.constant -5.000000e-01 : f32
    %25 = vector.broadcast %cst_12 : f32 to vector<16x16xf32>
    %26 = arith.mulf %25, %24 : vector<16x16xf32>
    %c0_13 = arith.constant 0 : index
    %c0_14 = arith.constant 0 : index
    %27 = vector.load %arg6[%c0_13, %c0_14] : memref<4x16xf32, #tpu.memory_space<vmem>>, vector<4x16xf32>
    %cst_15 = arith.constant dense<0.000000e+00> : vector<4x16xf32>
    %28 = tpu.matmul %27, %26, %cst_15 {dimension_numbers = #tpu.dot_dimension_numbers<[1], [0], [0], [1], [0, 0, 1, 1], [], []>} : vector<4x16xf32>, vector<16x16xf32>, vector<4x16xf32> -> vector<4x16xf32>
    %cst_16 = arith.constant 3.67575407 : f32
    %29 = vector.broadcast %cst_16 : f32 to vector<4x16xf32>
    %30 = arith.subf %28, %29 : vector<4x16xf32>
    %c0_17 = arith.constant 0 : index
    %c0_18 = arith.constant 0 : index
    %31 = vector.load %arg7[%c0_17, %c0_18] : memref<4x16xf32, #tpu.memory_space<vmem>>, vector<4x16xf32>
    tpu.vector_store %arg7[%c0_17, %c0_18], %30 {strides = array<i32>} : memref<4x16xf32, #tpu.memory_space<vmem>>, vector<4x16xf32>,
    return
  }
  func.func @transform_0(%arg0: i32) -> (i32, i32) {
    %c0_i32 = arith.constant 0 : i32
    %c0_i32_0 = arith.constant 0 : i32
    return %c0_i32, %arg0 : i32, i32
  }
  func.func @transform_1(%arg0: i32) -> (i32, i32) {
    %c0_i32 = arith.constant 0 : i32
    %c0_i32_0 = arith.constant 0 : i32
    %c0_i32_1 = arith.constant 0 : i32
    return %c0_i32, %c0_i32_0 : i32, i32
  }
  func.func @transform_2(%arg0: i32) -> (i32, i32) {
    %c0_i32 = arith.constant 0 : i32
    %c0_i32_0 = arith.constant 0 : i32
    %c0_i32_1 = arith.constant 0 : i32
    return %c0_i32, %c0_i32_0 : i32, i32
  }
  func.func @transform_3(%arg0: i32) -> (i32, i32) {
    %c0_i32 = arith.constant 0 : i32
    %c0_i32_0 = arith.constant 0 : i32
    %c0_i32_1 = arith.constant 0 : i32
    return %c0_i32, %c0_i32_0 : i32, i32
  }
  func.func @transform_4(%arg0: i32) -> (i32, i32) {
    %c0_i32 = arith.constant 0 : i32
    %c0_i32_0 = arith.constant 0 : i32
    %c0_i32_1 = arith.constant 0 : i32
    return %c0_i32, %c0_i32_0 : i32, i32
  }
  func.func @transform_5(%arg0: i32) -> (i32, i32) {
    %c0_i32 = arith.constant 0 : i32
    %c0_i32_0 = arith.constant 0 : i32
    %c0_i32_1 = arith.constant 0 : i32
    return %c0_i32, %c0_i32_0 : i32, i32
  }
  func.func @transform_6(%arg0: i32) -> (i32, i32) {
    %c0_i32 = arith.constant 0 : i32
    %c0_i32_0 = arith.constant 0 : i32
    return %c0_i32, %arg0 : i32, i32
  }
}

module attributes {stable_mosaic.version = 11 : i64} {
  func.func @_hmm_fwd_viterbi_kernel(%arg0: i32, %arg1: memref<8x4x2xf32, #tpu.memory_space<vmem>>, %arg2: memref<4x4xf32, #tpu.memory_space<smem>>, %arg3: memref<4x4xf32, #tpu.memory_space<smem>>, %arg4: memref<4xf32, #tpu.memory_space<smem>>, %arg5: memref<1x2xf32, #tpu.memory_space<vmem>>, %arg6: memref<8x1x2xi32, #tpu.memory_space<vmem>>, %arg7: memref<8x4x2xi32, #tpu.memory_space<vmem>>) attributes {dimension_semantics = [#tpu.dimension_semantics<parallel>], iteration_bounds = array<i64: 1>, scalar_prefetch = 0 : i64, scratch_operands = 1 : i64, tpu.core_type = #tpu.core_type<tc>, window_params = [{transform_indices = @transform_0, window_bounds = array<i64: 8, 4, 2>}, {transform_indices = @transform_1, window_bounds = array<i64: 4, 4>}, {transform_indices = @transform_2, window_bounds = array<i64: 4, 4>}, {transform_indices = @transform_3, window_bounds = array<i64: 4>}, {transform_indices = @transform_4, window_bounds = array<i64: 1, 2>}, {transform_indices = @transform_5, window_bounds = array<i64: 8, 1, 2>}]} {
    %c0 = arith.constant 0 : index
    %c0_0 = arith.constant 0 : index
    %0 = memref.load %arg2[%c0, %c0_0] : memref<4x4xf32, #tpu.memory_space<smem>>
    %c0_1 = arith.constant 0 : index
    %c1 = arith.constant 1 : index
    %1 = memref.load %arg2[%c0_1, %c1] : memref<4x4xf32, #tpu.memory_space<smem>>
    %c0_2 = arith.constant 0 : index
    %c2 = arith.constant 2 : index
    %2 = memref.load %arg2[%c0_2, %c2] : memref<4x4xf32, #tpu.memory_space<smem>>
    %c0_3 = arith.constant 0 : index
    %c3 = arith.constant 3 : index
    %3 = memref.load %arg2[%c0_3, %c3] : memref<4x4xf32, #tpu.memory_space<smem>>
    %c1_4 = arith.constant 1 : index
    %c0_5 = arith.constant 0 : index
    %4 = memref.load %arg2[%c1_4, %c0_5] : memref<4x4xf32, #tpu.memory_space<smem>>
    %c1_6 = arith.constant 1 : index
    %c1_7 = arith.constant 1 : index
    %5 = memref.load %arg2[%c1_6, %c1_7] : memref<4x4xf32, #tpu.memory_space<smem>>
    %c1_8 = arith.constant 1 : index
    %c2_9 = arith.constant 2 : index
    %6 = memref.load %arg2[%c1_8, %c2_9] : memref<4x4xf32, #tpu.memory_space<smem>>
    %c1_10 = arith.constant 1 : index
    %c3_11 = arith.constant 3 : index
    %7 = memref.load %arg2[%c1_10, %c3_11] : memref<4x4xf32, #tpu.memory_space<smem>>
    %c2_12 = arith.constant 2 : index
    %c0_13 = arith.constant 0 : index
    %8 = memref.load %arg2[%c2_12, %c0_13] : memref<4x4xf32, #tpu.memory_space<smem>>
    %c2_14 = arith.constant 2 : index
    %c1_15 = arith.constant 1 : index
    %9 = memref.load %arg2[%c2_14, %c1_15] : memref<4x4xf32, #tpu.memory_space<smem>>
    %c2_16 = arith.constant 2 : index
    %c2_17 = arith.constant 2 : index
    %10 = memref.load %arg2[%c2_16, %c2_17] : memref<4x4xf32, #tpu.memory_space<smem>>
    %c2_18 = arith.constant 2 : index
    %c3_19 = arith.constant 3 : index
    %11 = memref.load %arg2[%c2_18, %c3_19] : memref<4x4xf32, #tpu.memory_space<smem>>
    %c3_20 = arith.constant 3 : index
    %c0_21 = arith.constant 0 : index
    %12 = memref.load %arg2[%c3_20, %c0_21] : memref<4x4xf32, #tpu.memory_space<smem>>
    %c3_22 = arith.constant 3 : index
    %c1_23 = arith.constant 1 : index
    %13 = memref.load %arg2[%c3_22, %c1_23] : memref<4x4xf32, #tpu.memory_space<smem>>
    %c3_24 = arith.constant 3 : index
    %c2_25 = arith.constant 2 : index
    %14 = memref.load %arg2[%c3_24, %c2_25] : memref<4x4xf32, #tpu.memory_space<smem>>
    %c3_26 = arith.constant 3 : index
    %c3_27 = arith.constant 3 : index
    %15 = memref.load %arg2[%c3_26, %c3_27] : memref<4x4xf32, #tpu.memory_space<smem>>
    %c0_28 = arith.constant 0 : index
    %c0_29 = arith.constant 0 : index
    %16 = memref.load %arg3[%c0_28, %c0_29] : memref<4x4xf32, #tpu.memory_space<smem>>
    %c0_30 = arith.constant 0 : index
    %c1_31 = arith.constant 1 : index
    %17 = memref.load %arg3[%c0_30, %c1_31] : memref<4x4xf32, #tpu.memory_space<smem>>
    %c0_32 = arith.constant 0 : index
    %c2_33 = arith.constant 2 : index
    %18 = memref.load %arg3[%c0_32, %c2_33] : memref<4x4xf32, #tpu.memory_space<smem>>
    %c0_34 = arith.constant 0 : index
    %c3_35 = arith.constant 3 : index
    %19 = memref.load %arg3[%c0_34, %c3_35] : memref<4x4xf32, #tpu.memory_space<smem>>
    %c1_36 = arith.constant 1 : index
    %c0_37 = arith.constant 0 : index
    %20 = memref.load %arg3[%c1_36, %c0_37] : memref<4x4xf32, #tpu.memory_space<smem>>
    %c1_38 = arith.constant 1 : index
    %c1_39 = arith.constant 1 : index
    %21 = memref.load %arg3[%c1_38, %c1_39] : memref<4x4xf32, #tpu.memory_space<smem>>
    %c1_40 = arith.constant 1 : index
    %c2_41 = arith.constant 2 : index
    %22 = memref.load %arg3[%c1_40, %c2_41] : memref<4x4xf32, #tpu.memory_space<smem>>
    %c1_42 = arith.constant 1 : index
    %c3_43 = arith.constant 3 : index
    %23 = memref.load %arg3[%c1_42, %c3_43] : memref<4x4xf32, #tpu.memory_space<smem>>
    %c2_44 = arith.constant 2 : index
    %c0_45 = arith.constant 0 : index
    %24 = memref.load %arg3[%c2_44, %c0_45] : memref<4x4xf32, #tpu.memory_space<smem>>
    %c2_46 = arith.constant 2 : index
    %c1_47 = arith.constant 1 : index
    %25 = memref.load %arg3[%c2_46, %c1_47] : memref<4x4xf32, #tpu.memory_space<smem>>
    %c2_48 = arith.constant 2 : index
    %c2_49 = arith.constant 2 : index
    %26 = memref.load %arg3[%c2_48, %c2_49] : memref<4x4xf32, #tpu.memory_space<smem>>
    %c2_50 = arith.constant 2 : index
    %c3_51 = arith.constant 3 : index
    %27 = memref.load %arg3[%c2_50, %c3_51] : memref<4x4xf32, #tpu.memory_space<smem>>
    %c3_52 = arith.constant 3 : index
    %c0_53 = arith.constant 0 : index
    %28 = memref.load %arg3[%c3_52, %c0_53] : memref<4x4xf32, #tpu.memory_space<smem>>
    %c3_54 = arith.constant 3 : index
    %c1_55 = arith.constant 1 : index
    %29 = memref.load %arg3[%c3_54, %c1_55] : memref<4x4xf32, #tpu.memory_space<smem>>
    %c3_56 = arith.constant 3 : index
    %c2_57 = arith.constant 2 : index
    %30 = memref.load %arg3[%c3_56, %c2_57] : memref<4x4xf32, #tpu.memory_space<smem>>
    %c3_58 = arith.constant 3 : index
    %c3_59 = arith.constant 3 : index
    %31 = memref.load %arg3[%c3_58, %c3_59] : memref<4x4xf32, #tpu.memory_space<smem>>
    %c0_60 = arith.constant 0 : index
    %32 = memref.load %arg4[%c0_60] : memref<4xf32, #tpu.memory_space<smem>>
    %c1_61 = arith.constant 1 : index
    %33 = memref.load %arg4[%c1_61] : memref<4xf32, #tpu.memory_space<smem>>
    %c2_62 = arith.constant 2 : index
    %34 = memref.load %arg4[%c2_62] : memref<4xf32, #tpu.memory_space<smem>>
    %c3_63 = arith.constant 3 : index
    %35 = memref.load %arg4[%c3_63] : memref<4xf32, #tpu.memory_space<smem>>
    %c0_64 = arith.constant 0 : index
    %c0_65 = arith.constant 0 : index
    %c0_66 = arith.constant 0 : index
    %36 = vector.load %arg1[%c0_64, %c0_65, %c0_66] : memref<8x4x2xf32, #tpu.memory_space<vmem>>, vector<1x4x2xf32>
    %37 = vector.shape_cast %36 : vector<1x4x2xf32> to vector<4x2xf32>
    %38 = vector.extract_strided_slice %37 {offsets = [0, 0], sizes = [1, 2], strides = [1, 1]} : vector<4x2xf32> to vector<1x2xf32>
    %39 = vector.extract_strided_slice %37 {offsets = [1, 0], sizes = [1, 2], strides = [1, 1]} : vector<4x2xf32> to vector<1x2xf32>
    %40 = vector.extract_strided_slice %37 {offsets = [2, 0], sizes = [1, 2], strides = [1, 1]} : vector<4x2xf32> to vector<1x2xf32>
    %41 = vector.extract_strided_slice %37 {offsets = [3, 0], sizes = [1, 2], strides = [1, 1]} : vector<4x2xf32> to vector<1x2xf32>
    %42 = vector.broadcast %32 : f32 to vector<1x2xf32>
    %43 = arith.addf %38, %42 : vector<1x2xf32>
    %44 = vector.broadcast %33 : f32 to vector<1x2xf32>
    %45 = arith.addf %39, %44 : vector<1x2xf32>
    %46 = vector.broadcast %34 : f32 to vector<1x2xf32>
    %47 = arith.addf %40, %46 : vector<1x2xf32>
    %48 = vector.broadcast %35 : f32 to vector<1x2xf32>
    %49 = arith.addf %41, %48 : vector<1x2xf32>
    %50 = arith.maximumf %43, %45 : vector<1x2xf32>
    %51 = arith.maximumf %50, %47 : vector<1x2xf32>
    %52 = arith.maximumf %51, %49 : vector<1x2xf32>
    %53 = arith.subf %43, %52 : vector<1x2xf32>
    %54 = math.exp %53 : vector<1x2xf32>
    %55 = arith.subf %45, %52 : vector<1x2xf32>
    %56 = math.exp %55 : vector<1x2xf32>
    %57 = arith.subf %47, %52 : vector<1x2xf32>
    %58 = math.exp %57 : vector<1x2xf32>
    %59 = arith.subf %49, %52 : vector<1x2xf32>
    %60 = math.exp %59 : vector<1x2xf32>
    %61 = arith.addf %54, %56 : vector<1x2xf32>
    %62 = arith.addf %61, %58 : vector<1x2xf32>
    %63 = arith.addf %62, %60 : vector<1x2xf32>
    %64 = tpu.reciprocal %63 {approx = true} : vector<1x2xf32> -> vector<1x2xf32>
    %65 = arith.mulf %63, %64 : vector<1x2xf32>
    %cst = arith.constant 2.000000e+00 : f32
    %66 = vector.broadcast %cst : f32 to vector<1x2xf32>
    %67 = arith.subf %66, %65 : vector<1x2xf32>
    %68 = arith.mulf %64, %67 : vector<1x2xf32>
    %69 = arith.mulf %54, %68 : vector<1x2xf32>
    %70 = arith.mulf %56, %68 : vector<1x2xf32>
    %71 = arith.mulf %58, %68 : vector<1x2xf32>
    %72 = arith.mulf %60, %68 : vector<1x2xf32>
    %73 = math.log %63 : vector<1x2xf32>
    %74 = arith.addf %52, %73 : vector<1x2xf32>
    %75 = arith.subf %43, %52 : vector<1x2xf32>
    %76 = arith.subf %45, %52 : vector<1x2xf32>
    %77 = arith.subf %47, %52 : vector<1x2xf32>
    %78 = arith.subf %49, %52 : vector<1x2xf32>
    %c1_i32 = arith.constant 1 : i32
    %79 = arith.index_cast %c1_i32 : i32 to index
    %c0_67 = arith.constant 0 : index
    %c0_68 = arith.constant 0 : index
    %80 = vector.load %arg1[%79, %c0_67, %c0_68] : memref<8x4x2xf32, #tpu.memory_space<vmem>>, vector<1x4x2xf32>
    %81 = vector.shape_cast %80 : vector<1x4x2xf32> to vector<4x2xf32>
    %82 = vector.extract_strided_slice %81 {offsets = [0, 0], sizes = [1, 2], strides = [1, 1]} : vector<4x2xf32> to vector<1x2xf32>
    %83 = vector.extract_strided_slice %81 {offsets = [1, 0], sizes = [1, 2], strides = [1, 1]} : vector<4x2xf32> to vector<1x2xf32>
    %84 = vector.extract_strided_slice %81 {offsets = [2, 0], sizes = [1, 2], strides = [1, 1]} : vector<4x2xf32> to vector<1x2xf32>
    %85 = vector.extract_strided_slice %81 {offsets = [3, 0], sizes = [1, 2], strides = [1, 1]} : vector<4x2xf32> to vector<1x2xf32>
    %86 = vector.broadcast %16 : f32 to vector<1x2xf32>
    %87 = arith.mulf %69, %86 : vector<1x2xf32>
    %88 = vector.broadcast %20 : f32 to vector<1x2xf32>
    %89 = arith.mulf %70, %88 : vector<1x2xf32>
    %90 = arith.addf %87, %89 : vector<1x2xf32>
    %91 = vector.broadcast %24 : f32 to vector<1x2xf32>
    %92 = arith.mulf %71, %91 : vector<1x2xf32>
    %93 = arith.addf %90, %92 : vector<1x2xf32>
    %94 = vector.broadcast %28 : f32 to vector<1x2xf32>
    %95 = arith.mulf %72, %94 : vector<1x2xf32>
    %96 = arith.addf %93, %95 : vector<1x2xf32>
    %97 = vector.broadcast %17 : f32 to vector<1x2xf32>
    %98 = arith.mulf %69, %97 : vector<1x2xf32>
    %99 = vector.broadcast %21 : f32 to vector<1x2xf32>
    %100 = arith.mulf %70, %99 : vector<1x2xf32>
    %101 = arith.addf %98, %100 : vector<1x2xf32>
    %102 = vector.broadcast %25 : f32 to vector<1x2xf32>
    %103 = arith.mulf %71, %102 : vector<1x2xf32>
    %104 = arith.addf %101, %103 : vector<1x2xf32>
    %105 = vector.broadcast %29 : f32 to vector<1x2xf32>
    %106 = arith.mulf %72, %105 : vector<1x2xf32>
    %107 = arith.addf %104, %106 : vector<1x2xf32>
    %108 = vector.broadcast %18 : f32 to vector<1x2xf32>
    %109 = arith.mulf %69, %108 : vector<1x2xf32>
    %110 = vector.broadcast %22 : f32 to vector<1x2xf32>
    %111 = arith.mulf %70, %110 : vector<1x2xf32>
    %112 = arith.addf %109, %111 : vector<1x2xf32>
    %113 = vector.broadcast %26 : f32 to vector<1x2xf32>
    %114 = arith.mulf %71, %113 : vector<1x2xf32>
    %115 = arith.addf %112, %114 : vector<1x2xf32>
    %116 = vector.broadcast %30 : f32 to vector<1x2xf32>
    %117 = arith.mulf %72, %116 : vector<1x2xf32>
    %118 = arith.addf %115, %117 : vector<1x2xf32>
    %119 = vector.broadcast %19 : f32 to vector<1x2xf32>
    %120 = arith.mulf %69, %119 : vector<1x2xf32>
    %121 = vector.broadcast %23 : f32 to vector<1x2xf32>
    %122 = arith.mulf %70, %121 : vector<1x2xf32>
    %123 = arith.addf %120, %122 : vector<1x2xf32>
    %124 = vector.broadcast %27 : f32 to vector<1x2xf32>
    %125 = arith.mulf %71, %124 : vector<1x2xf32>
    %126 = arith.addf %123, %125 : vector<1x2xf32>
    %127 = vector.broadcast %31 : f32 to vector<1x2xf32>
    %128 = arith.mulf %72, %127 : vector<1x2xf32>
    %129 = arith.addf %126, %128 : vector<1x2xf32>
    %130 = arith.maximumf %82, %83 : vector<1x2xf32>
    %131 = arith.maximumf %130, %84 : vector<1x2xf32>
    %132 = arith.maximumf %131, %85 : vector<1x2xf32>
    %133 = arith.subf %82, %132 : vector<1x2xf32>
    %134 = math.exp %133 : vector<1x2xf32>
    %135 = arith.mulf %134, %96 : vector<1x2xf32>
    %136 = arith.subf %83, %132 : vector<1x2xf32>
    %137 = math.exp %136 : vector<1x2xf32>
    %138 = arith.mulf %137, %107 : vector<1x2xf32>
    %139 = arith.subf %84, %132 : vector<1x2xf32>
    %140 = math.exp %139 : vector<1x2xf32>
    %141 = arith.mulf %140, %118 : vector<1x2xf32>
    %142 = arith.subf %85, %132 : vector<1x2xf32>
    %143 = math.exp %142 : vector<1x2xf32>
    %144 = arith.mulf %143, %129 : vector<1x2xf32>
    %145 = arith.addf %135, %138 : vector<1x2xf32>
    %146 = arith.addf %145, %141 : vector<1x2xf32>
    %147 = arith.addf %146, %144 : vector<1x2xf32>
    %148 = tpu.reciprocal %147 {approx = true} : vector<1x2xf32> -> vector<1x2xf32>
    %149 = arith.mulf %147, %148 : vector<1x2xf32>
    %cst_69 = arith.constant 2.000000e+00 : f32
    %150 = vector.broadcast %cst_69 : f32 to vector<1x2xf32>
    %151 = arith.subf %150, %149 : vector<1x2xf32>
    %152 = arith.mulf %148, %151 : vector<1x2xf32>
    %153 = arith.mulf %135, %152 : vector<1x2xf32>
    %154 = arith.mulf %138, %152 : vector<1x2xf32>
    %155 = arith.mulf %141, %152 : vector<1x2xf32>
    %156 = arith.mulf %144, %152 : vector<1x2xf32>
    %157 = arith.addf %74, %132 : vector<1x2xf32>
    %158 = math.log %147 : vector<1x2xf32>
    %159 = arith.addf %157, %158 : vector<1x2xf32>
    %160 = vector.broadcast %0 : f32 to vector<1x2xf32>
    %161 = arith.addf %75, %160 : vector<1x2xf32>
    %162 = vector.broadcast %4 : f32 to vector<1x2xf32>
    %163 = arith.addf %76, %162 : vector<1x2xf32>
    %164 = vector.broadcast %8 : f32 to vector<1x2xf32>
    %165 = arith.addf %77, %164 : vector<1x2xf32>
    %166 = vector.broadcast %12 : f32 to vector<1x2xf32>
    %167 = arith.addf %78, %166 : vector<1x2xf32>
    %c0_i32 = arith.constant 0 : i32
    %168 = vector.broadcast %c0_i32 : i32 to vector<1x2xi32>
    %169 = arith.cmpf ogt, %163, %161 : vector<1x2xf32>
    %170 = arith.select %169, %163, %161 : vector<1x2xi1>, vector<1x2xf32>
    %c1_i32_70 = arith.constant 1 : i32
    %171 = vector.broadcast %c1_i32_70 : i32 to vector<1x2xi32>
    %172 = arith.select %169, %171, %168 : vector<1x2xi1>, vector<1x2xi32>
    %173 = arith.cmpf ogt, %165, %170 : vector<1x2xf32>
    %174 = arith.select %173, %165, %170 : vector<1x2xi1>, vector<1x2xf32>
    %c2_i32 = arith.constant 2 : i32
    %175 = vector.broadcast %c2_i32 : i32 to vector<1x2xi32>
    %176 = arith.select %173, %175, %172 : vector<1x2xi1>, vector<1x2xi32>
    %177 = arith.cmpf ogt, %167, %174 : vector<1x2xf32>
    %178 = arith.select %177, %167, %174 : vector<1x2xi1>, vector<1x2xf32>
    %c3_i32 = arith.constant 3 : i32
    %179 = vector.broadcast %c3_i32 : i32 to vector<1x2xi32>
    %180 = arith.select %177, %179, %176 : vector<1x2xi1>, vector<1x2xi32>
    %181 = arith.addf %178, %82 : vector<1x2xf32>
    %182 = vector.broadcast %1 : f32 to vector<1x2xf32>
    %183 = arith.addf %75, %182 : vector<1x2xf32>
    %184 = vector.broadcast %5 : f32 to vector<1x2xf32>
    %185 = arith.addf %76, %184 : vector<1x2xf32>
    %186 = vector.broadcast %9 : f32 to vector<1x2xf32>
    %187 = arith.addf %77, %186 : vector<1x2xf32>
    %188 = vector.broadcast %13 : f32 to vector<1x2xf32>
    %189 = arith.addf %78, %188 : vector<1x2xf32>
    %c0_i32_71 = arith.constant 0 : i32
    %190 = vector.broadcast %c0_i32_71 : i32 to vector<1x2xi32>
    %191 = arith.cmpf ogt, %185, %183 : vector<1x2xf32>
    %192 = arith.select %191, %185, %183 : vector<1x2xi1>, vector<1x2xf32>
    %c1_i32_72 = arith.constant 1 : i32
    %193 = vector.broadcast %c1_i32_72 : i32 to vector<1x2xi32>
    %194 = arith.select %191, %193, %190 : vector<1x2xi1>, vector<1x2xi32>
    %195 = arith.cmpf ogt, %187, %192 : vector<1x2xf32>
    %196 = arith.select %195, %187, %192 : vector<1x2xi1>, vector<1x2xf32>
    %c2_i32_73 = arith.constant 2 : i32
    %197 = vector.broadcast %c2_i32_73 : i32 to vector<1x2xi32>
    %198 = arith.select %195, %197, %194 : vector<1x2xi1>, vector<1x2xi32>
    %199 = arith.cmpf ogt, %189, %196 : vector<1x2xf32>
    %200 = arith.select %199, %189, %196 : vector<1x2xi1>, vector<1x2xf32>
    %c3_i32_74 = arith.constant 3 : i32
    %201 = vector.broadcast %c3_i32_74 : i32 to vector<1x2xi32>
    %202 = arith.select %199, %201, %198 : vector<1x2xi1>, vector<1x2xi32>
    %203 = arith.addf %200, %83 : vector<1x2xf32>
    %204 = vector.broadcast %2 : f32 to vector<1x2xf32>
    %205 = arith.addf %75, %204 : vector<1x2xf32>
    %206 = vector.broadcast %6 : f32 to vector<1x2xf32>
    %207 = arith.addf %76, %206 : vector<1x2xf32>
    %208 = vector.broadcast %10 : f32 to vector<1x2xf32>
    %209 = arith.addf %77, %208 : vector<1x2xf32>
    %210 = vector.broadcast %14 : f32 to vector<1x2xf32>
    %211 = arith.addf %78, %210 : vector<1x2xf32>
    %c0_i32_75 = arith.constant 0 : i32
    %212 = vector.broadcast %c0_i32_75 : i32 to vector<1x2xi32>
    %213 = arith.cmpf ogt, %207, %205 : vector<1x2xf32>
    %214 = arith.select %213, %207, %205 : vector<1x2xi1>, vector<1x2xf32>
    %c1_i32_76 = arith.constant 1 : i32
    %215 = vector.broadcast %c1_i32_76 : i32 to vector<1x2xi32>
    %216 = arith.select %213, %215, %212 : vector<1x2xi1>, vector<1x2xi32>
    %217 = arith.cmpf ogt, %209, %214 : vector<1x2xf32>
    %218 = arith.select %217, %209, %214 : vector<1x2xi1>, vector<1x2xf32>
    %c2_i32_77 = arith.constant 2 : i32
    %219 = vector.broadcast %c2_i32_77 : i32 to vector<1x2xi32>
    %220 = arith.select %217, %219, %216 : vector<1x2xi1>, vector<1x2xi32>
    %221 = arith.cmpf ogt, %211, %218 : vector<1x2xf32>
    %222 = arith.select %221, %211, %218 : vector<1x2xi1>, vector<1x2xf32>
    %c3_i32_78 = arith.constant 3 : i32
    %223 = vector.broadcast %c3_i32_78 : i32 to vector<1x2xi32>
    %224 = arith.select %221, %223, %220 : vector<1x2xi1>, vector<1x2xi32>
    %225 = arith.addf %222, %84 : vector<1x2xf32>
    %226 = vector.broadcast %3 : f32 to vector<1x2xf32>
    %227 = arith.addf %75, %226 : vector<1x2xf32>
    %228 = vector.broadcast %7 : f32 to vector<1x2xf32>
    %229 = arith.addf %76, %228 : vector<1x2xf32>
    %230 = vector.broadcast %11 : f32 to vector<1x2xf32>
    %231 = arith.addf %77, %230 : vector<1x2xf32>
    %232 = vector.broadcast %15 : f32 to vector<1x2xf32>
    %233 = arith.addf %78, %232 : vector<1x2xf32>
    %c0_i32_79 = arith.constant 0 : i32
    %234 = vector.broadcast %c0_i32_79 : i32 to vector<1x2xi32>
    %235 = arith.cmpf ogt, %229, %227 : vector<1x2xf32>
    %236 = arith.select %235, %229, %227 : vector<1x2xi1>, vector<1x2xf32>
    %c1_i32_80 = arith.constant 1 : i32
    %237 = vector.broadcast %c1_i32_80 : i32 to vector<1x2xi32>
    %238 = arith.select %235, %237, %234 : vector<1x2xi1>, vector<1x2xi32>
    %239 = arith.cmpf ogt, %231, %236 : vector<1x2xf32>
    %240 = arith.select %239, %231, %236 : vector<1x2xi1>, vector<1x2xf32>
    %c2_i32_81 = arith.constant 2 : i32
    %241 = vector.broadcast %c2_i32_81 : i32 to vector<1x2xi32>
    %242 = arith.select %239, %241, %238 : vector<1x2xi1>, vector<1x2xi32>
    %243 = arith.cmpf ogt, %233, %240 : vector<1x2xf32>
    %244 = arith.select %243, %233, %240 : vector<1x2xi1>, vector<1x2xf32>
    %c3_i32_82 = arith.constant 3 : i32
    %245 = vector.broadcast %c3_i32_82 : i32 to vector<1x2xi32>
    %246 = arith.select %243, %245, %242 : vector<1x2xi1>, vector<1x2xi32>
    %247 = arith.addf %244, %85 : vector<1x2xf32>
    %248 = tpu.concatenate %180, %202, %224, %246 in 0 : vector<1x2xi32>, vector<1x2xi32>, vector<1x2xi32>, vector<1x2xi32> -> vector<4x2xi32>
    %249 = arith.index_cast %c1_i32 : i32 to index
    %c0_83 = arith.constant 0 : index
    %c0_84 = arith.constant 0 : index
    %250 = vector.load %arg7[%249, %c0_83, %c0_84] : memref<8x4x2xi32, #tpu.memory_space<vmem>>, vector<1x4x2xi32>
    %251 = vector.shape_cast %250 : vector<1x4x2xi32> to vector<4x2xi32>
    %252 = vector.shape_cast %248 : vector<4x2xi32> to vector<1x4x2xi32>
    tpu.vector_store %arg7[%249, %c0_83, %c0_84], %252 {strides = array<i32>} : memref<8x4x2xi32, #tpu.memory_space<vmem>>, vector<1x4x2xi32>,
    %253 = arith.maximumf %181, %203 : vector<1x2xf32>
    %254 = arith.maximumf %253, %225 : vector<1x2xf32>
    %255 = arith.maximumf %254, %247 : vector<1x2xf32>
    %256 = arith.subf %181, %255 : vector<1x2xf32>
    %257 = arith.subf %203, %255 : vector<1x2xf32>
    %258 = arith.subf %225, %255 : vector<1x2xf32>
    %259 = arith.subf %247, %255 : vector<1x2xf32>
    %c2_i32_85 = arith.constant 2 : i32
    %260 = arith.index_cast %c2_i32_85 : i32 to index
    %c0_86 = arith.constant 0 : index
    %c0_87 = arith.constant 0 : index
    %261 = vector.load %arg1[%260, %c0_86, %c0_87] : memref<8x4x2xf32, #tpu.memory_space<vmem>>, vector<1x4x2xf32>
    %262 = vector.shape_cast %261 : vector<1x4x2xf32> to vector<4x2xf32>
    %263 = vector.extract_strided_slice %262 {offsets = [0, 0], sizes = [1, 2], strides = [1, 1]} : vector<4x2xf32> to vector<1x2xf32>
    %264 = vector.extract_strided_slice %262 {offsets = [1, 0], sizes = [1, 2], strides = [1, 1]} : vector<4x2xf32> to vector<1x2xf32>
    %265 = vector.extract_strided_slice %262 {offsets = [2, 0], sizes = [1, 2], strides = [1, 1]} : vector<4x2xf32> to vector<1x2xf32>
    %266 = vector.extract_strided_slice %262 {offsets = [3, 0], sizes = [1, 2], strides = [1, 1]} : vector<4x2xf32> to vector<1x2xf32>
    %267 = vector.broadcast %16 : f32 to vector<1x2xf32>
    %268 = arith.mulf %153, %267 : vector<1x2xf32>
    %269 = vector.broadcast %20 : f32 to vector<1x2xf32>
    %270 = arith.mulf %154, %269 : vector<1x2xf32>
    %271 = arith.addf %268, %270 : vector<1x2xf32>
    %272 = vector.broadcast %24 : f32 to vector<1x2xf32>
    %273 = arith.mulf %155, %272 : vector<1x2xf32>
    %274 = arith.addf %271, %273 : vector<1x2xf32>
    %275 = vector.broadcast %28 : f32 to vector<1x2xf32>
    %276 = arith.mulf %156, %275 : vector<1x2xf32>
    %277 = arith.addf %274, %276 : vector<1x2xf32>
    %278 = vector.broadcast %17 : f32 to vector<1x2xf32>
    %279 = arith.mulf %153, %278 : vector<1x2xf32>
    %280 = vector.broadcast %21 : f32 to vector<1x2xf32>
    %281 = arith.mulf %154, %280 : vector<1x2xf32>
    %282 = arith.addf %279, %281 : vector<1x2xf32>
    %283 = vector.broadcast %25 : f32 to vector<1x2xf32>
    %284 = arith.mulf %155, %283 : vector<1x2xf32>
    %285 = arith.addf %282, %284 : vector<1x2xf32>
    %286 = vector.broadcast %29 : f32 to vector<1x2xf32>
    %287 = arith.mulf %156, %286 : vector<1x2xf32>
    %288 = arith.addf %285, %287 : vector<1x2xf32>
    %289 = vector.broadcast %18 : f32 to vector<1x2xf32>
    %290 = arith.mulf %153, %289 : vector<1x2xf32>
    %291 = vector.broadcast %22 : f32 to vector<1x2xf32>
    %292 = arith.mulf %154, %291 : vector<1x2xf32>
    %293 = arith.addf %290, %292 : vector<1x2xf32>
    %294 = vector.broadcast %26 : f32 to vector<1x2xf32>
    %295 = arith.mulf %155, %294 : vector<1x2xf32>
    %296 = arith.addf %293, %295 : vector<1x2xf32>
    %297 = vector.broadcast %30 : f32 to vector<1x2xf32>
    %298 = arith.mulf %156, %297 : vector<1x2xf32>
    %299 = arith.addf %296, %298 : vector<1x2xf32>
    %300 = vector.broadcast %19 : f32 to vector<1x2xf32>
    %301 = arith.mulf %153, %300 : vector<1x2xf32>
    %302 = vector.broadcast %23 : f32 to vector<1x2xf32>
    %303 = arith.mulf %154, %302 : vector<1x2xf32>
    %304 = arith.addf %301, %303 : vector<1x2xf32>
    %305 = vector.broadcast %27 : f32 to vector<1x2xf32>
    %306 = arith.mulf %155, %305 : vector<1x2xf32>
    %307 = arith.addf %304, %306 : vector<1x2xf32>
    %308 = vector.broadcast %31 : f32 to vector<1x2xf32>
    %309 = arith.mulf %156, %308 : vector<1x2xf32>
    %310 = arith.addf %307, %309 : vector<1x2xf32>
    %311 = arith.maximumf %263, %264 : vector<1x2xf32>
    %312 = arith.maximumf %311, %265 : vector<1x2xf32>
    %313 = arith.maximumf %312, %266 : vector<1x2xf32>
    %314 = arith.subf %263, %313 : vector<1x2xf32>
    %315 = math.exp %314 : vector<1x2xf32>
    %316 = arith.mulf %315, %277 : vector<1x2xf32>
    %317 = arith.subf %264, %313 : vector<1x2xf32>
    %318 = math.exp %317 : vector<1x2xf32>
    %319 = arith.mulf %318, %288 : vector<1x2xf32>
    %320 = arith.subf %265, %313 : vector<1x2xf32>
    %321 = math.exp %320 : vector<1x2xf32>
    %322 = arith.mulf %321, %299 : vector<1x2xf32>
    %323 = arith.subf %266, %313 : vector<1x2xf32>
    %324 = math.exp %323 : vector<1x2xf32>
    %325 = arith.mulf %324, %310 : vector<1x2xf32>
    %326 = arith.addf %316, %319 : vector<1x2xf32>
    %327 = arith.addf %326, %322 : vector<1x2xf32>
    %328 = arith.addf %327, %325 : vector<1x2xf32>
    %329 = tpu.reciprocal %328 {approx = true} : vector<1x2xf32> -> vector<1x2xf32>
    %330 = arith.mulf %328, %329 : vector<1x2xf32>
    %cst_88 = arith.constant 2.000000e+00 : f32
    %331 = vector.broadcast %cst_88 : f32 to vector<1x2xf32>
    %332 = arith.subf %331, %330 : vector<1x2xf32>
    %333 = arith.mulf %329, %332 : vector<1x2xf32>
    %334 = arith.mulf %316, %333 : vector<1x2xf32>
    %335 = arith.mulf %319, %333 : vector<1x2xf32>
    %336 = arith.mulf %322, %333 : vector<1x2xf32>
    %337 = arith.mulf %325, %333 : vector<1x2xf32>
    %338 = arith.addf %159, %313 : vector<1x2xf32>
    %339 = math.log %328 : vector<1x2xf32>
    %340 = arith.addf %338, %339 : vector<1x2xf32>
    %341 = vector.broadcast %0 : f32 to vector<1x2xf32>
    %342 = arith.addf %256, %341 : vector<1x2xf32>
    %343 = vector.broadcast %4 : f32 to vector<1x2xf32>
    %344 = arith.addf %257, %343 : vector<1x2xf32>
    %345 = vector.broadcast %8 : f32 to vector<1x2xf32>
    %346 = arith.addf %258, %345 : vector<1x2xf32>
    %347 = vector.broadcast %12 : f32 to vector<1x2xf32>
    %348 = arith.addf %259, %347 : vector<1x2xf32>
    %c0_i32_89 = arith.constant 0 : i32
    %349 = vector.broadcast %c0_i32_89 : i32 to vector<1x2xi32>
    %350 = arith.cmpf ogt, %344, %342 : vector<1x2xf32>
    %351 = arith.select %350, %344, %342 : vector<1x2xi1>, vector<1x2xf32>
    %c1_i32_90 = arith.constant 1 : i32
    %352 = vector.broadcast %c1_i32_90 : i32 to vector<1x2xi32>
    %353 = arith.select %350, %352, %349 : vector<1x2xi1>, vector<1x2xi32>
    %354 = arith.cmpf ogt, %346, %351 : vector<1x2xf32>
    %355 = arith.select %354, %346, %351 : vector<1x2xi1>, vector<1x2xf32>
    %c2_i32_91 = arith.constant 2 : i32
    %356 = vector.broadcast %c2_i32_91 : i32 to vector<1x2xi32>
    %357 = arith.select %354, %356, %353 : vector<1x2xi1>, vector<1x2xi32>
    %358 = arith.cmpf ogt, %348, %355 : vector<1x2xf32>
    %359 = arith.select %358, %348, %355 : vector<1x2xi1>, vector<1x2xf32>
    %c3_i32_92 = arith.constant 3 : i32
    %360 = vector.broadcast %c3_i32_92 : i32 to vector<1x2xi32>
    %361 = arith.select %358, %360, %357 : vector<1x2xi1>, vector<1x2xi32>
    %362 = arith.addf %359, %263 : vector<1x2xf32>
    %363 = vector.broadcast %1 : f32 to vector<1x2xf32>
    %364 = arith.addf %256, %363 : vector<1x2xf32>
    %365 = vector.broadcast %5 : f32 to vector<1x2xf32>
    %366 = arith.addf %257, %365 : vector<1x2xf32>
    %367 = vector.broadcast %9 : f32 to vector<1x2xf32>
    %368 = arith.addf %258, %367 : vector<1x2xf32>
    %369 = vector.broadcast %13 : f32 to vector<1x2xf32>
    %370 = arith.addf %259, %369 : vector<1x2xf32>
    %c0_i32_93 = arith.constant 0 : i32
    %371 = vector.broadcast %c0_i32_93 : i32 to vector<1x2xi32>
    %372 = arith.cmpf ogt, %366, %364 : vector<1x2xf32>
    %373 = arith.select %372, %366, %364 : vector<1x2xi1>, vector<1x2xf32>
    %c1_i32_94 = arith.constant 1 : i32
    %374 = vector.broadcast %c1_i32_94 : i32 to vector<1x2xi32>
    %375 = arith.select %372, %374, %371 : vector<1x2xi1>, vector<1x2xi32>
    %376 = arith.cmpf ogt, %368, %373 : vector<1x2xf32>
    %377 = arith.select %376, %368, %373 : vector<1x2xi1>, vector<1x2xf32>
    %c2_i32_95 = arith.constant 2 : i32
    %378 = vector.broadcast %c2_i32_95 : i32 to vector<1x2xi32>
    %379 = arith.select %376, %378, %375 : vector<1x2xi1>, vector<1x2xi32>
    %380 = arith.cmpf ogt, %370, %377 : vector<1x2xf32>
    %381 = arith.select %380, %370, %377 : vector<1x2xi1>, vector<1x2xf32>
    %c3_i32_96 = arith.constant 3 : i32
    %382 = vector.broadcast %c3_i32_96 : i32 to vector<1x2xi32>
    %383 = arith.select %380, %382, %379 : vector<1x2xi1>, vector<1x2xi32>
    %384 = arith.addf %381, %264 : vector<1x2xf32>
    %385 = vector.broadcast %2 : f32 to vector<1x2xf32>
    %386 = arith.addf %256, %385 : vector<1x2xf32>
    %387 = vector.broadcast %6 : f32 to vector<1x2xf32>
    %388 = arith.addf %257, %387 : vector<1x2xf32>
    %389 = vector.broadcast %10 : f32 to vector<1x2xf32>
    %390 = arith.addf %258, %389 : vector<1x2xf32>
    %391 = vector.broadcast %14 : f32 to vector<1x2xf32>
    %392 = arith.addf %259, %391 : vector<1x2xf32>
    %c0_i32_97 = arith.constant 0 : i32
    %393 = vector.broadcast %c0_i32_97 : i32 to vector<1x2xi32>
    %394 = arith.cmpf ogt, %388, %386 : vector<1x2xf32>
    %395 = arith.select %394, %388, %386 : vector<1x2xi1>, vector<1x2xf32>
    %c1_i32_98 = arith.constant 1 : i32
    %396 = vector.broadcast %c1_i32_98 : i32 to vector<1x2xi32>
    %397 = arith.select %394, %396, %393 : vector<1x2xi1>, vector<1x2xi32>
    %398 = arith.cmpf ogt, %390, %395 : vector<1x2xf32>
    %399 = arith.select %398, %390, %395 : vector<1x2xi1>, vector<1x2xf32>
    %c2_i32_99 = arith.constant 2 : i32
    %400 = vector.broadcast %c2_i32_99 : i32 to vector<1x2xi32>
    %401 = arith.select %398, %400, %397 : vector<1x2xi1>, vector<1x2xi32>
    %402 = arith.cmpf ogt, %392, %399 : vector<1x2xf32>
    %403 = arith.select %402, %392, %399 : vector<1x2xi1>, vector<1x2xf32>
    %c3_i32_100 = arith.constant 3 : i32
    %404 = vector.broadcast %c3_i32_100 : i32 to vector<1x2xi32>
    %405 = arith.select %402, %404, %401 : vector<1x2xi1>, vector<1x2xi32>
    %406 = arith.addf %403, %265 : vector<1x2xf32>
    %407 = vector.broadcast %3 : f32 to vector<1x2xf32>
    %408 = arith.addf %256, %407 : vector<1x2xf32>
    %409 = vector.broadcast %7 : f32 to vector<1x2xf32>
    %410 = arith.addf %257, %409 : vector<1x2xf32>
    %411 = vector.broadcast %11 : f32 to vector<1x2xf32>
    %412 = arith.addf %258, %411 : vector<1x2xf32>
    %413 = vector.broadcast %15 : f32 to vector<1x2xf32>
    %414 = arith.addf %259, %413 : vector<1x2xf32>
    %c0_i32_101 = arith.constant 0 : i32
    %415 = vector.broadcast %c0_i32_101 : i32 to vector<1x2xi32>
    %416 = arith.cmpf ogt, %410, %408 : vector<1x2xf32>
    %417 = arith.select %416, %410, %408 : vector<1x2xi1>, vector<1x2xf32>
    %c1_i32_102 = arith.constant 1 : i32
    %418 = vector.broadcast %c1_i32_102 : i32 to vector<1x2xi32>
    %419 = arith.select %416, %418, %415 : vector<1x2xi1>, vector<1x2xi32>
    %420 = arith.cmpf ogt, %412, %417 : vector<1x2xf32>
    %421 = arith.select %420, %412, %417 : vector<1x2xi1>, vector<1x2xf32>
    %c2_i32_103 = arith.constant 2 : i32
    %422 = vector.broadcast %c2_i32_103 : i32 to vector<1x2xi32>
    %423 = arith.select %420, %422, %419 : vector<1x2xi1>, vector<1x2xi32>
    %424 = arith.cmpf ogt, %414, %421 : vector<1x2xf32>
    %425 = arith.select %424, %414, %421 : vector<1x2xi1>, vector<1x2xf32>
    %c3_i32_104 = arith.constant 3 : i32
    %426 = vector.broadcast %c3_i32_104 : i32 to vector<1x2xi32>
    %427 = arith.select %424, %426, %423 : vector<1x2xi1>, vector<1x2xi32>
    %428 = arith.addf %425, %266 : vector<1x2xf32>
    %429 = tpu.concatenate %361, %383, %405, %427 in 0 : vector<1x2xi32>, vector<1x2xi32>, vector<1x2xi32>, vector<1x2xi32> -> vector<4x2xi32>
    %430 = arith.index_cast %c2_i32_85 : i32 to index
    %c0_105 = arith.constant 0 : index
    %c0_106 = arith.constant 0 : index
    %431 = vector.load %arg7[%430, %c0_105, %c0_106] : memref<8x4x2xi32, #tpu.memory_space<vmem>>, vector<1x4x2xi32>
    %432 = vector.shape_cast %431 : vector<1x4x2xi32> to vector<4x2xi32>
    %433 = vector.shape_cast %429 : vector<4x2xi32> to vector<1x4x2xi32>
    tpu.vector_store %arg7[%430, %c0_105, %c0_106], %433 {strides = array<i32>} : memref<8x4x2xi32, #tpu.memory_space<vmem>>, vector<1x4x2xi32>,
    %434 = arith.maximumf %362, %384 : vector<1x2xf32>
    %435 = arith.maximumf %434, %406 : vector<1x2xf32>
    %436 = arith.maximumf %435, %428 : vector<1x2xf32>
    %437 = arith.subf %362, %436 : vector<1x2xf32>
    %438 = arith.subf %384, %436 : vector<1x2xf32>
    %439 = arith.subf %406, %436 : vector<1x2xf32>
    %440 = arith.subf %428, %436 : vector<1x2xf32>
    %c3_i32_107 = arith.constant 3 : i32
    %441 = arith.index_cast %c3_i32_107 : i32 to index
    %c0_108 = arith.constant 0 : index
    %c0_109 = arith.constant 0 : index
    %442 = vector.load %arg1[%441, %c0_108, %c0_109] : memref<8x4x2xf32, #tpu.memory_space<vmem>>, vector<1x4x2xf32>
    %443 = vector.shape_cast %442 : vector<1x4x2xf32> to vector<4x2xf32>
    %444 = vector.extract_strided_slice %443 {offsets = [0, 0], sizes = [1, 2], strides = [1, 1]} : vector<4x2xf32> to vector<1x2xf32>
    %445 = vector.extract_strided_slice %443 {offsets = [1, 0], sizes = [1, 2], strides = [1, 1]} : vector<4x2xf32> to vector<1x2xf32>
    %446 = vector.extract_strided_slice %443 {offsets = [2, 0], sizes = [1, 2], strides = [1, 1]} : vector<4x2xf32> to vector<1x2xf32>
    %447 = vector.extract_strided_slice %443 {offsets = [3, 0], sizes = [1, 2], strides = [1, 1]} : vector<4x2xf32> to vector<1x2xf32>
    %448 = vector.broadcast %16 : f32 to vector<1x2xf32>
    %449 = arith.mulf %334, %448 : vector<1x2xf32>
    %450 = vector.broadcast %20 : f32 to vector<1x2xf32>
    %451 = arith.mulf %335, %450 : vector<1x2xf32>
    %452 = arith.addf %449, %451 : vector<1x2xf32>
    %453 = vector.broadcast %24 : f32 to vector<1x2xf32>
    %454 = arith.mulf %336, %453 : vector<1x2xf32>
    %455 = arith.addf %452, %454 : vector<1x2xf32>
    %456 = vector.broadcast %28 : f32 to vector<1x2xf32>
    %457 = arith.mulf %337, %456 : vector<1x2xf32>
    %458 = arith.addf %455, %457 : vector<1x2xf32>
    %459 = vector.broadcast %17 : f32 to vector<1x2xf32>
    %460 = arith.mulf %334, %459 : vector<1x2xf32>
    %461 = vector.broadcast %21 : f32 to vector<1x2xf32>
    %462 = arith.mulf %335, %461 : vector<1x2xf32>
    %463 = arith.addf %460, %462 : vector<1x2xf32>
    %464 = vector.broadcast %25 : f32 to vector<1x2xf32>
    %465 = arith.mulf %336, %464 : vector<1x2xf32>
    %466 = arith.addf %463, %465 : vector<1x2xf32>
    %467 = vector.broadcast %29 : f32 to vector<1x2xf32>
    %468 = arith.mulf %337, %467 : vector<1x2xf32>
    %469 = arith.addf %466, %468 : vector<1x2xf32>
    %470 = vector.broadcast %18 : f32 to vector<1x2xf32>
    %471 = arith.mulf %334, %470 : vector<1x2xf32>
    %472 = vector.broadcast %22 : f32 to vector<1x2xf32>
    %473 = arith.mulf %335, %472 : vector<1x2xf32>
    %474 = arith.addf %471, %473 : vector<1x2xf32>
    %475 = vector.broadcast %26 : f32 to vector<1x2xf32>
    %476 = arith.mulf %336, %475 : vector<1x2xf32>
    %477 = arith.addf %474, %476 : vector<1x2xf32>
    %478 = vector.broadcast %30 : f32 to vector<1x2xf32>
    %479 = arith.mulf %337, %478 : vector<1x2xf32>
    %480 = arith.addf %477, %479 : vector<1x2xf32>
    %481 = vector.broadcast %19 : f32 to vector<1x2xf32>
    %482 = arith.mulf %334, %481 : vector<1x2xf32>
    %483 = vector.broadcast %23 : f32 to vector<1x2xf32>
    %484 = arith.mulf %335, %483 : vector<1x2xf32>
    %485 = arith.addf %482, %484 : vector<1x2xf32>
    %486 = vector.broadcast %27 : f32 to vector<1x2xf32>
    %487 = arith.mulf %336, %486 : vector<1x2xf32>
    %488 = arith.addf %485, %487 : vector<1x2xf32>
    %489 = vector.broadcast %31 : f32 to vector<1x2xf32>
    %490 = arith.mulf %337, %489 : vector<1x2xf32>
    %491 = arith.addf %488, %490 : vector<1x2xf32>
    %492 = arith.maximumf %444, %445 : vector<1x2xf32>
    %493 = arith.maximumf %492, %446 : vector<1x2xf32>
    %494 = arith.maximumf %493, %447 : vector<1x2xf32>
    %495 = arith.subf %444, %494 : vector<1x2xf32>
    %496 = math.exp %495 : vector<1x2xf32>
    %497 = arith.mulf %496, %458 : vector<1x2xf32>
    %498 = arith.subf %445, %494 : vector<1x2xf32>
    %499 = math.exp %498 : vector<1x2xf32>
    %500 = arith.mulf %499, %469 : vector<1x2xf32>
    %501 = arith.subf %446, %494 : vector<1x2xf32>
    %502 = math.exp %501 : vector<1x2xf32>
    %503 = arith.mulf %502, %480 : vector<1x2xf32>
    %504 = arith.subf %447, %494 : vector<1x2xf32>
    %505 = math.exp %504 : vector<1x2xf32>
    %506 = arith.mulf %505, %491 : vector<1x2xf32>
    %507 = arith.addf %497, %500 : vector<1x2xf32>
    %508 = arith.addf %507, %503 : vector<1x2xf32>
    %509 = arith.addf %508, %506 : vector<1x2xf32>
    %510 = tpu.reciprocal %509 {approx = true} : vector<1x2xf32> -> vector<1x2xf32>
    %511 = arith.mulf %509, %510 : vector<1x2xf32>
    %cst_110 = arith.constant 2.000000e+00 : f32
    %512 = vector.broadcast %cst_110 : f32 to vector<1x2xf32>
    %513 = arith.subf %512, %511 : vector<1x2xf32>
    %514 = arith.mulf %510, %513 : vector<1x2xf32>
    %515 = arith.mulf %497, %514 : vector<1x2xf32>
    %516 = arith.mulf %500, %514 : vector<1x2xf32>
    %517 = arith.mulf %503, %514 : vector<1x2xf32>
    %518 = arith.mulf %506, %514 : vector<1x2xf32>
    %519 = arith.addf %340, %494 : vector<1x2xf32>
    %520 = math.log %509 : vector<1x2xf32>
    %521 = arith.addf %519, %520 : vector<1x2xf32>
    %522 = vector.broadcast %0 : f32 to vector<1x2xf32>
    %523 = arith.addf %437, %522 : vector<1x2xf32>
    %524 = vector.broadcast %4 : f32 to vector<1x2xf32>
    %525 = arith.addf %438, %524 : vector<1x2xf32>
    %526 = vector.broadcast %8 : f32 to vector<1x2xf32>
    %527 = arith.addf %439, %526 : vector<1x2xf32>
    %528 = vector.broadcast %12 : f32 to vector<1x2xf32>
    %529 = arith.addf %440, %528 : vector<1x2xf32>
    %c0_i32_111 = arith.constant 0 : i32
    %530 = vector.broadcast %c0_i32_111 : i32 to vector<1x2xi32>
    %531 = arith.cmpf ogt, %525, %523 : vector<1x2xf32>
    %532 = arith.select %531, %525, %523 : vector<1x2xi1>, vector<1x2xf32>
    %c1_i32_112 = arith.constant 1 : i32
    %533 = vector.broadcast %c1_i32_112 : i32 to vector<1x2xi32>
    %534 = arith.select %531, %533, %530 : vector<1x2xi1>, vector<1x2xi32>
    %535 = arith.cmpf ogt, %527, %532 : vector<1x2xf32>
    %536 = arith.select %535, %527, %532 : vector<1x2xi1>, vector<1x2xf32>
    %c2_i32_113 = arith.constant 2 : i32
    %537 = vector.broadcast %c2_i32_113 : i32 to vector<1x2xi32>
    %538 = arith.select %535, %537, %534 : vector<1x2xi1>, vector<1x2xi32>
    %539 = arith.cmpf ogt, %529, %536 : vector<1x2xf32>
    %540 = arith.select %539, %529, %536 : vector<1x2xi1>, vector<1x2xf32>
    %c3_i32_114 = arith.constant 3 : i32
    %541 = vector.broadcast %c3_i32_114 : i32 to vector<1x2xi32>
    %542 = arith.select %539, %541, %538 : vector<1x2xi1>, vector<1x2xi32>
    %543 = arith.addf %540, %444 : vector<1x2xf32>
    %544 = vector.broadcast %1 : f32 to vector<1x2xf32>
    %545 = arith.addf %437, %544 : vector<1x2xf32>
    %546 = vector.broadcast %5 : f32 to vector<1x2xf32>
    %547 = arith.addf %438, %546 : vector<1x2xf32>
    %548 = vector.broadcast %9 : f32 to vector<1x2xf32>
    %549 = arith.addf %439, %548 : vector<1x2xf32>
    %550 = vector.broadcast %13 : f32 to vector<1x2xf32>
    %551 = arith.addf %440, %550 : vector<1x2xf32>
    %c0_i32_115 = arith.constant 0 : i32
    %552 = vector.broadcast %c0_i32_115 : i32 to vector<1x2xi32>
    %553 = arith.cmpf ogt, %547, %545 : vector<1x2xf32>
    %554 = arith.select %553, %547, %545 : vector<1x2xi1>, vector<1x2xf32>
    %c1_i32_116 = arith.constant 1 : i32
    %555 = vector.broadcast %c1_i32_116 : i32 to vector<1x2xi32>
    %556 = arith.select %553, %555, %552 : vector<1x2xi1>, vector<1x2xi32>
    %557 = arith.cmpf ogt, %549, %554 : vector<1x2xf32>
    %558 = arith.select %557, %549, %554 : vector<1x2xi1>, vector<1x2xf32>
    %c2_i32_117 = arith.constant 2 : i32
    %559 = vector.broadcast %c2_i32_117 : i32 to vector<1x2xi32>
    %560 = arith.select %557, %559, %556 : vector<1x2xi1>, vector<1x2xi32>
    %561 = arith.cmpf ogt, %551, %558 : vector<1x2xf32>
    %562 = arith.select %561, %551, %558 : vector<1x2xi1>, vector<1x2xf32>
    %c3_i32_118 = arith.constant 3 : i32
    %563 = vector.broadcast %c3_i32_118 : i32 to vector<1x2xi32>
    %564 = arith.select %561, %563, %560 : vector<1x2xi1>, vector<1x2xi32>
    %565 = arith.addf %562, %445 : vector<1x2xf32>
    %566 = vector.broadcast %2 : f32 to vector<1x2xf32>
    %567 = arith.addf %437, %566 : vector<1x2xf32>
    %568 = vector.broadcast %6 : f32 to vector<1x2xf32>
    %569 = arith.addf %438, %568 : vector<1x2xf32>
    %570 = vector.broadcast %10 : f32 to vector<1x2xf32>
    %571 = arith.addf %439, %570 : vector<1x2xf32>
    %572 = vector.broadcast %14 : f32 to vector<1x2xf32>
    %573 = arith.addf %440, %572 : vector<1x2xf32>
    %c0_i32_119 = arith.constant 0 : i32
    %574 = vector.broadcast %c0_i32_119 : i32 to vector<1x2xi32>
    %575 = arith.cmpf ogt, %569, %567 : vector<1x2xf32>
    %576 = arith.select %575, %569, %567 : vector<1x2xi1>, vector<1x2xf32>
    %c1_i32_120 = arith.constant 1 : i32
    %577 = vector.broadcast %c1_i32_120 : i32 to vector<1x2xi32>
    %578 = arith.select %575, %577, %574 : vector<1x2xi1>, vector<1x2xi32>
    %579 = arith.cmpf ogt, %571, %576 : vector<1x2xf32>
    %580 = arith.select %579, %571, %576 : vector<1x2xi1>, vector<1x2xf32>
    %c2_i32_121 = arith.constant 2 : i32
    %581 = vector.broadcast %c2_i32_121 : i32 to vector<1x2xi32>
    %582 = arith.select %579, %581, %578 : vector<1x2xi1>, vector<1x2xi32>
    %583 = arith.cmpf ogt, %573, %580 : vector<1x2xf32>
    %584 = arith.select %583, %573, %580 : vector<1x2xi1>, vector<1x2xf32>
    %c3_i32_122 = arith.constant 3 : i32
    %585 = vector.broadcast %c3_i32_122 : i32 to vector<1x2xi32>
    %586 = arith.select %583, %585, %582 : vector<1x2xi1>, vector<1x2xi32>
    %587 = arith.addf %584, %446 : vector<1x2xf32>
    %588 = vector.broadcast %3 : f32 to vector<1x2xf32>
    %589 = arith.addf %437, %588 : vector<1x2xf32>
    %590 = vector.broadcast %7 : f32 to vector<1x2xf32>
    %591 = arith.addf %438, %590 : vector<1x2xf32>
    %592 = vector.broadcast %11 : f32 to vector<1x2xf32>
    %593 = arith.addf %439, %592 : vector<1x2xf32>
    %594 = vector.broadcast %15 : f32 to vector<1x2xf32>
    %595 = arith.addf %440, %594 : vector<1x2xf32>
    %c0_i32_123 = arith.constant 0 : i32
    %596 = vector.broadcast %c0_i32_123 : i32 to vector<1x2xi32>
    %597 = arith.cmpf ogt, %591, %589 : vector<1x2xf32>
    %598 = arith.select %597, %591, %589 : vector<1x2xi1>, vector<1x2xf32>
    %c1_i32_124 = arith.constant 1 : i32
    %599 = vector.broadcast %c1_i32_124 : i32 to vector<1x2xi32>
    %600 = arith.select %597, %599, %596 : vector<1x2xi1>, vector<1x2xi32>
    %601 = arith.cmpf ogt, %593, %598 : vector<1x2xf32>
    %602 = arith.select %601, %593, %598 : vector<1x2xi1>, vector<1x2xf32>
    %c2_i32_125 = arith.constant 2 : i32
    %603 = vector.broadcast %c2_i32_125 : i32 to vector<1x2xi32>
    %604 = arith.select %601, %603, %600 : vector<1x2xi1>, vector<1x2xi32>
    %605 = arith.cmpf ogt, %595, %602 : vector<1x2xf32>
    %606 = arith.select %605, %595, %602 : vector<1x2xi1>, vector<1x2xf32>
    %c3_i32_126 = arith.constant 3 : i32
    %607 = vector.broadcast %c3_i32_126 : i32 to vector<1x2xi32>
    %608 = arith.select %605, %607, %604 : vector<1x2xi1>, vector<1x2xi32>
    %609 = arith.addf %606, %447 : vector<1x2xf32>
    %610 = tpu.concatenate %542, %564, %586, %608 in 0 : vector<1x2xi32>, vector<1x2xi32>, vector<1x2xi32>, vector<1x2xi32> -> vector<4x2xi32>
    %611 = arith.index_cast %c3_i32_107 : i32 to index
    %c0_127 = arith.constant 0 : index
    %c0_128 = arith.constant 0 : index
    %612 = vector.load %arg7[%611, %c0_127, %c0_128] : memref<8x4x2xi32, #tpu.memory_space<vmem>>, vector<1x4x2xi32>
    %613 = vector.shape_cast %612 : vector<1x4x2xi32> to vector<4x2xi32>
    %614 = vector.shape_cast %610 : vector<4x2xi32> to vector<1x4x2xi32>
    tpu.vector_store %arg7[%611, %c0_127, %c0_128], %614 {strides = array<i32>} : memref<8x4x2xi32, #tpu.memory_space<vmem>>, vector<1x4x2xi32>,
    %615 = arith.maximumf %543, %565 : vector<1x2xf32>
    %616 = arith.maximumf %615, %587 : vector<1x2xf32>
    %617 = arith.maximumf %616, %609 : vector<1x2xf32>
    %618 = arith.subf %543, %617 : vector<1x2xf32>
    %619 = arith.subf %565, %617 : vector<1x2xf32>
    %620 = arith.subf %587, %617 : vector<1x2xf32>
    %621 = arith.subf %609, %617 : vector<1x2xf32>
    %c4_i32 = arith.constant 4 : i32
    %622 = arith.index_cast %c4_i32 : i32 to index
    %c0_129 = arith.constant 0 : index
    %c0_130 = arith.constant 0 : index
    %623 = vector.load %arg1[%622, %c0_129, %c0_130] : memref<8x4x2xf32, #tpu.memory_space<vmem>>, vector<1x4x2xf32>
    %624 = vector.shape_cast %623 : vector<1x4x2xf32> to vector<4x2xf32>
    %625 = vector.extract_strided_slice %624 {offsets = [0, 0], sizes = [1, 2], strides = [1, 1]} : vector<4x2xf32> to vector<1x2xf32>
    %626 = vector.extract_strided_slice %624 {offsets = [1, 0], sizes = [1, 2], strides = [1, 1]} : vector<4x2xf32> to vector<1x2xf32>
    %627 = vector.extract_strided_slice %624 {offsets = [2, 0], sizes = [1, 2], strides = [1, 1]} : vector<4x2xf32> to vector<1x2xf32>
    %628 = vector.extract_strided_slice %624 {offsets = [3, 0], sizes = [1, 2], strides = [1, 1]} : vector<4x2xf32> to vector<1x2xf32>
    %629 = vector.broadcast %16 : f32 to vector<1x2xf32>
    %630 = arith.mulf %515, %629 : vector<1x2xf32>
    %631 = vector.broadcast %20 : f32 to vector<1x2xf32>
    %632 = arith.mulf %516, %631 : vector<1x2xf32>
    %633 = arith.addf %630, %632 : vector<1x2xf32>
    %634 = vector.broadcast %24 : f32 to vector<1x2xf32>
    %635 = arith.mulf %517, %634 : vector<1x2xf32>
    %636 = arith.addf %633, %635 : vector<1x2xf32>
    %637 = vector.broadcast %28 : f32 to vector<1x2xf32>
    %638 = arith.mulf %518, %637 : vector<1x2xf32>
    %639 = arith.addf %636, %638 : vector<1x2xf32>
    %640 = vector.broadcast %17 : f32 to vector<1x2xf32>
    %641 = arith.mulf %515, %640 : vector<1x2xf32>
    %642 = vector.broadcast %21 : f32 to vector<1x2xf32>
    %643 = arith.mulf %516, %642 : vector<1x2xf32>
    %644 = arith.addf %641, %643 : vector<1x2xf32>
    %645 = vector.broadcast %25 : f32 to vector<1x2xf32>
    %646 = arith.mulf %517, %645 : vector<1x2xf32>
    %647 = arith.addf %644, %646 : vector<1x2xf32>
    %648 = vector.broadcast %29 : f32 to vector<1x2xf32>
    %649 = arith.mulf %518, %648 : vector<1x2xf32>
    %650 = arith.addf %647, %649 : vector<1x2xf32>
    %651 = vector.broadcast %18 : f32 to vector<1x2xf32>
    %652 = arith.mulf %515, %651 : vector<1x2xf32>
    %653 = vector.broadcast %22 : f32 to vector<1x2xf32>
    %654 = arith.mulf %516, %653 : vector<1x2xf32>
    %655 = arith.addf %652, %654 : vector<1x2xf32>
    %656 = vector.broadcast %26 : f32 to vector<1x2xf32>
    %657 = arith.mulf %517, %656 : vector<1x2xf32>
    %658 = arith.addf %655, %657 : vector<1x2xf32>
    %659 = vector.broadcast %30 : f32 to vector<1x2xf32>
    %660 = arith.mulf %518, %659 : vector<1x2xf32>
    %661 = arith.addf %658, %660 : vector<1x2xf32>
    %662 = vector.broadcast %19 : f32 to vector<1x2xf32>
    %663 = arith.mulf %515, %662 : vector<1x2xf32>
    %664 = vector.broadcast %23 : f32 to vector<1x2xf32>
    %665 = arith.mulf %516, %664 : vector<1x2xf32>
    %666 = arith.addf %663, %665 : vector<1x2xf32>
    %667 = vector.broadcast %27 : f32 to vector<1x2xf32>
    %668 = arith.mulf %517, %667 : vector<1x2xf32>
    %669 = arith.addf %666, %668 : vector<1x2xf32>
    %670 = vector.broadcast %31 : f32 to vector<1x2xf32>
    %671 = arith.mulf %518, %670 : vector<1x2xf32>
    %672 = arith.addf %669, %671 : vector<1x2xf32>
    %673 = arith.maximumf %625, %626 : vector<1x2xf32>
    %674 = arith.maximumf %673, %627 : vector<1x2xf32>
    %675 = arith.maximumf %674, %628 : vector<1x2xf32>
    %676 = arith.subf %625, %675 : vector<1x2xf32>
    %677 = math.exp %676 : vector<1x2xf32>
    %678 = arith.mulf %677, %639 : vector<1x2xf32>
    %679 = arith.subf %626, %675 : vector<1x2xf32>
    %680 = math.exp %679 : vector<1x2xf32>
    %681 = arith.mulf %680, %650 : vector<1x2xf32>
    %682 = arith.subf %627, %675 : vector<1x2xf32>
    %683 = math.exp %682 : vector<1x2xf32>
    %684 = arith.mulf %683, %661 : vector<1x2xf32>
    %685 = arith.subf %628, %675 : vector<1x2xf32>
    %686 = math.exp %685 : vector<1x2xf32>
    %687 = arith.mulf %686, %672 : vector<1x2xf32>
    %688 = arith.addf %678, %681 : vector<1x2xf32>
    %689 = arith.addf %688, %684 : vector<1x2xf32>
    %690 = arith.addf %689, %687 : vector<1x2xf32>
    %691 = tpu.reciprocal %690 {approx = true} : vector<1x2xf32> -> vector<1x2xf32>
    %692 = arith.mulf %690, %691 : vector<1x2xf32>
    %cst_131 = arith.constant 2.000000e+00 : f32
    %693 = vector.broadcast %cst_131 : f32 to vector<1x2xf32>
    %694 = arith.subf %693, %692 : vector<1x2xf32>
    %695 = arith.mulf %691, %694 : vector<1x2xf32>
    %696 = arith.mulf %678, %695 : vector<1x2xf32>
    %697 = arith.mulf %681, %695 : vector<1x2xf32>
    %698 = arith.mulf %684, %695 : vector<1x2xf32>
    %699 = arith.mulf %687, %695 : vector<1x2xf32>
    %700 = arith.addf %521, %675 : vector<1x2xf32>
    %701 = math.log %690 : vector<1x2xf32>
    %702 = arith.addf %700, %701 : vector<1x2xf32>
    %703 = vector.broadcast %0 : f32 to vector<1x2xf32>
    %704 = arith.addf %618, %703 : vector<1x2xf32>
    %705 = vector.broadcast %4 : f32 to vector<1x2xf32>
    %706 = arith.addf %619, %705 : vector<1x2xf32>
    %707 = vector.broadcast %8 : f32 to vector<1x2xf32>
    %708 = arith.addf %620, %707 : vector<1x2xf32>
    %709 = vector.broadcast %12 : f32 to vector<1x2xf32>
    %710 = arith.addf %621, %709 : vector<1x2xf32>
    %c0_i32_132 = arith.constant 0 : i32
    %711 = vector.broadcast %c0_i32_132 : i32 to vector<1x2xi32>
    %712 = arith.cmpf ogt, %706, %704 : vector<1x2xf32>
    %713 = arith.select %712, %706, %704 : vector<1x2xi1>, vector<1x2xf32>
    %c1_i32_133 = arith.constant 1 : i32
    %714 = vector.broadcast %c1_i32_133 : i32 to vector<1x2xi32>
    %715 = arith.select %712, %714, %711 : vector<1x2xi1>, vector<1x2xi32>
    %716 = arith.cmpf ogt, %708, %713 : vector<1x2xf32>
    %717 = arith.select %716, %708, %713 : vector<1x2xi1>, vector<1x2xf32>
    %c2_i32_134 = arith.constant 2 : i32
    %718 = vector.broadcast %c2_i32_134 : i32 to vector<1x2xi32>
    %719 = arith.select %716, %718, %715 : vector<1x2xi1>, vector<1x2xi32>
    %720 = arith.cmpf ogt, %710, %717 : vector<1x2xf32>
    %721 = arith.select %720, %710, %717 : vector<1x2xi1>, vector<1x2xf32>
    %c3_i32_135 = arith.constant 3 : i32
    %722 = vector.broadcast %c3_i32_135 : i32 to vector<1x2xi32>
    %723 = arith.select %720, %722, %719 : vector<1x2xi1>, vector<1x2xi32>
    %724 = arith.addf %721, %625 : vector<1x2xf32>
    %725 = vector.broadcast %1 : f32 to vector<1x2xf32>
    %726 = arith.addf %618, %725 : vector<1x2xf32>
    %727 = vector.broadcast %5 : f32 to vector<1x2xf32>
    %728 = arith.addf %619, %727 : vector<1x2xf32>
    %729 = vector.broadcast %9 : f32 to vector<1x2xf32>
    %730 = arith.addf %620, %729 : vector<1x2xf32>
    %731 = vector.broadcast %13 : f32 to vector<1x2xf32>
    %732 = arith.addf %621, %731 : vector<1x2xf32>
    %c0_i32_136 = arith.constant 0 : i32
    %733 = vector.broadcast %c0_i32_136 : i32 to vector<1x2xi32>
    %734 = arith.cmpf ogt, %728, %726 : vector<1x2xf32>
    %735 = arith.select %734, %728, %726 : vector<1x2xi1>, vector<1x2xf32>
    %c1_i32_137 = arith.constant 1 : i32
    %736 = vector.broadcast %c1_i32_137 : i32 to vector<1x2xi32>
    %737 = arith.select %734, %736, %733 : vector<1x2xi1>, vector<1x2xi32>
    %738 = arith.cmpf ogt, %730, %735 : vector<1x2xf32>
    %739 = arith.select %738, %730, %735 : vector<1x2xi1>, vector<1x2xf32>
    %c2_i32_138 = arith.constant 2 : i32
    %740 = vector.broadcast %c2_i32_138 : i32 to vector<1x2xi32>
    %741 = arith.select %738, %740, %737 : vector<1x2xi1>, vector<1x2xi32>
    %742 = arith.cmpf ogt, %732, %739 : vector<1x2xf32>
    %743 = arith.select %742, %732, %739 : vector<1x2xi1>, vector<1x2xf32>
    %c3_i32_139 = arith.constant 3 : i32
    %744 = vector.broadcast %c3_i32_139 : i32 to vector<1x2xi32>
    %745 = arith.select %742, %744, %741 : vector<1x2xi1>, vector<1x2xi32>
    %746 = arith.addf %743, %626 : vector<1x2xf32>
    %747 = vector.broadcast %2 : f32 to vector<1x2xf32>
    %748 = arith.addf %618, %747 : vector<1x2xf32>
    %749 = vector.broadcast %6 : f32 to vector<1x2xf32>
    %750 = arith.addf %619, %749 : vector<1x2xf32>
    %751 = vector.broadcast %10 : f32 to vector<1x2xf32>
    %752 = arith.addf %620, %751 : vector<1x2xf32>
    %753 = vector.broadcast %14 : f32 to vector<1x2xf32>
    %754 = arith.addf %621, %753 : vector<1x2xf32>
    %c0_i32_140 = arith.constant 0 : i32
    %755 = vector.broadcast %c0_i32_140 : i32 to vector<1x2xi32>
    %756 = arith.cmpf ogt, %750, %748 : vector<1x2xf32>
    %757 = arith.select %756, %750, %748 : vector<1x2xi1>, vector<1x2xf32>
    %c1_i32_141 = arith.constant 1 : i32
    %758 = vector.broadcast %c1_i32_141 : i32 to vector<1x2xi32>
    %759 = arith.select %756, %758, %755 : vector<1x2xi1>, vector<1x2xi32>
    %760 = arith.cmpf ogt, %752, %757 : vector<1x2xf32>
    %761 = arith.select %760, %752, %757 : vector<1x2xi1>, vector<1x2xf32>
    %c2_i32_142 = arith.constant 2 : i32
    %762 = vector.broadcast %c2_i32_142 : i32 to vector<1x2xi32>
    %763 = arith.select %760, %762, %759 : vector<1x2xi1>, vector<1x2xi32>
    %764 = arith.cmpf ogt, %754, %761 : vector<1x2xf32>
    %765 = arith.select %764, %754, %761 : vector<1x2xi1>, vector<1x2xf32>
    %c3_i32_143 = arith.constant 3 : i32
    %766 = vector.broadcast %c3_i32_143 : i32 to vector<1x2xi32>
    %767 = arith.select %764, %766, %763 : vector<1x2xi1>, vector<1x2xi32>
    %768 = arith.addf %765, %627 : vector<1x2xf32>
    %769 = vector.broadcast %3 : f32 to vector<1x2xf32>
    %770 = arith.addf %618, %769 : vector<1x2xf32>
    %771 = vector.broadcast %7 : f32 to vector<1x2xf32>
    %772 = arith.addf %619, %771 : vector<1x2xf32>
    %773 = vector.broadcast %11 : f32 to vector<1x2xf32>
    %774 = arith.addf %620, %773 : vector<1x2xf32>
    %775 = vector.broadcast %15 : f32 to vector<1x2xf32>
    %776 = arith.addf %621, %775 : vector<1x2xf32>
    %c0_i32_144 = arith.constant 0 : i32
    %777 = vector.broadcast %c0_i32_144 : i32 to vector<1x2xi32>
    %778 = arith.cmpf ogt, %772, %770 : vector<1x2xf32>
    %779 = arith.select %778, %772, %770 : vector<1x2xi1>, vector<1x2xf32>
    %c1_i32_145 = arith.constant 1 : i32
    %780 = vector.broadcast %c1_i32_145 : i32 to vector<1x2xi32>
    %781 = arith.select %778, %780, %777 : vector<1x2xi1>, vector<1x2xi32>
    %782 = arith.cmpf ogt, %774, %779 : vector<1x2xf32>
    %783 = arith.select %782, %774, %779 : vector<1x2xi1>, vector<1x2xf32>
    %c2_i32_146 = arith.constant 2 : i32
    %784 = vector.broadcast %c2_i32_146 : i32 to vector<1x2xi32>
    %785 = arith.select %782, %784, %781 : vector<1x2xi1>, vector<1x2xi32>
    %786 = arith.cmpf ogt, %776, %783 : vector<1x2xf32>
    %787 = arith.select %786, %776, %783 : vector<1x2xi1>, vector<1x2xf32>
    %c3_i32_147 = arith.constant 3 : i32
    %788 = vector.broadcast %c3_i32_147 : i32 to vector<1x2xi32>
    %789 = arith.select %786, %788, %785 : vector<1x2xi1>, vector<1x2xi32>
    %790 = arith.addf %787, %628 : vector<1x2xf32>
    %791 = tpu.concatenate %723, %745, %767, %789 in 0 : vector<1x2xi32>, vector<1x2xi32>, vector<1x2xi32>, vector<1x2xi32> -> vector<4x2xi32>
    %792 = arith.index_cast %c4_i32 : i32 to index
    %c0_148 = arith.constant 0 : index
    %c0_149 = arith.constant 0 : index
    %793 = vector.load %arg7[%792, %c0_148, %c0_149] : memref<8x4x2xi32, #tpu.memory_space<vmem>>, vector<1x4x2xi32>
    %794 = vector.shape_cast %793 : vector<1x4x2xi32> to vector<4x2xi32>
    %795 = vector.shape_cast %791 : vector<4x2xi32> to vector<1x4x2xi32>
    tpu.vector_store %arg7[%792, %c0_148, %c0_149], %795 {strides = array<i32>} : memref<8x4x2xi32, #tpu.memory_space<vmem>>, vector<1x4x2xi32>,
    %796 = arith.maximumf %724, %746 : vector<1x2xf32>
    %797 = arith.maximumf %796, %768 : vector<1x2xf32>
    %798 = arith.maximumf %797, %790 : vector<1x2xf32>
    %799 = arith.subf %724, %798 : vector<1x2xf32>
    %800 = arith.subf %746, %798 : vector<1x2xf32>
    %801 = arith.subf %768, %798 : vector<1x2xf32>
    %802 = arith.subf %790, %798 : vector<1x2xf32>
    %c5_i32 = arith.constant 5 : i32
    %803 = arith.index_cast %c5_i32 : i32 to index
    %c0_150 = arith.constant 0 : index
    %c0_151 = arith.constant 0 : index
    %804 = vector.load %arg1[%803, %c0_150, %c0_151] : memref<8x4x2xf32, #tpu.memory_space<vmem>>, vector<1x4x2xf32>
    %805 = vector.shape_cast %804 : vector<1x4x2xf32> to vector<4x2xf32>
    %806 = vector.extract_strided_slice %805 {offsets = [0, 0], sizes = [1, 2], strides = [1, 1]} : vector<4x2xf32> to vector<1x2xf32>
    %807 = vector.extract_strided_slice %805 {offsets = [1, 0], sizes = [1, 2], strides = [1, 1]} : vector<4x2xf32> to vector<1x2xf32>
    %808 = vector.extract_strided_slice %805 {offsets = [2, 0], sizes = [1, 2], strides = [1, 1]} : vector<4x2xf32> to vector<1x2xf32>
    %809 = vector.extract_strided_slice %805 {offsets = [3, 0], sizes = [1, 2], strides = [1, 1]} : vector<4x2xf32> to vector<1x2xf32>
    %810 = vector.broadcast %16 : f32 to vector<1x2xf32>
    %811 = arith.mulf %696, %810 : vector<1x2xf32>
    %812 = vector.broadcast %20 : f32 to vector<1x2xf32>
    %813 = arith.mulf %697, %812 : vector<1x2xf32>
    %814 = arith.addf %811, %813 : vector<1x2xf32>
    %815 = vector.broadcast %24 : f32 to vector<1x2xf32>
    %816 = arith.mulf %698, %815 : vector<1x2xf32>
    %817 = arith.addf %814, %816 : vector<1x2xf32>
    %818 = vector.broadcast %28 : f32 to vector<1x2xf32>
    %819 = arith.mulf %699, %818 : vector<1x2xf32>
    %820 = arith.addf %817, %819 : vector<1x2xf32>
    %821 = vector.broadcast %17 : f32 to vector<1x2xf32>
    %822 = arith.mulf %696, %821 : vector<1x2xf32>
    %823 = vector.broadcast %21 : f32 to vector<1x2xf32>
    %824 = arith.mulf %697, %823 : vector<1x2xf32>
    %825 = arith.addf %822, %824 : vector<1x2xf32>
    %826 = vector.broadcast %25 : f32 to vector<1x2xf32>
    %827 = arith.mulf %698, %826 : vector<1x2xf32>
    %828 = arith.addf %825, %827 : vector<1x2xf32>
    %829 = vector.broadcast %29 : f32 to vector<1x2xf32>
    %830 = arith.mulf %699, %829 : vector<1x2xf32>
    %831 = arith.addf %828, %830 : vector<1x2xf32>
    %832 = vector.broadcast %18 : f32 to vector<1x2xf32>
    %833 = arith.mulf %696, %832 : vector<1x2xf32>
    %834 = vector.broadcast %22 : f32 to vector<1x2xf32>
    %835 = arith.mulf %697, %834 : vector<1x2xf32>
    %836 = arith.addf %833, %835 : vector<1x2xf32>
    %837 = vector.broadcast %26 : f32 to vector<1x2xf32>
    %838 = arith.mulf %698, %837 : vector<1x2xf32>
    %839 = arith.addf %836, %838 : vector<1x2xf32>
    %840 = vector.broadcast %30 : f32 to vector<1x2xf32>
    %841 = arith.mulf %699, %840 : vector<1x2xf32>
    %842 = arith.addf %839, %841 : vector<1x2xf32>
    %843 = vector.broadcast %19 : f32 to vector<1x2xf32>
    %844 = arith.mulf %696, %843 : vector<1x2xf32>
    %845 = vector.broadcast %23 : f32 to vector<1x2xf32>
    %846 = arith.mulf %697, %845 : vector<1x2xf32>
    %847 = arith.addf %844, %846 : vector<1x2xf32>
    %848 = vector.broadcast %27 : f32 to vector<1x2xf32>
    %849 = arith.mulf %698, %848 : vector<1x2xf32>
    %850 = arith.addf %847, %849 : vector<1x2xf32>
    %851 = vector.broadcast %31 : f32 to vector<1x2xf32>
    %852 = arith.mulf %699, %851 : vector<1x2xf32>
    %853 = arith.addf %850, %852 : vector<1x2xf32>
    %854 = arith.maximumf %806, %807 : vector<1x2xf32>
    %855 = arith.maximumf %854, %808 : vector<1x2xf32>
    %856 = arith.maximumf %855, %809 : vector<1x2xf32>
    %857 = arith.subf %806, %856 : vector<1x2xf32>
    %858 = math.exp %857 : vector<1x2xf32>
    %859 = arith.mulf %858, %820 : vector<1x2xf32>
    %860 = arith.subf %807, %856 : vector<1x2xf32>
    %861 = math.exp %860 : vector<1x2xf32>
    %862 = arith.mulf %861, %831 : vector<1x2xf32>
    %863 = arith.subf %808, %856 : vector<1x2xf32>
    %864 = math.exp %863 : vector<1x2xf32>
    %865 = arith.mulf %864, %842 : vector<1x2xf32>
    %866 = arith.subf %809, %856 : vector<1x2xf32>
    %867 = math.exp %866 : vector<1x2xf32>
    %868 = arith.mulf %867, %853 : vector<1x2xf32>
    %869 = arith.addf %859, %862 : vector<1x2xf32>
    %870 = arith.addf %869, %865 : vector<1x2xf32>
    %871 = arith.addf %870, %868 : vector<1x2xf32>
    %872 = tpu.reciprocal %871 {approx = true} : vector<1x2xf32> -> vector<1x2xf32>
    %873 = arith.mulf %871, %872 : vector<1x2xf32>
    %cst_152 = arith.constant 2.000000e+00 : f32
    %874 = vector.broadcast %cst_152 : f32 to vector<1x2xf32>
    %875 = arith.subf %874, %873 : vector<1x2xf32>
    %876 = arith.mulf %872, %875 : vector<1x2xf32>
    %877 = arith.mulf %859, %876 : vector<1x2xf32>
    %878 = arith.mulf %862, %876 : vector<1x2xf32>
    %879 = arith.mulf %865, %876 : vector<1x2xf32>
    %880 = arith.mulf %868, %876 : vector<1x2xf32>
    %881 = arith.addf %702, %856 : vector<1x2xf32>
    %882 = math.log %871 : vector<1x2xf32>
    %883 = arith.addf %881, %882 : vector<1x2xf32>
    %884 = vector.broadcast %0 : f32 to vector<1x2xf32>
    %885 = arith.addf %799, %884 : vector<1x2xf32>
    %886 = vector.broadcast %4 : f32 to vector<1x2xf32>
    %887 = arith.addf %800, %886 : vector<1x2xf32>
    %888 = vector.broadcast %8 : f32 to vector<1x2xf32>
    %889 = arith.addf %801, %888 : vector<1x2xf32>
    %890 = vector.broadcast %12 : f32 to vector<1x2xf32>
    %891 = arith.addf %802, %890 : vector<1x2xf32>
    %c0_i32_153 = arith.constant 0 : i32
    %892 = vector.broadcast %c0_i32_153 : i32 to vector<1x2xi32>
    %893 = arith.cmpf ogt, %887, %885 : vector<1x2xf32>
    %894 = arith.select %893, %887, %885 : vector<1x2xi1>, vector<1x2xf32>
    %c1_i32_154 = arith.constant 1 : i32
    %895 = vector.broadcast %c1_i32_154 : i32 to vector<1x2xi32>
    %896 = arith.select %893, %895, %892 : vector<1x2xi1>, vector<1x2xi32>
    %897 = arith.cmpf ogt, %889, %894 : vector<1x2xf32>
    %898 = arith.select %897, %889, %894 : vector<1x2xi1>, vector<1x2xf32>
    %c2_i32_155 = arith.constant 2 : i32
    %899 = vector.broadcast %c2_i32_155 : i32 to vector<1x2xi32>
    %900 = arith.select %897, %899, %896 : vector<1x2xi1>, vector<1x2xi32>
    %901 = arith.cmpf ogt, %891, %898 : vector<1x2xf32>
    %902 = arith.select %901, %891, %898 : vector<1x2xi1>, vector<1x2xf32>
    %c3_i32_156 = arith.constant 3 : i32
    %903 = vector.broadcast %c3_i32_156 : i32 to vector<1x2xi32>
    %904 = arith.select %901, %903, %900 : vector<1x2xi1>, vector<1x2xi32>
    %905 = arith.addf %902, %806 : vector<1x2xf32>
    %906 = vector.broadcast %1 : f32 to vector<1x2xf32>
    %907 = arith.addf %799, %906 : vector<1x2xf32>
    %908 = vector.broadcast %5 : f32 to vector<1x2xf32>
    %909 = arith.addf %800, %908 : vector<1x2xf32>
    %910 = vector.broadcast %9 : f32 to vector<1x2xf32>
    %911 = arith.addf %801, %910 : vector<1x2xf32>
    %912 = vector.broadcast %13 : f32 to vector<1x2xf32>
    %913 = arith.addf %802, %912 : vector<1x2xf32>
    %c0_i32_157 = arith.constant 0 : i32
    %914 = vector.broadcast %c0_i32_157 : i32 to vector<1x2xi32>
    %915 = arith.cmpf ogt, %909, %907 : vector<1x2xf32>
    %916 = arith.select %915, %909, %907 : vector<1x2xi1>, vector<1x2xf32>
    %c1_i32_158 = arith.constant 1 : i32
    %917 = vector.broadcast %c1_i32_158 : i32 to vector<1x2xi32>
    %918 = arith.select %915, %917, %914 : vector<1x2xi1>, vector<1x2xi32>
    %919 = arith.cmpf ogt, %911, %916 : vector<1x2xf32>
    %920 = arith.select %919, %911, %916 : vector<1x2xi1>, vector<1x2xf32>
    %c2_i32_159 = arith.constant 2 : i32
    %921 = vector.broadcast %c2_i32_159 : i32 to vector<1x2xi32>
    %922 = arith.select %919, %921, %918 : vector<1x2xi1>, vector<1x2xi32>
    %923 = arith.cmpf ogt, %913, %920 : vector<1x2xf32>
    %924 = arith.select %923, %913, %920 : vector<1x2xi1>, vector<1x2xf32>
    %c3_i32_160 = arith.constant 3 : i32
    %925 = vector.broadcast %c3_i32_160 : i32 to vector<1x2xi32>
    %926 = arith.select %923, %925, %922 : vector<1x2xi1>, vector<1x2xi32>
    %927 = arith.addf %924, %807 : vector<1x2xf32>
    %928 = vector.broadcast %2 : f32 to vector<1x2xf32>
    %929 = arith.addf %799, %928 : vector<1x2xf32>
    %930 = vector.broadcast %6 : f32 to vector<1x2xf32>
    %931 = arith.addf %800, %930 : vector<1x2xf32>
    %932 = vector.broadcast %10 : f32 to vector<1x2xf32>
    %933 = arith.addf %801, %932 : vector<1x2xf32>
    %934 = vector.broadcast %14 : f32 to vector<1x2xf32>
    %935 = arith.addf %802, %934 : vector<1x2xf32>
    %c0_i32_161 = arith.constant 0 : i32
    %936 = vector.broadcast %c0_i32_161 : i32 to vector<1x2xi32>
    %937 = arith.cmpf ogt, %931, %929 : vector<1x2xf32>
    %938 = arith.select %937, %931, %929 : vector<1x2xi1>, vector<1x2xf32>
    %c1_i32_162 = arith.constant 1 : i32
    %939 = vector.broadcast %c1_i32_162 : i32 to vector<1x2xi32>
    %940 = arith.select %937, %939, %936 : vector<1x2xi1>, vector<1x2xi32>
    %941 = arith.cmpf ogt, %933, %938 : vector<1x2xf32>
    %942 = arith.select %941, %933, %938 : vector<1x2xi1>, vector<1x2xf32>
    %c2_i32_163 = arith.constant 2 : i32
    %943 = vector.broadcast %c2_i32_163 : i32 to vector<1x2xi32>
    %944 = arith.select %941, %943, %940 : vector<1x2xi1>, vector<1x2xi32>
    %945 = arith.cmpf ogt, %935, %942 : vector<1x2xf32>
    %946 = arith.select %945, %935, %942 : vector<1x2xi1>, vector<1x2xf32>
    %c3_i32_164 = arith.constant 3 : i32
    %947 = vector.broadcast %c3_i32_164 : i32 to vector<1x2xi32>
    %948 = arith.select %945, %947, %944 : vector<1x2xi1>, vector<1x2xi32>
    %949 = arith.addf %946, %808 : vector<1x2xf32>
    %950 = vector.broadcast %3 : f32 to vector<1x2xf32>
    %951 = arith.addf %799, %950 : vector<1x2xf32>
    %952 = vector.broadcast %7 : f32 to vector<1x2xf32>
    %953 = arith.addf %800, %952 : vector<1x2xf32>
    %954 = vector.broadcast %11 : f32 to vector<1x2xf32>
    %955 = arith.addf %801, %954 : vector<1x2xf32>
    %956 = vector.broadcast %15 : f32 to vector<1x2xf32>
    %957 = arith.addf %802, %956 : vector<1x2xf32>
    %c0_i32_165 = arith.constant 0 : i32
    %958 = vector.broadcast %c0_i32_165 : i32 to vector<1x2xi32>
    %959 = arith.cmpf ogt, %953, %951 : vector<1x2xf32>
    %960 = arith.select %959, %953, %951 : vector<1x2xi1>, vector<1x2xf32>
    %c1_i32_166 = arith.constant 1 : i32
    %961 = vector.broadcast %c1_i32_166 : i32 to vector<1x2xi32>
    %962 = arith.select %959, %961, %958 : vector<1x2xi1>, vector<1x2xi32>
    %963 = arith.cmpf ogt, %955, %960 : vector<1x2xf32>
    %964 = arith.select %963, %955, %960 : vector<1x2xi1>, vector<1x2xf32>
    %c2_i32_167 = arith.constant 2 : i32
    %965 = vector.broadcast %c2_i32_167 : i32 to vector<1x2xi32>
    %966 = arith.select %963, %965, %962 : vector<1x2xi1>, vector<1x2xi32>
    %967 = arith.cmpf ogt, %957, %964 : vector<1x2xf32>
    %968 = arith.select %967, %957, %964 : vector<1x2xi1>, vector<1x2xf32>
    %c3_i32_168 = arith.constant 3 : i32
    %969 = vector.broadcast %c3_i32_168 : i32 to vector<1x2xi32>
    %970 = arith.select %967, %969, %966 : vector<1x2xi1>, vector<1x2xi32>
    %971 = arith.addf %968, %809 : vector<1x2xf32>
    %972 = tpu.concatenate %904, %926, %948, %970 in 0 : vector<1x2xi32>, vector<1x2xi32>, vector<1x2xi32>, vector<1x2xi32> -> vector<4x2xi32>
    %973 = arith.index_cast %c5_i32 : i32 to index
    %c0_169 = arith.constant 0 : index
    %c0_170 = arith.constant 0 : index
    %974 = vector.load %arg7[%973, %c0_169, %c0_170] : memref<8x4x2xi32, #tpu.memory_space<vmem>>, vector<1x4x2xi32>
    %975 = vector.shape_cast %974 : vector<1x4x2xi32> to vector<4x2xi32>
    %976 = vector.shape_cast %972 : vector<4x2xi32> to vector<1x4x2xi32>
    tpu.vector_store %arg7[%973, %c0_169, %c0_170], %976 {strides = array<i32>} : memref<8x4x2xi32, #tpu.memory_space<vmem>>, vector<1x4x2xi32>,
    %977 = arith.maximumf %905, %927 : vector<1x2xf32>
    %978 = arith.maximumf %977, %949 : vector<1x2xf32>
    %979 = arith.maximumf %978, %971 : vector<1x2xf32>
    %980 = arith.subf %905, %979 : vector<1x2xf32>
    %981 = arith.subf %927, %979 : vector<1x2xf32>
    %982 = arith.subf %949, %979 : vector<1x2xf32>
    %983 = arith.subf %971, %979 : vector<1x2xf32>
    %c6_i32 = arith.constant 6 : i32
    %984 = arith.index_cast %c6_i32 : i32 to index
    %c0_171 = arith.constant 0 : index
    %c0_172 = arith.constant 0 : index
    %985 = vector.load %arg1[%984, %c0_171, %c0_172] : memref<8x4x2xf32, #tpu.memory_space<vmem>>, vector<1x4x2xf32>
    %986 = vector.shape_cast %985 : vector<1x4x2xf32> to vector<4x2xf32>
    %987 = vector.extract_strided_slice %986 {offsets = [0, 0], sizes = [1, 2], strides = [1, 1]} : vector<4x2xf32> to vector<1x2xf32>
    %988 = vector.extract_strided_slice %986 {offsets = [1, 0], sizes = [1, 2], strides = [1, 1]} : vector<4x2xf32> to vector<1x2xf32>
    %989 = vector.extract_strided_slice %986 {offsets = [2, 0], sizes = [1, 2], strides = [1, 1]} : vector<4x2xf32> to vector<1x2xf32>
    %990 = vector.extract_strided_slice %986 {offsets = [3, 0], sizes = [1, 2], strides = [1, 1]} : vector<4x2xf32> to vector<1x2xf32>
    %991 = vector.broadcast %16 : f32 to vector<1x2xf32>
    %992 = arith.mulf %877, %991 : vector<1x2xf32>
    %993 = vector.broadcast %20 : f32 to vector<1x2xf32>
    %994 = arith.mulf %878, %993 : vector<1x2xf32>
    %995 = arith.addf %992, %994 : vector<1x2xf32>
    %996 = vector.broadcast %24 : f32 to vector<1x2xf32>
    %997 = arith.mulf %879, %996 : vector<1x2xf32>
    %998 = arith.addf %995, %997 : vector<1x2xf32>
    %999 = vector.broadcast %28 : f32 to vector<1x2xf32>
    %1000 = arith.mulf %880, %999 : vector<1x2xf32>
    %1001 = arith.addf %998, %1000 : vector<1x2xf32>
    %1002 = vector.broadcast %17 : f32 to vector<1x2xf32>
    %1003 = arith.mulf %877, %1002 : vector<1x2xf32>
    %1004 = vector.broadcast %21 : f32 to vector<1x2xf32>
    %1005 = arith.mulf %878, %1004 : vector<1x2xf32>
    %1006 = arith.addf %1003, %1005 : vector<1x2xf32>
    %1007 = vector.broadcast %25 : f32 to vector<1x2xf32>
    %1008 = arith.mulf %879, %1007 : vector<1x2xf32>
    %1009 = arith.addf %1006, %1008 : vector<1x2xf32>
    %1010 = vector.broadcast %29 : f32 to vector<1x2xf32>
    %1011 = arith.mulf %880, %1010 : vector<1x2xf32>
    %1012 = arith.addf %1009, %1011 : vector<1x2xf32>
    %1013 = vector.broadcast %18 : f32 to vector<1x2xf32>
    %1014 = arith.mulf %877, %1013 : vector<1x2xf32>
    %1015 = vector.broadcast %22 : f32 to vector<1x2xf32>
    %1016 = arith.mulf %878, %1015 : vector<1x2xf32>
    %1017 = arith.addf %1014, %1016 : vector<1x2xf32>
    %1018 = vector.broadcast %26 : f32 to vector<1x2xf32>
    %1019 = arith.mulf %879, %1018 : vector<1x2xf32>
    %1020 = arith.addf %1017, %1019 : vector<1x2xf32>
    %1021 = vector.broadcast %30 : f32 to vector<1x2xf32>
    %1022 = arith.mulf %880, %1021 : vector<1x2xf32>
    %1023 = arith.addf %1020, %1022 : vector<1x2xf32>
    %1024 = vector.broadcast %19 : f32 to vector<1x2xf32>
    %1025 = arith.mulf %877, %1024 : vector<1x2xf32>
    %1026 = vector.broadcast %23 : f32 to vector<1x2xf32>
    %1027 = arith.mulf %878, %1026 : vector<1x2xf32>
    %1028 = arith.addf %1025, %1027 : vector<1x2xf32>
    %1029 = vector.broadcast %27 : f32 to vector<1x2xf32>
    %1030 = arith.mulf %879, %1029 : vector<1x2xf32>
    %1031 = arith.addf %1028, %1030 : vector<1x2xf32>
    %1032 = vector.broadcast %31 : f32 to vector<1x2xf32>
    %1033 = arith.mulf %880, %1032 : vector<1x2xf32>
    %1034 = arith.addf %1031, %1033 : vector<1x2xf32>
    %1035 = arith.maximumf %987, %988 : vector<1x2xf32>
    %1036 = arith.maximumf %1035, %989 : vector<1x2xf32>
    %1037 = arith.maximumf %1036, %990 : vector<1x2xf32>
    %1038 = arith.subf %987, %1037 : vector<1x2xf32>
    %1039 = math.exp %1038 : vector<1x2xf32>
    %1040 = arith.mulf %1039, %1001 : vector<1x2xf32>
    %1041 = arith.subf %988, %1037 : vector<1x2xf32>
    %1042 = math.exp %1041 : vector<1x2xf32>
    %1043 = arith.mulf %1042, %1012 : vector<1x2xf32>
    %1044 = arith.subf %989, %1037 : vector<1x2xf32>
    %1045 = math.exp %1044 : vector<1x2xf32>
    %1046 = arith.mulf %1045, %1023 : vector<1x2xf32>
    %1047 = arith.subf %990, %1037 : vector<1x2xf32>
    %1048 = math.exp %1047 : vector<1x2xf32>
    %1049 = arith.mulf %1048, %1034 : vector<1x2xf32>
    %1050 = arith.addf %1040, %1043 : vector<1x2xf32>
    %1051 = arith.addf %1050, %1046 : vector<1x2xf32>
    %1052 = arith.addf %1051, %1049 : vector<1x2xf32>
    %1053 = tpu.reciprocal %1052 {approx = true} : vector<1x2xf32> -> vector<1x2xf32>
    %1054 = arith.mulf %1052, %1053 : vector<1x2xf32>
    %cst_173 = arith.constant 2.000000e+00 : f32
    %1055 = vector.broadcast %cst_173 : f32 to vector<1x2xf32>
    %1056 = arith.subf %1055, %1054 : vector<1x2xf32>
    %1057 = arith.mulf %1053, %1056 : vector<1x2xf32>
    %1058 = arith.mulf %1040, %1057 : vector<1x2xf32>
    %1059 = arith.mulf %1043, %1057 : vector<1x2xf32>
    %1060 = arith.mulf %1046, %1057 : vector<1x2xf32>
    %1061 = arith.mulf %1049, %1057 : vector<1x2xf32>
    %1062 = arith.addf %883, %1037 : vector<1x2xf32>
    %1063 = math.log %1052 : vector<1x2xf32>
    %1064 = arith.addf %1062, %1063 : vector<1x2xf32>
    %1065 = vector.broadcast %0 : f32 to vector<1x2xf32>
    %1066 = arith.addf %980, %1065 : vector<1x2xf32>
    %1067 = vector.broadcast %4 : f32 to vector<1x2xf32>
    %1068 = arith.addf %981, %1067 : vector<1x2xf32>
    %1069 = vector.broadcast %8 : f32 to vector<1x2xf32>
    %1070 = arith.addf %982, %1069 : vector<1x2xf32>
    %1071 = vector.broadcast %12 : f32 to vector<1x2xf32>
    %1072 = arith.addf %983, %1071 : vector<1x2xf32>
    %c0_i32_174 = arith.constant 0 : i32
    %1073 = vector.broadcast %c0_i32_174 : i32 to vector<1x2xi32>
    %1074 = arith.cmpf ogt, %1068, %1066 : vector<1x2xf32>
    %1075 = arith.select %1074, %1068, %1066 : vector<1x2xi1>, vector<1x2xf32>
    %c1_i32_175 = arith.constant 1 : i32
    %1076 = vector.broadcast %c1_i32_175 : i32 to vector<1x2xi32>
    %1077 = arith.select %1074, %1076, %1073 : vector<1x2xi1>, vector<1x2xi32>
    %1078 = arith.cmpf ogt, %1070, %1075 : vector<1x2xf32>
    %1079 = arith.select %1078, %1070, %1075 : vector<1x2xi1>, vector<1x2xf32>
    %c2_i32_176 = arith.constant 2 : i32
    %1080 = vector.broadcast %c2_i32_176 : i32 to vector<1x2xi32>
    %1081 = arith.select %1078, %1080, %1077 : vector<1x2xi1>, vector<1x2xi32>
    %1082 = arith.cmpf ogt, %1072, %1079 : vector<1x2xf32>
    %1083 = arith.select %1082, %1072, %1079 : vector<1x2xi1>, vector<1x2xf32>
    %c3_i32_177 = arith.constant 3 : i32
    %1084 = vector.broadcast %c3_i32_177 : i32 to vector<1x2xi32>
    %1085 = arith.select %1082, %1084, %1081 : vector<1x2xi1>, vector<1x2xi32>
    %1086 = arith.addf %1083, %987 : vector<1x2xf32>
    %1087 = vector.broadcast %1 : f32 to vector<1x2xf32>
    %1088 = arith.addf %980, %1087 : vector<1x2xf32>
    %1089 = vector.broadcast %5 : f32 to vector<1x2xf32>
    %1090 = arith.addf %981, %1089 : vector<1x2xf32>
    %1091 = vector.broadcast %9 : f32 to vector<1x2xf32>
    %1092 = arith.addf %982, %1091 : vector<1x2xf32>
    %1093 = vector.broadcast %13 : f32 to vector<1x2xf32>
    %1094 = arith.addf %983, %1093 : vector<1x2xf32>
    %c0_i32_178 = arith.constant 0 : i32
    %1095 = vector.broadcast %c0_i32_178 : i32 to vector<1x2xi32>
    %1096 = arith.cmpf ogt, %1090, %1088 : vector<1x2xf32>
    %1097 = arith.select %1096, %1090, %1088 : vector<1x2xi1>, vector<1x2xf32>
    %c1_i32_179 = arith.constant 1 : i32
    %1098 = vector.broadcast %c1_i32_179 : i32 to vector<1x2xi32>
    %1099 = arith.select %1096, %1098, %1095 : vector<1x2xi1>, vector<1x2xi32>
    %1100 = arith.cmpf ogt, %1092, %1097 : vector<1x2xf32>
    %1101 = arith.select %1100, %1092, %1097 : vector<1x2xi1>, vector<1x2xf32>
    %c2_i32_180 = arith.constant 2 : i32
    %1102 = vector.broadcast %c2_i32_180 : i32 to vector<1x2xi32>
    %1103 = arith.select %1100, %1102, %1099 : vector<1x2xi1>, vector<1x2xi32>
    %1104 = arith.cmpf ogt, %1094, %1101 : vector<1x2xf32>
    %1105 = arith.select %1104, %1094, %1101 : vector<1x2xi1>, vector<1x2xf32>
    %c3_i32_181 = arith.constant 3 : i32
    %1106 = vector.broadcast %c3_i32_181 : i32 to vector<1x2xi32>
    %1107 = arith.select %1104, %1106, %1103 : vector<1x2xi1>, vector<1x2xi32>
    %1108 = arith.addf %1105, %988 : vector<1x2xf32>
    %1109 = vector.broadcast %2 : f32 to vector<1x2xf32>
    %1110 = arith.addf %980, %1109 : vector<1x2xf32>
    %1111 = vector.broadcast %6 : f32 to vector<1x2xf32>
    %1112 = arith.addf %981, %1111 : vector<1x2xf32>
    %1113 = vector.broadcast %10 : f32 to vector<1x2xf32>
    %1114 = arith.addf %982, %1113 : vector<1x2xf32>
    %1115 = vector.broadcast %14 : f32 to vector<1x2xf32>
    %1116 = arith.addf %983, %1115 : vector<1x2xf32>
    %c0_i32_182 = arith.constant 0 : i32
    %1117 = vector.broadcast %c0_i32_182 : i32 to vector<1x2xi32>
    %1118 = arith.cmpf ogt, %1112, %1110 : vector<1x2xf32>
    %1119 = arith.select %1118, %1112, %1110 : vector<1x2xi1>, vector<1x2xf32>
    %c1_i32_183 = arith.constant 1 : i32
    %1120 = vector.broadcast %c1_i32_183 : i32 to vector<1x2xi32>
    %1121 = arith.select %1118, %1120, %1117 : vector<1x2xi1>, vector<1x2xi32>
    %1122 = arith.cmpf ogt, %1114, %1119 : vector<1x2xf32>
    %1123 = arith.select %1122, %1114, %1119 : vector<1x2xi1>, vector<1x2xf32>
    %c2_i32_184 = arith.constant 2 : i32
    %1124 = vector.broadcast %c2_i32_184 : i32 to vector<1x2xi32>
    %1125 = arith.select %1122, %1124, %1121 : vector<1x2xi1>, vector<1x2xi32>
    %1126 = arith.cmpf ogt, %1116, %1123 : vector<1x2xf32>
    %1127 = arith.select %1126, %1116, %1123 : vector<1x2xi1>, vector<1x2xf32>
    %c3_i32_185 = arith.constant 3 : i32
    %1128 = vector.broadcast %c3_i32_185 : i32 to vector<1x2xi32>
    %1129 = arith.select %1126, %1128, %1125 : vector<1x2xi1>, vector<1x2xi32>
    %1130 = arith.addf %1127, %989 : vector<1x2xf32>
    %1131 = vector.broadcast %3 : f32 to vector<1x2xf32>
    %1132 = arith.addf %980, %1131 : vector<1x2xf32>
    %1133 = vector.broadcast %7 : f32 to vector<1x2xf32>
    %1134 = arith.addf %981, %1133 : vector<1x2xf32>
    %1135 = vector.broadcast %11 : f32 to vector<1x2xf32>
    %1136 = arith.addf %982, %1135 : vector<1x2xf32>
    %1137 = vector.broadcast %15 : f32 to vector<1x2xf32>
    %1138 = arith.addf %983, %1137 : vector<1x2xf32>
    %c0_i32_186 = arith.constant 0 : i32
    %1139 = vector.broadcast %c0_i32_186 : i32 to vector<1x2xi32>
    %1140 = arith.cmpf ogt, %1134, %1132 : vector<1x2xf32>
    %1141 = arith.select %1140, %1134, %1132 : vector<1x2xi1>, vector<1x2xf32>
    %c1_i32_187 = arith.constant 1 : i32
    %1142 = vector.broadcast %c1_i32_187 : i32 to vector<1x2xi32>
    %1143 = arith.select %1140, %1142, %1139 : vector<1x2xi1>, vector<1x2xi32>
    %1144 = arith.cmpf ogt, %1136, %1141 : vector<1x2xf32>
    %1145 = arith.select %1144, %1136, %1141 : vector<1x2xi1>, vector<1x2xf32>
    %c2_i32_188 = arith.constant 2 : i32
    %1146 = vector.broadcast %c2_i32_188 : i32 to vector<1x2xi32>
    %1147 = arith.select %1144, %1146, %1143 : vector<1x2xi1>, vector<1x2xi32>
    %1148 = arith.cmpf ogt, %1138, %1145 : vector<1x2xf32>
    %1149 = arith.select %1148, %1138, %1145 : vector<1x2xi1>, vector<1x2xf32>
    %c3_i32_189 = arith.constant 3 : i32
    %1150 = vector.broadcast %c3_i32_189 : i32 to vector<1x2xi32>
    %1151 = arith.select %1148, %1150, %1147 : vector<1x2xi1>, vector<1x2xi32>
    %1152 = arith.addf %1149, %990 : vector<1x2xf32>
    %1153 = tpu.concatenate %1085, %1107, %1129, %1151 in 0 : vector<1x2xi32>, vector<1x2xi32>, vector<1x2xi32>, vector<1x2xi32> -> vector<4x2xi32>
    %1154 = arith.index_cast %c6_i32 : i32 to index
    %c0_190 = arith.constant 0 : index
    %c0_191 = arith.constant 0 : index
    %1155 = vector.load %arg7[%1154, %c0_190, %c0_191] : memref<8x4x2xi32, #tpu.memory_space<vmem>>, vector<1x4x2xi32>
    %1156 = vector.shape_cast %1155 : vector<1x4x2xi32> to vector<4x2xi32>
    %1157 = vector.shape_cast %1153 : vector<4x2xi32> to vector<1x4x2xi32>
    tpu.vector_store %arg7[%1154, %c0_190, %c0_191], %1157 {strides = array<i32>} : memref<8x4x2xi32, #tpu.memory_space<vmem>>, vector<1x4x2xi32>,
    %1158 = arith.maximumf %1086, %1108 : vector<1x2xf32>
    %1159 = arith.maximumf %1158, %1130 : vector<1x2xf32>
    %1160 = arith.maximumf %1159, %1152 : vector<1x2xf32>
    %1161 = arith.subf %1086, %1160 : vector<1x2xf32>
    %1162 = arith.subf %1108, %1160 : vector<1x2xf32>
    %1163 = arith.subf %1130, %1160 : vector<1x2xf32>
    %1164 = arith.subf %1152, %1160 : vector<1x2xf32>
    %c7_i32 = arith.constant 7 : i32
    %1165 = arith.index_cast %c7_i32 : i32 to index
    %c0_192 = arith.constant 0 : index
    %c0_193 = arith.constant 0 : index
    %1166 = vector.load %arg1[%1165, %c0_192, %c0_193] : memref<8x4x2xf32, #tpu.memory_space<vmem>>, vector<1x4x2xf32>
    %1167 = vector.shape_cast %1166 : vector<1x4x2xf32> to vector<4x2xf32>
    %1168 = vector.extract_strided_slice %1167 {offsets = [0, 0], sizes = [1, 2], strides = [1, 1]} : vector<4x2xf32> to vector<1x2xf32>
    %1169 = vector.extract_strided_slice %1167 {offsets = [1, 0], sizes = [1, 2], strides = [1, 1]} : vector<4x2xf32> to vector<1x2xf32>
    %1170 = vector.extract_strided_slice %1167 {offsets = [2, 0], sizes = [1, 2], strides = [1, 1]} : vector<4x2xf32> to vector<1x2xf32>
    %1171 = vector.extract_strided_slice %1167 {offsets = [3, 0], sizes = [1, 2], strides = [1, 1]} : vector<4x2xf32> to vector<1x2xf32>
    %1172 = vector.broadcast %16 : f32 to vector<1x2xf32>
    %1173 = arith.mulf %1058, %1172 : vector<1x2xf32>
    %1174 = vector.broadcast %20 : f32 to vector<1x2xf32>
    %1175 = arith.mulf %1059, %1174 : vector<1x2xf32>
    %1176 = arith.addf %1173, %1175 : vector<1x2xf32>
    %1177 = vector.broadcast %24 : f32 to vector<1x2xf32>
    %1178 = arith.mulf %1060, %1177 : vector<1x2xf32>
    %1179 = arith.addf %1176, %1178 : vector<1x2xf32>
    %1180 = vector.broadcast %28 : f32 to vector<1x2xf32>
    %1181 = arith.mulf %1061, %1180 : vector<1x2xf32>
    %1182 = arith.addf %1179, %1181 : vector<1x2xf32>
    %1183 = vector.broadcast %17 : f32 to vector<1x2xf32>
    %1184 = arith.mulf %1058, %1183 : vector<1x2xf32>
    %1185 = vector.broadcast %21 : f32 to vector<1x2xf32>
    %1186 = arith.mulf %1059, %1185 : vector<1x2xf32>
    %1187 = arith.addf %1184, %1186 : vector<1x2xf32>
    %1188 = vector.broadcast %25 : f32 to vector<1x2xf32>
    %1189 = arith.mulf %1060, %1188 : vector<1x2xf32>
    %1190 = arith.addf %1187, %1189 : vector<1x2xf32>
    %1191 = vector.broadcast %29 : f32 to vector<1x2xf32>
    %1192 = arith.mulf %1061, %1191 : vector<1x2xf32>
    %1193 = arith.addf %1190, %1192 : vector<1x2xf32>
    %1194 = vector.broadcast %18 : f32 to vector<1x2xf32>
    %1195 = arith.mulf %1058, %1194 : vector<1x2xf32>
    %1196 = vector.broadcast %22 : f32 to vector<1x2xf32>
    %1197 = arith.mulf %1059, %1196 : vector<1x2xf32>
    %1198 = arith.addf %1195, %1197 : vector<1x2xf32>
    %1199 = vector.broadcast %26 : f32 to vector<1x2xf32>
    %1200 = arith.mulf %1060, %1199 : vector<1x2xf32>
    %1201 = arith.addf %1198, %1200 : vector<1x2xf32>
    %1202 = vector.broadcast %30 : f32 to vector<1x2xf32>
    %1203 = arith.mulf %1061, %1202 : vector<1x2xf32>
    %1204 = arith.addf %1201, %1203 : vector<1x2xf32>
    %1205 = vector.broadcast %19 : f32 to vector<1x2xf32>
    %1206 = arith.mulf %1058, %1205 : vector<1x2xf32>
    %1207 = vector.broadcast %23 : f32 to vector<1x2xf32>
    %1208 = arith.mulf %1059, %1207 : vector<1x2xf32>
    %1209 = arith.addf %1206, %1208 : vector<1x2xf32>
    %1210 = vector.broadcast %27 : f32 to vector<1x2xf32>
    %1211 = arith.mulf %1060, %1210 : vector<1x2xf32>
    %1212 = arith.addf %1209, %1211 : vector<1x2xf32>
    %1213 = vector.broadcast %31 : f32 to vector<1x2xf32>
    %1214 = arith.mulf %1061, %1213 : vector<1x2xf32>
    %1215 = arith.addf %1212, %1214 : vector<1x2xf32>
    %1216 = arith.maximumf %1168, %1169 : vector<1x2xf32>
    %1217 = arith.maximumf %1216, %1170 : vector<1x2xf32>
    %1218 = arith.maximumf %1217, %1171 : vector<1x2xf32>
    %1219 = arith.subf %1168, %1218 : vector<1x2xf32>
    %1220 = math.exp %1219 : vector<1x2xf32>
    %1221 = arith.mulf %1220, %1182 : vector<1x2xf32>
    %1222 = arith.subf %1169, %1218 : vector<1x2xf32>
    %1223 = math.exp %1222 : vector<1x2xf32>
    %1224 = arith.mulf %1223, %1193 : vector<1x2xf32>
    %1225 = arith.subf %1170, %1218 : vector<1x2xf32>
    %1226 = math.exp %1225 : vector<1x2xf32>
    %1227 = arith.mulf %1226, %1204 : vector<1x2xf32>
    %1228 = arith.subf %1171, %1218 : vector<1x2xf32>
    %1229 = math.exp %1228 : vector<1x2xf32>
    %1230 = arith.mulf %1229, %1215 : vector<1x2xf32>
    %1231 = arith.addf %1221, %1224 : vector<1x2xf32>
    %1232 = arith.addf %1231, %1227 : vector<1x2xf32>
    %1233 = arith.addf %1232, %1230 : vector<1x2xf32>
    %1234 = tpu.reciprocal %1233 {approx = true} : vector<1x2xf32> -> vector<1x2xf32>
    %1235 = arith.mulf %1233, %1234 : vector<1x2xf32>
    %cst_194 = arith.constant 2.000000e+00 : f32
    %1236 = vector.broadcast %cst_194 : f32 to vector<1x2xf32>
    %1237 = arith.subf %1236, %1235 : vector<1x2xf32>
    %1238 = arith.mulf %1234, %1237 : vector<1x2xf32>
    %1239 = arith.mulf %1221, %1238 : vector<1x2xf32>
    %1240 = arith.mulf %1224, %1238 : vector<1x2xf32>
    %1241 = arith.mulf %1227, %1238 : vector<1x2xf32>
    %1242 = arith.mulf %1230, %1238 : vector<1x2xf32>
    %1243 = arith.addf %1064, %1218 : vector<1x2xf32>
    %1244 = math.log %1233 : vector<1x2xf32>
    %1245 = arith.addf %1243, %1244 : vector<1x2xf32>
    %1246 = vector.broadcast %0 : f32 to vector<1x2xf32>
    %1247 = arith.addf %1161, %1246 : vector<1x2xf32>
    %1248 = vector.broadcast %4 : f32 to vector<1x2xf32>
    %1249 = arith.addf %1162, %1248 : vector<1x2xf32>
    %1250 = vector.broadcast %8 : f32 to vector<1x2xf32>
    %1251 = arith.addf %1163, %1250 : vector<1x2xf32>
    %1252 = vector.broadcast %12 : f32 to vector<1x2xf32>
    %1253 = arith.addf %1164, %1252 : vector<1x2xf32>
    %c0_i32_195 = arith.constant 0 : i32
    %1254 = vector.broadcast %c0_i32_195 : i32 to vector<1x2xi32>
    %1255 = arith.cmpf ogt, %1249, %1247 : vector<1x2xf32>
    %1256 = arith.select %1255, %1249, %1247 : vector<1x2xi1>, vector<1x2xf32>
    %c1_i32_196 = arith.constant 1 : i32
    %1257 = vector.broadcast %c1_i32_196 : i32 to vector<1x2xi32>
    %1258 = arith.select %1255, %1257, %1254 : vector<1x2xi1>, vector<1x2xi32>
    %1259 = arith.cmpf ogt, %1251, %1256 : vector<1x2xf32>
    %1260 = arith.select %1259, %1251, %1256 : vector<1x2xi1>, vector<1x2xf32>
    %c2_i32_197 = arith.constant 2 : i32
    %1261 = vector.broadcast %c2_i32_197 : i32 to vector<1x2xi32>
    %1262 = arith.select %1259, %1261, %1258 : vector<1x2xi1>, vector<1x2xi32>
    %1263 = arith.cmpf ogt, %1253, %1260 : vector<1x2xf32>
    %1264 = arith.select %1263, %1253, %1260 : vector<1x2xi1>, vector<1x2xf32>
    %c3_i32_198 = arith.constant 3 : i32
    %1265 = vector.broadcast %c3_i32_198 : i32 to vector<1x2xi32>
    %1266 = arith.select %1263, %1265, %1262 : vector<1x2xi1>, vector<1x2xi32>
    %1267 = arith.addf %1264, %1168 : vector<1x2xf32>
    %1268 = vector.broadcast %1 : f32 to vector<1x2xf32>
    %1269 = arith.addf %1161, %1268 : vector<1x2xf32>
    %1270 = vector.broadcast %5 : f32 to vector<1x2xf32>
    %1271 = arith.addf %1162, %1270 : vector<1x2xf32>
    %1272 = vector.broadcast %9 : f32 to vector<1x2xf32>
    %1273 = arith.addf %1163, %1272 : vector<1x2xf32>
    %1274 = vector.broadcast %13 : f32 to vector<1x2xf32>
    %1275 = arith.addf %1164, %1274 : vector<1x2xf32>
    %c0_i32_199 = arith.constant 0 : i32
    %1276 = vector.broadcast %c0_i32_199 : i32 to vector<1x2xi32>
    %1277 = arith.cmpf ogt, %1271, %1269 : vector<1x2xf32>
    %1278 = arith.select %1277, %1271, %1269 : vector<1x2xi1>, vector<1x2xf32>
    %c1_i32_200 = arith.constant 1 : i32
    %1279 = vector.broadcast %c1_i32_200 : i32 to vector<1x2xi32>
    %1280 = arith.select %1277, %1279, %1276 : vector<1x2xi1>, vector<1x2xi32>
    %1281 = arith.cmpf ogt, %1273, %1278 : vector<1x2xf32>
    %1282 = arith.select %1281, %1273, %1278 : vector<1x2xi1>, vector<1x2xf32>
    %c2_i32_201 = arith.constant 2 : i32
    %1283 = vector.broadcast %c2_i32_201 : i32 to vector<1x2xi32>
    %1284 = arith.select %1281, %1283, %1280 : vector<1x2xi1>, vector<1x2xi32>
    %1285 = arith.cmpf ogt, %1275, %1282 : vector<1x2xf32>
    %1286 = arith.select %1285, %1275, %1282 : vector<1x2xi1>, vector<1x2xf32>
    %c3_i32_202 = arith.constant 3 : i32
    %1287 = vector.broadcast %c3_i32_202 : i32 to vector<1x2xi32>
    %1288 = arith.select %1285, %1287, %1284 : vector<1x2xi1>, vector<1x2xi32>
    %1289 = arith.addf %1286, %1169 : vector<1x2xf32>
    %1290 = vector.broadcast %2 : f32 to vector<1x2xf32>
    %1291 = arith.addf %1161, %1290 : vector<1x2xf32>
    %1292 = vector.broadcast %6 : f32 to vector<1x2xf32>
    %1293 = arith.addf %1162, %1292 : vector<1x2xf32>
    %1294 = vector.broadcast %10 : f32 to vector<1x2xf32>
    %1295 = arith.addf %1163, %1294 : vector<1x2xf32>
    %1296 = vector.broadcast %14 : f32 to vector<1x2xf32>
    %1297 = arith.addf %1164, %1296 : vector<1x2xf32>
    %c0_i32_203 = arith.constant 0 : i32
    %1298 = vector.broadcast %c0_i32_203 : i32 to vector<1x2xi32>
    %1299 = arith.cmpf ogt, %1293, %1291 : vector<1x2xf32>
    %1300 = arith.select %1299, %1293, %1291 : vector<1x2xi1>, vector<1x2xf32>
    %c1_i32_204 = arith.constant 1 : i32
    %1301 = vector.broadcast %c1_i32_204 : i32 to vector<1x2xi32>
    %1302 = arith.select %1299, %1301, %1298 : vector<1x2xi1>, vector<1x2xi32>
    %1303 = arith.cmpf ogt, %1295, %1300 : vector<1x2xf32>
    %1304 = arith.select %1303, %1295, %1300 : vector<1x2xi1>, vector<1x2xf32>
    %c2_i32_205 = arith.constant 2 : i32
    %1305 = vector.broadcast %c2_i32_205 : i32 to vector<1x2xi32>
    %1306 = arith.select %1303, %1305, %1302 : vector<1x2xi1>, vector<1x2xi32>
    %1307 = arith.cmpf ogt, %1297, %1304 : vector<1x2xf32>
    %1308 = arith.select %1307, %1297, %1304 : vector<1x2xi1>, vector<1x2xf32>
    %c3_i32_206 = arith.constant 3 : i32
    %1309 = vector.broadcast %c3_i32_206 : i32 to vector<1x2xi32>
    %1310 = arith.select %1307, %1309, %1306 : vector<1x2xi1>, vector<1x2xi32>
    %1311 = arith.addf %1308, %1170 : vector<1x2xf32>
    %1312 = vector.broadcast %3 : f32 to vector<1x2xf32>
    %1313 = arith.addf %1161, %1312 : vector<1x2xf32>
    %1314 = vector.broadcast %7 : f32 to vector<1x2xf32>
    %1315 = arith.addf %1162, %1314 : vector<1x2xf32>
    %1316 = vector.broadcast %11 : f32 to vector<1x2xf32>
    %1317 = arith.addf %1163, %1316 : vector<1x2xf32>
    %1318 = vector.broadcast %15 : f32 to vector<1x2xf32>
    %1319 = arith.addf %1164, %1318 : vector<1x2xf32>
    %c0_i32_207 = arith.constant 0 : i32
    %1320 = vector.broadcast %c0_i32_207 : i32 to vector<1x2xi32>
    %1321 = arith.cmpf ogt, %1315, %1313 : vector<1x2xf32>
    %1322 = arith.select %1321, %1315, %1313 : vector<1x2xi1>, vector<1x2xf32>
    %c1_i32_208 = arith.constant 1 : i32
    %1323 = vector.broadcast %c1_i32_208 : i32 to vector<1x2xi32>
    %1324 = arith.select %1321, %1323, %1320 : vector<1x2xi1>, vector<1x2xi32>
    %1325 = arith.cmpf ogt, %1317, %1322 : vector<1x2xf32>
    %1326 = arith.select %1325, %1317, %1322 : vector<1x2xi1>, vector<1x2xf32>
    %c2_i32_209 = arith.constant 2 : i32
    %1327 = vector.broadcast %c2_i32_209 : i32 to vector<1x2xi32>
    %1328 = arith.select %1325, %1327, %1324 : vector<1x2xi1>, vector<1x2xi32>
    %1329 = arith.cmpf ogt, %1319, %1326 : vector<1x2xf32>
    %1330 = arith.select %1329, %1319, %1326 : vector<1x2xi1>, vector<1x2xf32>
    %c3_i32_210 = arith.constant 3 : i32
    %1331 = vector.broadcast %c3_i32_210 : i32 to vector<1x2xi32>
    %1332 = arith.select %1329, %1331, %1328 : vector<1x2xi1>, vector<1x2xi32>
    %1333 = arith.addf %1330, %1171 : vector<1x2xf32>
    %1334 = tpu.concatenate %1266, %1288, %1310, %1332 in 0 : vector<1x2xi32>, vector<1x2xi32>, vector<1x2xi32>, vector<1x2xi32> -> vector<4x2xi32>
    %1335 = arith.index_cast %c7_i32 : i32 to index
    %c0_211 = arith.constant 0 : index
    %c0_212 = arith.constant 0 : index
    %1336 = vector.load %arg7[%1335, %c0_211, %c0_212] : memref<8x4x2xi32, #tpu.memory_space<vmem>>, vector<1x4x2xi32>
    %1337 = vector.shape_cast %1336 : vector<1x4x2xi32> to vector<4x2xi32>
    %1338 = vector.shape_cast %1334 : vector<4x2xi32> to vector<1x4x2xi32>
    tpu.vector_store %arg7[%1335, %c0_211, %c0_212], %1338 {strides = array<i32>} : memref<8x4x2xi32, #tpu.memory_space<vmem>>, vector<1x4x2xi32>,
    %1339 = arith.maximumf %1267, %1289 : vector<1x2xf32>
    %1340 = arith.maximumf %1339, %1311 : vector<1x2xf32>
    %1341 = arith.maximumf %1340, %1333 : vector<1x2xf32>
    %1342 = arith.subf %1267, %1341 : vector<1x2xf32>
    %1343 = arith.subf %1289, %1341 : vector<1x2xf32>
    %1344 = arith.subf %1311, %1341 : vector<1x2xf32>
    %1345 = arith.subf %1333, %1341 : vector<1x2xf32>
    %c7_i32_213 = arith.constant 7 : i32
    %c0_214 = arith.constant 0 : index
    %c0_215 = arith.constant 0 : index
    %1346 = vector.load %arg5[%c0_214, %c0_215] : memref<1x2xf32, #tpu.memory_space<vmem>>, vector<1x2xf32>
    tpu.vector_store %arg5[%c0_214, %c0_215], %1245 {strides = array<i32>} : memref<1x2xf32, #tpu.memory_space<vmem>>, vector<1x2xf32>,
    %c0_i32_216 = arith.constant 0 : i32
    %1347 = vector.broadcast %c0_i32_216 : i32 to vector<1x2xi32>
    %1348 = arith.cmpf ogt, %1343, %1342 : vector<1x2xf32>
    %1349 = arith.select %1348, %1343, %1342 : vector<1x2xi1>, vector<1x2xf32>
    %c1_i32_217 = arith.constant 1 : i32
    %1350 = vector.broadcast %c1_i32_217 : i32 to vector<1x2xi32>
    %1351 = arith.select %1348, %1350, %1347 : vector<1x2xi1>, vector<1x2xi32>
    %1352 = arith.cmpf ogt, %1344, %1349 : vector<1x2xf32>
    %1353 = arith.select %1352, %1344, %1349 : vector<1x2xi1>, vector<1x2xf32>
    %c2_i32_218 = arith.constant 2 : i32
    %1354 = vector.broadcast %c2_i32_218 : i32 to vector<1x2xi32>
    %1355 = arith.select %1352, %1354, %1351 : vector<1x2xi1>, vector<1x2xi32>
    %1356 = arith.cmpf ogt, %1345, %1353 : vector<1x2xf32>
    %c3_i32_219 = arith.constant 3 : i32
    %1357 = vector.broadcast %c3_i32_219 : i32 to vector<1x2xi32>
    %1358 = arith.select %1356, %1357, %1355 : vector<1x2xi1>, vector<1x2xi32>
    %c7 = arith.constant 7 : index
    %c0_220 = arith.constant 0 : index
    %c0_221 = arith.constant 0 : index
    %1359 = vector.load %arg6[%c7, %c0_220, %c0_221] : memref<8x1x2xi32, #tpu.memory_space<vmem>>, vector<1x1x2xi32>
    %1360 = vector.shape_cast %1359 : vector<1x1x2xi32> to vector<1x2xi32>
    %1361 = vector.shape_cast %1358 : vector<1x2xi32> to vector<1x1x2xi32>
    tpu.vector_store %arg6[%c7, %c0_220, %c0_221], %1361 {strides = array<i32>} : memref<8x1x2xi32, #tpu.memory_space<vmem>>, vector<1x1x2xi32>,
    %c0_i32_222 = arith.constant 0 : i32
    %c6_i32_223 = arith.constant 6 : i32
    %1362 = arith.subi %c6_i32_223, %c0_i32_222 : i32
    %c1_i32_224 = arith.constant 1 : i32
    %1363 = arith.addi %1362, %c1_i32_224 : i32
    %1364 = arith.index_cast %1363 : i32 to index
    %c0_225 = arith.constant 0 : index
    %c0_226 = arith.constant 0 : index
    %1365 = vector.load %arg7[%1364, %c0_225, %c0_226] : memref<8x4x2xi32, #tpu.memory_space<vmem>>, vector<1x4x2xi32>
    %1366 = vector.shape_cast %1365 : vector<1x4x2xi32> to vector<4x2xi32>
    %1367 = vector.extract_strided_slice %1366 {offsets = [0, 0], sizes = [1, 2], strides = [1, 1]} : vector<4x2xi32> to vector<1x2xi32>
    %1368 = vector.extract_strided_slice %1366 {offsets = [1, 0], sizes = [1, 2], strides = [1, 1]} : vector<4x2xi32> to vector<1x2xi32>
    %1369 = vector.extract_strided_slice %1366 {offsets = [2, 0], sizes = [1, 2], strides = [1, 1]} : vector<4x2xi32> to vector<1x2xi32>
    %1370 = vector.extract_strided_slice %1366 {offsets = [3, 0], sizes = [1, 2], strides = [1, 1]} : vector<4x2xi32> to vector<1x2xi32>
    %c1_i32_227 = arith.constant 1 : i32
    %1371 = vector.broadcast %c1_i32_227 : i32 to vector<1x2xi32>
    %1372 = arith.cmpi eq, %1358, %1371 : vector<1x2xi32>
    %1373 = arith.select %1372, %1368, %1367 : vector<1x2xi1>, vector<1x2xi32>
    %c2_i32_228 = arith.constant 2 : i32
    %1374 = vector.broadcast %c2_i32_228 : i32 to vector<1x2xi32>
    %1375 = arith.cmpi eq, %1358, %1374 : vector<1x2xi32>
    %1376 = arith.select %1375, %1369, %1373 : vector<1x2xi1>, vector<1x2xi32>
    %c3_i32_229 = arith.constant 3 : i32
    %1377 = vector.broadcast %c3_i32_229 : i32 to vector<1x2xi32>
    %1378 = arith.cmpi eq, %1358, %1377 : vector<1x2xi32>
    %1379 = arith.select %1378, %1370, %1376 : vector<1x2xi1>, vector<1x2xi32>
    %1380 = arith.index_cast %1362 : i32 to index
    %c0_230 = arith.constant 0 : index
    %c0_231 = arith.constant 0 : index
    %1381 = vector.load %arg6[%1380, %c0_230, %c0_231] : memref<8x1x2xi32, #tpu.memory_space<vmem>>, vector<1x1x2xi32>
    %1382 = vector.shape_cast %1381 : vector<1x1x2xi32> to vector<1x2xi32>
    %1383 = vector.shape_cast %1379 : vector<1x2xi32> to vector<1x1x2xi32>
    tpu.vector_store %arg6[%1380, %c0_230, %c0_231], %1383 {strides = array<i32>} : memref<8x1x2xi32, #tpu.memory_space<vmem>>, vector<1x1x2xi32>,
    %c1_i32_232 = arith.constant 1 : i32
    %c6_i32_233 = arith.constant 6 : i32
    %1384 = arith.subi %c6_i32_233, %c1_i32_232 : i32
    %c1_i32_234 = arith.constant 1 : i32
    %1385 = arith.addi %1384, %c1_i32_234 : i32
    %1386 = arith.index_cast %1385 : i32 to index
    %c0_235 = arith.constant 0 : index
    %c0_236 = arith.constant 0 : index
    %1387 = vector.load %arg7[%1386, %c0_235, %c0_236] : memref<8x4x2xi32, #tpu.memory_space<vmem>>, vector<1x4x2xi32>
    %1388 = vector.shape_cast %1387 : vector<1x4x2xi32> to vector<4x2xi32>
    %1389 = vector.extract_strided_slice %1388 {offsets = [0, 0], sizes = [1, 2], strides = [1, 1]} : vector<4x2xi32> to vector<1x2xi32>
    %1390 = vector.extract_strided_slice %1388 {offsets = [1, 0], sizes = [1, 2], strides = [1, 1]} : vector<4x2xi32> to vector<1x2xi32>
    %1391 = vector.extract_strided_slice %1388 {offsets = [2, 0], sizes = [1, 2], strides = [1, 1]} : vector<4x2xi32> to vector<1x2xi32>
    %1392 = vector.extract_strided_slice %1388 {offsets = [3, 0], sizes = [1, 2], strides = [1, 1]} : vector<4x2xi32> to vector<1x2xi32>
    %c1_i32_237 = arith.constant 1 : i32
    %1393 = vector.broadcast %c1_i32_237 : i32 to vector<1x2xi32>
    %1394 = arith.cmpi eq, %1379, %1393 : vector<1x2xi32>
    %1395 = arith.select %1394, %1390, %1389 : vector<1x2xi1>, vector<1x2xi32>
    %c2_i32_238 = arith.constant 2 : i32
    %1396 = vector.broadcast %c2_i32_238 : i32 to vector<1x2xi32>
    %1397 = arith.cmpi eq, %1379, %1396 : vector<1x2xi32>
    %1398 = arith.select %1397, %1391, %1395 : vector<1x2xi1>, vector<1x2xi32>
    %c3_i32_239 = arith.constant 3 : i32
    %1399 = vector.broadcast %c3_i32_239 : i32 to vector<1x2xi32>
    %1400 = arith.cmpi eq, %1379, %1399 : vector<1x2xi32>
    %1401 = arith.select %1400, %1392, %1398 : vector<1x2xi1>, vector<1x2xi32>
    %1402 = arith.index_cast %1384 : i32 to index
    %c0_240 = arith.constant 0 : index
    %c0_241 = arith.constant 0 : index
    %1403 = vector.load %arg6[%1402, %c0_240, %c0_241] : memref<8x1x2xi32, #tpu.memory_space<vmem>>, vector<1x1x2xi32>
    %1404 = vector.shape_cast %1403 : vector<1x1x2xi32> to vector<1x2xi32>
    %1405 = vector.shape_cast %1401 : vector<1x2xi32> to vector<1x1x2xi32>
    tpu.vector_store %arg6[%1402, %c0_240, %c0_241], %1405 {strides = array<i32>} : memref<8x1x2xi32, #tpu.memory_space<vmem>>, vector<1x1x2xi32>,
    %c2_i32_242 = arith.constant 2 : i32
    %c6_i32_243 = arith.constant 6 : i32
    %1406 = arith.subi %c6_i32_243, %c2_i32_242 : i32
    %c1_i32_244 = arith.constant 1 : i32
    %1407 = arith.addi %1406, %c1_i32_244 : i32
    %1408 = arith.index_cast %1407 : i32 to index
    %c0_245 = arith.constant 0 : index
    %c0_246 = arith.constant 0 : index
    %1409 = vector.load %arg7[%1408, %c0_245, %c0_246] : memref<8x4x2xi32, #tpu.memory_space<vmem>>, vector<1x4x2xi32>
    %1410 = vector.shape_cast %1409 : vector<1x4x2xi32> to vector<4x2xi32>
    %1411 = vector.extract_strided_slice %1410 {offsets = [0, 0], sizes = [1, 2], strides = [1, 1]} : vector<4x2xi32> to vector<1x2xi32>
    %1412 = vector.extract_strided_slice %1410 {offsets = [1, 0], sizes = [1, 2], strides = [1, 1]} : vector<4x2xi32> to vector<1x2xi32>
    %1413 = vector.extract_strided_slice %1410 {offsets = [2, 0], sizes = [1, 2], strides = [1, 1]} : vector<4x2xi32> to vector<1x2xi32>
    %1414 = vector.extract_strided_slice %1410 {offsets = [3, 0], sizes = [1, 2], strides = [1, 1]} : vector<4x2xi32> to vector<1x2xi32>
    %c1_i32_247 = arith.constant 1 : i32
    %1415 = vector.broadcast %c1_i32_247 : i32 to vector<1x2xi32>
    %1416 = arith.cmpi eq, %1401, %1415 : vector<1x2xi32>
    %1417 = arith.select %1416, %1412, %1411 : vector<1x2xi1>, vector<1x2xi32>
    %c2_i32_248 = arith.constant 2 : i32
    %1418 = vector.broadcast %c2_i32_248 : i32 to vector<1x2xi32>
    %1419 = arith.cmpi eq, %1401, %1418 : vector<1x2xi32>
    %1420 = arith.select %1419, %1413, %1417 : vector<1x2xi1>, vector<1x2xi32>
    %c3_i32_249 = arith.constant 3 : i32
    %1421 = vector.broadcast %c3_i32_249 : i32 to vector<1x2xi32>
    %1422 = arith.cmpi eq, %1401, %1421 : vector<1x2xi32>
    %1423 = arith.select %1422, %1414, %1420 : vector<1x2xi1>, vector<1x2xi32>
    %1424 = arith.index_cast %1406 : i32 to index
    %c0_250 = arith.constant 0 : index
    %c0_251 = arith.constant 0 : index
    %1425 = vector.load %arg6[%1424, %c0_250, %c0_251] : memref<8x1x2xi32, #tpu.memory_space<vmem>>, vector<1x1x2xi32>
    %1426 = vector.shape_cast %1425 : vector<1x1x2xi32> to vector<1x2xi32>
    %1427 = vector.shape_cast %1423 : vector<1x2xi32> to vector<1x1x2xi32>
    tpu.vector_store %arg6[%1424, %c0_250, %c0_251], %1427 {strides = array<i32>} : memref<8x1x2xi32, #tpu.memory_space<vmem>>, vector<1x1x2xi32>,
    %c3_i32_252 = arith.constant 3 : i32
    %c6_i32_253 = arith.constant 6 : i32
    %1428 = arith.subi %c6_i32_253, %c3_i32_252 : i32
    %c1_i32_254 = arith.constant 1 : i32
    %1429 = arith.addi %1428, %c1_i32_254 : i32
    %1430 = arith.index_cast %1429 : i32 to index
    %c0_255 = arith.constant 0 : index
    %c0_256 = arith.constant 0 : index
    %1431 = vector.load %arg7[%1430, %c0_255, %c0_256] : memref<8x4x2xi32, #tpu.memory_space<vmem>>, vector<1x4x2xi32>
    %1432 = vector.shape_cast %1431 : vector<1x4x2xi32> to vector<4x2xi32>
    %1433 = vector.extract_strided_slice %1432 {offsets = [0, 0], sizes = [1, 2], strides = [1, 1]} : vector<4x2xi32> to vector<1x2xi32>
    %1434 = vector.extract_strided_slice %1432 {offsets = [1, 0], sizes = [1, 2], strides = [1, 1]} : vector<4x2xi32> to vector<1x2xi32>
    %1435 = vector.extract_strided_slice %1432 {offsets = [2, 0], sizes = [1, 2], strides = [1, 1]} : vector<4x2xi32> to vector<1x2xi32>
    %1436 = vector.extract_strided_slice %1432 {offsets = [3, 0], sizes = [1, 2], strides = [1, 1]} : vector<4x2xi32> to vector<1x2xi32>
    %c1_i32_257 = arith.constant 1 : i32
    %1437 = vector.broadcast %c1_i32_257 : i32 to vector<1x2xi32>
    %1438 = arith.cmpi eq, %1423, %1437 : vector<1x2xi32>
    %1439 = arith.select %1438, %1434, %1433 : vector<1x2xi1>, vector<1x2xi32>
    %c2_i32_258 = arith.constant 2 : i32
    %1440 = vector.broadcast %c2_i32_258 : i32 to vector<1x2xi32>
    %1441 = arith.cmpi eq, %1423, %1440 : vector<1x2xi32>
    %1442 = arith.select %1441, %1435, %1439 : vector<1x2xi1>, vector<1x2xi32>
    %c3_i32_259 = arith.constant 3 : i32
    %1443 = vector.broadcast %c3_i32_259 : i32 to vector<1x2xi32>
    %1444 = arith.cmpi eq, %1423, %1443 : vector<1x2xi32>
    %1445 = arith.select %1444, %1436, %1442 : vector<1x2xi1>, vector<1x2xi32>
    %1446 = arith.index_cast %1428 : i32 to index
    %c0_260 = arith.constant 0 : index
    %c0_261 = arith.constant 0 : index
    %1447 = vector.load %arg6[%1446, %c0_260, %c0_261] : memref<8x1x2xi32, #tpu.memory_space<vmem>>, vector<1x1x2xi32>
    %1448 = vector.shape_cast %1447 : vector<1x1x2xi32> to vector<1x2xi32>
    %1449 = vector.shape_cast %1445 : vector<1x2xi32> to vector<1x1x2xi32>
    tpu.vector_store %arg6[%1446, %c0_260, %c0_261], %1449 {strides = array<i32>} : memref<8x1x2xi32, #tpu.memory_space<vmem>>, vector<1x1x2xi32>,
    %c4_i32_262 = arith.constant 4 : i32
    %c6_i32_263 = arith.constant 6 : i32
    %1450 = arith.subi %c6_i32_263, %c4_i32_262 : i32
    %c1_i32_264 = arith.constant 1 : i32
    %1451 = arith.addi %1450, %c1_i32_264 : i32
    %1452 = arith.index_cast %1451 : i32 to index
    %c0_265 = arith.constant 0 : index
    %c0_266 = arith.constant 0 : index
    %1453 = vector.load %arg7[%1452, %c0_265, %c0_266] : memref<8x4x2xi32, #tpu.memory_space<vmem>>, vector<1x4x2xi32>
    %1454 = vector.shape_cast %1453 : vector<1x4x2xi32> to vector<4x2xi32>
    %1455 = vector.extract_strided_slice %1454 {offsets = [0, 0], sizes = [1, 2], strides = [1, 1]} : vector<4x2xi32> to vector<1x2xi32>
    %1456 = vector.extract_strided_slice %1454 {offsets = [1, 0], sizes = [1, 2], strides = [1, 1]} : vector<4x2xi32> to vector<1x2xi32>
    %1457 = vector.extract_strided_slice %1454 {offsets = [2, 0], sizes = [1, 2], strides = [1, 1]} : vector<4x2xi32> to vector<1x2xi32>
    %1458 = vector.extract_strided_slice %1454 {offsets = [3, 0], sizes = [1, 2], strides = [1, 1]} : vector<4x2xi32> to vector<1x2xi32>
    %c1_i32_267 = arith.constant 1 : i32
    %1459 = vector.broadcast %c1_i32_267 : i32 to vector<1x2xi32>
    %1460 = arith.cmpi eq, %1445, %1459 : vector<1x2xi32>
    %1461 = arith.select %1460, %1456, %1455 : vector<1x2xi1>, vector<1x2xi32>
    %c2_i32_268 = arith.constant 2 : i32
    %1462 = vector.broadcast %c2_i32_268 : i32 to vector<1x2xi32>
    %1463 = arith.cmpi eq, %1445, %1462 : vector<1x2xi32>
    %1464 = arith.select %1463, %1457, %1461 : vector<1x2xi1>, vector<1x2xi32>
    %c3_i32_269 = arith.constant 3 : i32
    %1465 = vector.broadcast %c3_i32_269 : i32 to vector<1x2xi32>
    %1466 = arith.cmpi eq, %1445, %1465 : vector<1x2xi32>
    %1467 = arith.select %1466, %1458, %1464 : vector<1x2xi1>, vector<1x2xi32>
    %1468 = arith.index_cast %1450 : i32 to index
    %c0_270 = arith.constant 0 : index
    %c0_271 = arith.constant 0 : index
    %1469 = vector.load %arg6[%1468, %c0_270, %c0_271] : memref<8x1x2xi32, #tpu.memory_space<vmem>>, vector<1x1x2xi32>
    %1470 = vector.shape_cast %1469 : vector<1x1x2xi32> to vector<1x2xi32>
    %1471 = vector.shape_cast %1467 : vector<1x2xi32> to vector<1x1x2xi32>
    tpu.vector_store %arg6[%1468, %c0_270, %c0_271], %1471 {strides = array<i32>} : memref<8x1x2xi32, #tpu.memory_space<vmem>>, vector<1x1x2xi32>,
    %c5_i32_272 = arith.constant 5 : i32
    %c6_i32_273 = arith.constant 6 : i32
    %1472 = arith.subi %c6_i32_273, %c5_i32_272 : i32
    %c1_i32_274 = arith.constant 1 : i32
    %1473 = arith.addi %1472, %c1_i32_274 : i32
    %1474 = arith.index_cast %1473 : i32 to index
    %c0_275 = arith.constant 0 : index
    %c0_276 = arith.constant 0 : index
    %1475 = vector.load %arg7[%1474, %c0_275, %c0_276] : memref<8x4x2xi32, #tpu.memory_space<vmem>>, vector<1x4x2xi32>
    %1476 = vector.shape_cast %1475 : vector<1x4x2xi32> to vector<4x2xi32>
    %1477 = vector.extract_strided_slice %1476 {offsets = [0, 0], sizes = [1, 2], strides = [1, 1]} : vector<4x2xi32> to vector<1x2xi32>
    %1478 = vector.extract_strided_slice %1476 {offsets = [1, 0], sizes = [1, 2], strides = [1, 1]} : vector<4x2xi32> to vector<1x2xi32>
    %1479 = vector.extract_strided_slice %1476 {offsets = [2, 0], sizes = [1, 2], strides = [1, 1]} : vector<4x2xi32> to vector<1x2xi32>
    %1480 = vector.extract_strided_slice %1476 {offsets = [3, 0], sizes = [1, 2], strides = [1, 1]} : vector<4x2xi32> to vector<1x2xi32>
    %c1_i32_277 = arith.constant 1 : i32
    %1481 = vector.broadcast %c1_i32_277 : i32 to vector<1x2xi32>
    %1482 = arith.cmpi eq, %1467, %1481 : vector<1x2xi32>
    %1483 = arith.select %1482, %1478, %1477 : vector<1x2xi1>, vector<1x2xi32>
    %c2_i32_278 = arith.constant 2 : i32
    %1484 = vector.broadcast %c2_i32_278 : i32 to vector<1x2xi32>
    %1485 = arith.cmpi eq, %1467, %1484 : vector<1x2xi32>
    %1486 = arith.select %1485, %1479, %1483 : vector<1x2xi1>, vector<1x2xi32>
    %c3_i32_279 = arith.constant 3 : i32
    %1487 = vector.broadcast %c3_i32_279 : i32 to vector<1x2xi32>
    %1488 = arith.cmpi eq, %1467, %1487 : vector<1x2xi32>
    %1489 = arith.select %1488, %1480, %1486 : vector<1x2xi1>, vector<1x2xi32>
    %1490 = arith.index_cast %1472 : i32 to index
    %c0_280 = arith.constant 0 : index
    %c0_281 = arith.constant 0 : index
    %1491 = vector.load %arg6[%1490, %c0_280, %c0_281] : memref<8x1x2xi32, #tpu.memory_space<vmem>>, vector<1x1x2xi32>
    %1492 = vector.shape_cast %1491 : vector<1x1x2xi32> to vector<1x2xi32>
    %1493 = vector.shape_cast %1489 : vector<1x2xi32> to vector<1x1x2xi32>
    tpu.vector_store %arg6[%1490, %c0_280, %c0_281], %1493 {strides = array<i32>} : memref<8x1x2xi32, #tpu.memory_space<vmem>>, vector<1x1x2xi32>,
    %c6_i32_282 = arith.constant 6 : i32
    %c6_i32_283 = arith.constant 6 : i32
    %1494 = arith.subi %c6_i32_283, %c6_i32_282 : i32
    %c1_i32_284 = arith.constant 1 : i32
    %1495 = arith.addi %1494, %c1_i32_284 : i32
    %1496 = arith.index_cast %1495 : i32 to index
    %c0_285 = arith.constant 0 : index
    %c0_286 = arith.constant 0 : index
    %1497 = vector.load %arg7[%1496, %c0_285, %c0_286] : memref<8x4x2xi32, #tpu.memory_space<vmem>>, vector<1x4x2xi32>
    %1498 = vector.shape_cast %1497 : vector<1x4x2xi32> to vector<4x2xi32>
    %1499 = vector.extract_strided_slice %1498 {offsets = [0, 0], sizes = [1, 2], strides = [1, 1]} : vector<4x2xi32> to vector<1x2xi32>
    %1500 = vector.extract_strided_slice %1498 {offsets = [1, 0], sizes = [1, 2], strides = [1, 1]} : vector<4x2xi32> to vector<1x2xi32>
    %1501 = vector.extract_strided_slice %1498 {offsets = [2, 0], sizes = [1, 2], strides = [1, 1]} : vector<4x2xi32> to vector<1x2xi32>
    %1502 = vector.extract_strided_slice %1498 {offsets = [3, 0], sizes = [1, 2], strides = [1, 1]} : vector<4x2xi32> to vector<1x2xi32>
    %c1_i32_287 = arith.constant 1 : i32
    %1503 = vector.broadcast %c1_i32_287 : i32 to vector<1x2xi32>
    %1504 = arith.cmpi eq, %1489, %1503 : vector<1x2xi32>
    %1505 = arith.select %1504, %1500, %1499 : vector<1x2xi1>, vector<1x2xi32>
    %c2_i32_288 = arith.constant 2 : i32
    %1506 = vector.broadcast %c2_i32_288 : i32 to vector<1x2xi32>
    %1507 = arith.cmpi eq, %1489, %1506 : vector<1x2xi32>
    %1508 = arith.select %1507, %1501, %1505 : vector<1x2xi1>, vector<1x2xi32>
    %c3_i32_289 = arith.constant 3 : i32
    %1509 = vector.broadcast %c3_i32_289 : i32 to vector<1x2xi32>
    %1510 = arith.cmpi eq, %1489, %1509 : vector<1x2xi32>
    %1511 = arith.select %1510, %1502, %1508 : vector<1x2xi1>, vector<1x2xi32>
    %1512 = arith.index_cast %1494 : i32 to index
    %c0_290 = arith.constant 0 : index
    %c0_291 = arith.constant 0 : index
    %1513 = vector.load %arg6[%1512, %c0_290, %c0_291] : memref<8x1x2xi32, #tpu.memory_space<vmem>>, vector<1x1x2xi32>
    %1514 = vector.shape_cast %1513 : vector<1x1x2xi32> to vector<1x2xi32>
    %1515 = vector.shape_cast %1511 : vector<1x2xi32> to vector<1x1x2xi32>
    tpu.vector_store %arg6[%1512, %c0_290, %c0_291], %1515 {strides = array<i32>} : memref<8x1x2xi32, #tpu.memory_space<vmem>>, vector<1x1x2xi32>,
    %c7_i32_292 = arith.constant 7 : i32
    return
  }
  func.func @transform_0(%arg0: i32) -> (i32, i32, i32) {
    %c0_i32 = arith.constant 0 : i32
    %c0_i32_0 = arith.constant 0 : i32
    %c0_i32_1 = arith.constant 0 : i32
    return %c0_i32, %c0_i32_0, %arg0 : i32, i32, i32
  }
  func.func @transform_1(%arg0: i32) -> (i32, i32) {
    %c0_i32 = arith.constant 0 : i32
    %c0_i32_0 = arith.constant 0 : i32
    %c0_i32_1 = arith.constant 0 : i32
    return %c0_i32, %c0_i32_0 : i32, i32
  }
  func.func @transform_2(%arg0: i32) -> (i32, i32) {
    %c0_i32 = arith.constant 0 : i32
    %c0_i32_0 = arith.constant 0 : i32
    %c0_i32_1 = arith.constant 0 : i32
    return %c0_i32, %c0_i32_0 : i32, i32
  }
  func.func @transform_3(%arg0: i32) -> i32 {
    %c0_i32 = arith.constant 0 : i32
    %c0_i32_0 = arith.constant 0 : i32
    return %c0_i32 : i32
  }
  func.func @transform_4(%arg0: i32) -> (i32, i32) {
    %c0_i32 = arith.constant 0 : i32
    %c0_i32_0 = arith.constant 0 : i32
    return %c0_i32, %arg0 : i32, i32
  }
  func.func @transform_5(%arg0: i32) -> (i32, i32, i32) {
    %c0_i32 = arith.constant 0 : i32
    %c0_i32_0 = arith.constant 0 : i32
    %c0_i32_1 = arith.constant 0 : i32
    return %c0_i32, %c0_i32_0, %arg0 : i32, i32, i32
  }
}

</mosaic_0001>

<llo_original>
// kernel: cartpole_hmmz_forward.2
$region0: #{cartpole_hmmz_forward.2}
  #allocation0 [shape = 'u32[]', space=smem, size = 0x4, offset = 0x4, fixed_abs, tag = 'smem constant byte address 0x4 - core index']
  #allocation1 [shape = 'u32[144,128]{1,0:T(1,128)}', space=vmem, size = 0x12000, scoped, tag = 'internal scratch']
  %s0 = inlined_call_operand.hbm [shape: f32[16,16], index: 0, kind: input, shape index: {}]
  %s1 = inlined_call_operand.hbm [shape: f32[32,12], index: 1, kind: input, shape index: {}]
  %s2 = inlined_call_operand.hbm [shape: f32[32,1], index: 2, kind: input, shape index: {}]
  %s3 = inlined_call_operand.hbm [shape: f32[32,32], index: 3, kind: input, shape index: {}]
  %s4 = inlined_call_operand.hbm [shape: f32[32,1], index: 4, kind: input, shape index: {}]
  %s5 = inlined_call_operand.hbm [shape: f32[4,16], index: 5, kind: input, shape index: {}]
  %s6 = inlined_call_operand.hbm [shape: f32[4,16], index: 6, kind: output, shape index: {}]
  %s7 = sld [smem:[#allocation0]]
  $region58: #{cartpole_hmmz_forward.2} parent=0
    _
  %s9 = ssub.s32 1, %s7
  %s10 = scalar_select 0, %s9, %s7
  $region1: #{cartpole_hmmz_forward.2} parent=0
    #allocation2 [shape = 'u8[8192]{0}', space=vmem, size = 0x2000, scoped, tag = 'input window, operand 0, single buffered']
    #allocation3 [shape = 's32[1]{0}', space=sflag, size = 0x4, scoped, tag = 'scoped memory for cartpole_hmmz_forward.2']
    #allocation4 [shape = 's32[1]{0}', space=sflag, size = 0x4, scoped, tag = 'scoped memory for cartpole_hmmz_forward.2']
    #allocation5 [shape = 'u8[16384]{0}', space=vmem, size = 0x4000, scoped, tag = 'input window, operand 1, single buffered']
    #allocation6 [shape = 's32[1]{0}', space=sflag, size = 0x4, scoped, tag = 'scoped memory for cartpole_hmmz_forward.2']
    #allocation7 [shape = 'u8[16384]{0}', space=vmem, size = 0x4000, scoped, tag = 'input window, operand 2, single buffered']
    #allocation8 [shape = 'u8[16384]{0}', space=vmem, size = 0x4000, scoped, tag = 'input window, operand 3, single buffered']
    #allocation9 [shape = 's32[1]{0}', space=sflag, size = 0x4, scoped, tag = 'scoped memory for cartpole_hmmz_forward.2']
    #allocation10 [shape = 'u8[16384]{0}', space=vmem, size = 0x4000, scoped, tag = 'input window, operand 4, single buffered']
    #allocation11 [shape = 'u8[2048]{0}', space=vmem, size = 0x800, scoped, tag = 'input window, operand 5, single buffered']
    #allocation12 [shape = 's32[1]{0}', space=sflag, size = 0x4, scoped, tag = 'scoped memory for cartpole_hmmz_forward.2']
    #allocation13 [shape = 'u8[2048]{0}', space=vmem, size = 0x800, scoped, tag = 'output window, operand 0, single buffered']
    %11 = vsyncpa [#allocation3], 0
    %12 = vsyncpa [#allocation6], 0
    %13 = vsyncpa [#allocation9], 0
    %14 = vsyncpa [#allocation12], 0
    %15 = vsyncpa [#allocation4], 0
    // Predicated region
    $region2: #{cartpole_hmmz_forward.2} parent=1 // pred_check
      _
    $region3: #{cartpole_hmmz_forward.2} parent=1 // pred_check_branch
      %17 = sbr.rel (0) target = $region5
    $region4: #{cartpole_hmmz_forward.2} parent=1 // pred_region
      %s19 = ssub.s32 256, 256
      %20 = vsyncadd [#allocation3], %s19
      %s21 = sshll.u32 [#allocation2], 4
      %s22 = int_to_ptr.vmem [resolvable:$true] %s21
      %27 = dma.hbm_to_vmem [thread:$0]  %s0, 256, %s22, [#allocation3], 128, 128, 8
    $region5: #{cartpole_hmmz_forward.2} parent=1 // pred_fallthru
      _
    // Predicated region
    $region6: #{cartpole_hmmz_forward.2} parent=1 // pred_check
      _
    $region7: #{cartpole_hmmz_forward.2} parent=1 // pred_check_branch
      %29 = sbr.rel (0) target = $region9
    $region8: #{cartpole_hmmz_forward.2} parent=1 // pred_region
      %s31 = ssub.s32 512, 512
      %32 = vsyncadd [#allocation6], %s31
      %s33 = sshll.u32 [#allocation5], 4
      %s34 = int_to_ptr.vmem [resolvable:$true] %s33
      %39 = dma.hbm_to_vmem [thread:$0]  %s1, 512, %s34, [#allocation6], 128, 128, 8
    $region9: #{cartpole_hmmz_forward.2} parent=1 // pred_fallthru
      _
    // Predicated region
    $region10: #{cartpole_hmmz_forward.2} parent=1 // pred_check
      _
    $region11: #{cartpole_hmmz_forward.2} parent=1 // pred_check_branch
      %41 = sbr.rel (0) target = $region13
    $region12: #{cartpole_hmmz_forward.2} parent=1 // pred_region
      %s43 = ssub.s32 512, 512
      %44 = vsyncadd [#allocation6], %s43
      %s45 = sshll.u32 [#allocation7], 4
      %s46 = int_to_ptr.vmem [resolvable:$true] %s45
      %51 = dma.hbm_to_vmem [thread:$0]  %s2, 512, %s46, [#allocation6], 128, 128, 8
    $region13: #{cartpole_hmmz_forward.2} parent=1 // pred_fallthru
      _
    // Predicated region
    $region14: #{cartpole_hmmz_forward.2} parent=1 // pred_check
      _
    $region15: #{cartpole_hmmz_forward.2} parent=1 // pred_check_branch
      %53 = sbr.rel (0) target = $region17
    $region16: #{cartpole_hmmz_forward.2} parent=1 // pred_region
      %s55 = ssub.s32 512, 512
      %56 = vsyncadd [#allocation9], %s55
      %s57 = sshll.u32 [#allocation8], 4
      %s58 = int_to_ptr.vmem [resolvable:$true] %s57
      %63 = dma.hbm_to_vmem [thread:$0]  %s3, 512, %s58, [#allocation9], 128, 128, 8
    $region17: #{cartpole_hmmz_forward.2} parent=1 // pred_fallthru
      _
    // Predicated region
    $region18: #{cartpole_hmmz_forward.2} parent=1 // pred_check
      _
    $region19: #{cartpole_hmmz_forward.2} parent=1 // pred_check_branch
      %65 = sbr.rel (0) target = $region21
    $region20: #{cartpole_hmmz_forward.2} parent=1 // pred_region
      %s67 = ssub.s32 512, 512
      %68 = vsyncadd [#allocation9], %s67
      %s69 = sshll.u32 [#allocation10], 4
      %s70 = int_to_ptr.vmem [resolvable:$true] %s69
      %75 = dma.hbm_to_vmem [thread:$0]  %s4, 512, %s70, [#allocation9], 128, 128, 8
    $region21: #{cartpole_hmmz_forward.2} parent=1 // pred_fallthru
      _
    // Predicated region
    $region22: #{cartpole_hmmz_forward.2} parent=1 // pred_check
      _
    $region23: #{cartpole_hmmz_forward.2} parent=1 // pred_check_branch
      %77 = sbr.rel (0) target = $region25
    $region24: #{cartpole_hmmz_forward.2} parent=1 // pred_region
      %s79 = ssub.s32 64, 64
      %80 = vsyncadd [#allocation12], %s79
      %s82 = sshll.u32 [#allocation11], 4
      %s83 = int_to_ptr.vmem [resolvable:$true] %s82
      %85 = dma.hbm_to_vmem [thread:$0]  %s5, 64, %s83, [#allocation12]
    $region25: #{cartpole_hmmz_forward.2} parent=1 // pred_fallthru
      _
    // Predicated region
    $region26: #{cartpole_hmmz_forward.2} parent=1 // pred_check
      _
    $region27: #{cartpole_hmmz_forward.2} parent=1 // pred_check_branch
      %87 = sbr.rel (0) target = $region29
    $region28: #{cartpole_hmmz_forward.2} parent=1 // pred_region
      %88 = dma.done [#allocation3], 256
    $region29: #{cartpole_hmmz_forward.2} parent=1 // pred_fallthru
      _
    // Predicated region
    $region30: #{cartpole_hmmz_forward.2} parent=1 // pred_check
      _
    $region31: #{cartpole_hmmz_forward.2} parent=1 // pred_check_branch
      %90 = sbr.rel (0) target = $region33
    $region32: #{cartpole_hmmz_forward.2} parent=1 // pred_region
      %91 = dma.done [#allocation6], 512
    $region33: #{cartpole_hmmz_forward.2} parent=1 // pred_fallthru
      _
    // Predicated region
    $region34: #{cartpole_hmmz_forward.2} parent=1 // pred_check
      _
    $region35: #{cartpole_hmmz_forward.2} parent=1 // pred_check_branch
      %93 = sbr.rel (0) target = $region37
    $region36: #{cartpole_hmmz_forward.2} parent=1 // pred_region
      %94 = dma.done [#allocation6], 512
    $region37: #{cartpole_hmmz_forward.2} parent=1 // pred_fallthru
      _
    // Predicated region
    $region38: #{cartpole_hmmz_forward.2} parent=1 // pred_check
      _
    $region39: #{cartpole_hmmz_forward.2} parent=1 // pred_check_branch
      %96 = sbr.rel (0) target = $region41
    $region40: #{cartpole_hmmz_forward.2} parent=1 // pred_region
      %97 = dma.done [#allocation9], 512
    $region41: #{cartpole_hmmz_forward.2} parent=1 // pred_fallthru
      _
    // Predicated region
    $region42: #{cartpole_hmmz_forward.2} parent=1 // pred_check
      _
    $region43: #{cartpole_hmmz_forward.2} parent=1 // pred_check_branch
      %99 = sbr.rel (0) target = $region45
    $region44: #{cartpole_hmmz_forward.2} parent=1 // pred_region
      %100 = dma.done [#allocation9], 512
    $region45: #{cartpole_hmmz_forward.2} parent=1 // pred_fallthru
      _
    // Predicated region
    $region46: #{cartpole_hmmz_forward.2} parent=1 // pred_check
      _
    $region47: #{cartpole_hmmz_forward.2} parent=1 // pred_check_branch
      %102 = sbr.rel (0) target = $region49
    $region48: #{cartpole_hmmz_forward.2} parent=1 // pred_region
      %103 = dma.done [#allocation12], 64
    $region49: #{cartpole_hmmz_forward.2} parent=1 // pred_fallthru
      _
    %v104 = vld [vmem:[#allocation2] sm:$0xff]
    %v105 = vld [vmem:[#allocation2 + $0x8] sm:$0xff]
    %v106 = vld [vmem:[#allocation5] sm:$0xff]
    %v107 = vld [vmem:[#allocation5 + $0x8] sm:$0xff]
    %v108 = vld [vmem:[#allocation5 + $0x10] sm:$0xff]
    %v109 = vld [vmem:[#allocation5 + $0x18] sm:$0xff]
    %v110 = vld [vmem:[#allocation7] sm:$0xff]
    %v111 = vld [vmem:[#allocation7 + $0x8] sm:$0xff]
    %v112 = vld [vmem:[#allocation7 + $0x10] sm:$0xff]
    %v113 = vld [vmem:[#allocation7 + $0x18] sm:$0xff]
    %115 = vset.pattern.permute.xlu0 0
    %116 = vperm.xlu0 %115, %v110
    %v117 = vpop.permute.xlu0 %116
    %120 = vset.pattern.permute.xlu0 0
    %121 = vperm.xlu0 %120, %v111
    %v122 = vpop.permute.xlu0 %121
    %125 = vset.pattern.permute.xlu0 0
    %126 = vperm.xlu0 %125, %v112
    %v127 = vpop.permute.xlu0 %126
    %130 = vset.pattern.permute.xlu0 0
    %131 = vperm.xlu0 %130, %v113
    %v132 = vpop.permute.xlu0 %131
    %vm134 = vcmask 97280
    %v136 = vsel %vm134, %v106, 0
    %v139 = vsel %vm134, %v107, 0
    %v142 = vsel %vm134, %v108, 0
    %v145 = vsel %vm134, %v109, 0
    %vm147 = vcmask 1043456
    %v149 = vsel %vm147, %v105, 0
    %151 = vmatprep.subr.mxu0 0.0
    %152 = vmatpush1.msra.mxu0 %v104
    %153 = vmatprep.subr.mxu0 0.0
    %154 = vmatpush1.msra.mxu0 %v149
    %155 = vmatprep.subr.mxu0 0.0
    %156 = vmatpush1.msra.mxu0 0.0
    %157 = vmatprep.subr.mxu0 0.0
    %158 = vmatpush1.msra.mxu0 0.0
    %159 = vmatprep.subr.mxu0 0.0
    %160 = vmatpush1.msra.mxu0 0.0
    %161 = vmatprep.subr.mxu0 0.0
    %162 = vmatpush1.msra.mxu0 0.0
    %163 = vmatprep.subr.mxu0 0.0
    %164 = vmatpush1.msra.mxu0 0.0
    %165 = vmatprep.subr.mxu0 0.0
    %166 = vmatpush1.msra.mxu0 0.0
    %167 = vmatprep.subr.mxu0 0.0
    %168 = vmatpush1.msra.mxu0 0.0
    %169 = vmatprep.subr.mxu0 0.0
    %170 = vmatpush1.msra.mxu0 0.0
    %171 = vmatprep.subr.mxu0 0.0
    %172 = vmatpush1.msra.mxu0 0.0
    %173 = vmatprep.subr.mxu0 0.0
    %174 = vmatpush1.msra.mxu0 0.0
    %175 = vmatprep.subr.mxu0 0.0
    %176 = vmatpush1.msra.mxu0 0.0
    %177 = vmatprep.subr.mxu0 0.0
    %178 = vmatpush1.msra.mxu0 0.0
    %179 = vmatprep.subr.mxu0 0.0
    %180 = vmatpush1.msra.mxu0 0.0
    %181 = vmatprep.subr.mxu0 0.0
    %182 = vmatpush1.msra.mxu0 0.0
    %183 = vmatprep.subr.mxu0 0.0
    %184 = vmatpush1.msra.mxu0 0.0
    %185 = vmatprep.subr.mxu0 0.0
    %186 = vmatpush1.msra.mxu0 0.0
    %187 = vmatprep.subr.mxu0 0.0
    %188 = vmatpush1.msra.mxu0 0.0
    %189 = vmatprep.subr.mxu0 0.0
    %190 = vmatpush1.msra.mxu0 0.0
    %191 = vmatprep.subr.mxu0 0.0
    %192 = vmatpush1.msra.mxu0 0.0
    %193 = vmatprep.subr.mxu0 0.0
    %194 = vmatpush1.msra.mxu0 0.0
    %195 = vmatprep.subr.mxu0 0.0
    %196 = vmatpush1.msra.mxu0 0.0
    %197 = vmatprep.subr.mxu0 0.0
    %198 = vmatpush1.msra.mxu0 0.0
    %199 = vmatprep.subr.mxu0 0.0
    %200 = vmatpush1.msra.mxu0 0.0
    %201 = vmatprep.subr.mxu0 0.0
    %202 = vmatpush1.msra.mxu0 0.0
    %203 = vmatprep.subr.mxu0 0.0
    %204 = vmatpush1.msra.mxu0 0.0
    %205 = vmatprep.subr.mxu0 0.0
    %206 = vmatpush1.msra.mxu0 0.0
    %207 = vmatprep.subr.mxu0 0.0
    %208 = vmatpush1.msra.mxu0 0.0
    %209 = vmatprep.subr.mxu0 0.0
    %210 = vmatpush1.msra.mxu0 0.0
    %211 = vmatprep.subr.mxu0 0.0
    %212 = vmatpush1.msra.mxu0 0.0
    %213 = vmatprep.subr.mxu0 0.0
    %214 = vmatpush1.msra.mxu0 0.0
    %215 = vmatprep.mubr.f32.mxu0 0.0
    %216 = vmatmul.mubr.f32.gmra.mrb[0].mxu0 %v136
    %v217 = vpop.f32.mrb[0].mxu0
    %v218 = vadd.f32 %v117, %v217
    %v219 = vpop.f32.mrb[0].mxu0
    %220 = vmatprep.mubr.f32.mxu0 0.0
    %221 = vmatmul.mubr.f32.gmra.mrb[0].mxu0 %v139
    %v222 = vpop.f32.mrb[0].mxu0
    %v223 = vadd.f32 %v122, %v222
    %v224 = vpop.f32.mrb[0].mxu0
    %225 = vmatprep.mubr.f32.mxu0 0.0
    %226 = vmatmul.mubr.f32.gmra.mrb[0].mxu0 %v142
    %v227 = vpop.f32.mrb[0].mxu0
    %v228 = vadd.f32 %v127, %v227
    %v229 = vpop.f32.mrb[0].mxu0
    %230 = vmatprep.mubr.f32.mxu0 0.0
    %231 = vmatmul.mubr.f32.gmra.mrb[0].mxu0 %v145
    %v232 = vpop.f32.mrb[0].mxu0
    %v233 = vadd.f32 %v132, %v232
    %v234 = vpop.f32.mrb[0].mxu0
    %235 = vdwg.mxu0
    %v236 = vmax.f32 %v218, 0.0
    %v237 = vmax.f32 %v223, 0.0
    %v238 = vmax.f32 %v228, 0.0
    %v239 = vmax.f32 %v233, 0.0
    %v240 = vld [vmem:[#allocation8] sm:$0xff]
    %v241 = vld [vmem:[#allocation8 + $0x8] sm:$0xff]
    %v242 = vld [vmem:[#allocation8 + $0x10] sm:$0xff]
    %v243 = vld [vmem:[#allocation8 + $0x18] sm:$0xff]
    %v244 = vld [vmem:[#allocation10] sm:$0xff]
    %v245 = vld [vmem:[#allocation10 + $0x8] sm:$0xff]
    %v246 = vld [vmem:[#allocation10 + $0x10] sm:$0xff]
    %v247 = vld [vmem:[#allocation10 + $0x18] sm:$0xff]
    %249 = vset.pattern.permute.xlu0 0
    %250 = vperm.xlu0 %249, %v244
    %v251 = vpop.permute.xlu0 %250
    %254 = vset.pattern.permute.xlu0 0
    %255 = vperm.xlu0 %254, %v245
    %v256 = vpop.permute.xlu0 %255
    %259 = vset.pattern.permute.xlu0 0
    %260 = vperm.xlu0 %259, %v246
    %v261 = vpop.permute.xlu0 %260
    %264 = vset.pattern.permute.xlu0 0
    %265 = vperm.xlu0 %264, %v247
    %v266 = vpop.permute.xlu0 %265
    %vm268 = vcmask 261120
    %v270 = vsel %vm268, %v240, 0
    %v273 = vsel %vm268, %v241, 0
    %v276 = vsel %vm268, %v242, 0
    %v279 = vsel %vm268, %v243, 0
    %281 = vmatprep.subr.mxu0 0.0
    %282 = vmatpush1.msra.mxu0 %v236
    %283 = vmatprep.subr.mxu0 0.0
    %284 = vmatpush1.msra.mxu0 %v237
    %285 = vmatprep.subr.mxu0 0.0
    %286 = vmatpush1.msra.mxu0 %v238
    %287 = vmatprep.subr.mxu0 0.0
    %288 = vmatpush1.msra.mxu0 %v239
    %289 = vmatprep.subr.mxu0 0.0
    %290 = vmatpush1.msra.mxu0 0.0
    %291 = vmatprep.subr.mxu0 0.0
    %292 = vmatpush1.msra.mxu0 0.0
    %293 = vmatprep.subr.mxu0 0.0
    %294 = vmatpush1.msra.mxu0 0.0
    %295 = vmatprep.subr.mxu0 0.0
    %296 = vmatpush1.msra.mxu0 0.0
    %297 = vmatprep.subr.mxu0 0.0
    %298 = vmatpush1.msra.mxu0 0.0
    %299 = vmatprep.subr.mxu0 0.0
    %300 = vmatpush1.msra.mxu0 0.0
    %301 = vmatprep.subr.mxu0 0.0
    %302 = vmatpush1.msra.mxu0 0.0
    %303 = vmatprep.subr.mxu0 0.0
    %304 = vmatpush1.msra.mxu0 0.0
    %305 = vmatprep.subr.mxu0 0.0
    %306 = vmatpush1.msra.mxu0 0.0
    %307 = vmatprep.subr.mxu0 0.0
    %308 = vmatpush1.msra.mxu0 0.0
    %309 = vmatprep.subr.mxu0 0.0
    %310 = vmatpush1.msra.mxu0 0.0
    %311 = vmatprep.subr.mxu0 0.0
    %312 = vmatpush1.msra.mxu0 0.0
    %313 = vmatprep.subr.mxu0 0.0
    %314 = vmatpush1.msra.mxu0 0.0
    %315 = vmatprep.subr.mxu0 0.0
    %316 = vmatpush1.msra.mxu0 0.0
    %317 = vmatprep.subr.mxu0 0.0
    %318 = vmatpush1.msra.mxu0 0.0
    %319 = vmatprep.subr.mxu0 0.0
    %320 = vmatpush1.msra.mxu0 0.0
    %321 = vmatprep.subr.mxu0 0.0
    %322 = vmatpush1.msra.mxu0 0.0
    %323 = vmatprep.subr.mxu0 0.0
    %324 = vmatpush1.msra.mxu0 0.0
    %325 = vmatprep.subr.mxu0 0.0
    %326 = vmatpush1.msra.mxu0 0.0
    %327 = vmatprep.subr.mxu0 0.0
    %328 = vmatpush1.msra.mxu0 0.0
    %329 = vmatprep.subr.mxu0 0.0
    %330 = vmatpush1.msra.mxu0 0.0
    %331 = vmatprep.subr.mxu0 0.0
    %332 = vmatpush1.msra.mxu0 0.0
    %333 = vmatprep.subr.mxu0 0.0
    %334 = vmatpush1.msra.mxu0 0.0
    %335 = vmatprep.subr.mxu0 0.0
    %336 = vmatpush1.msra.mxu0 0.0
    %337 = vmatprep.subr.mxu0 0.0
    %338 = vmatpush1.msra.mxu0 0.0
    %339 = vmatprep.subr.mxu0 0.0
    %340 = vmatpush1.msra.mxu0 0.0
    %341 = vmatprep.subr.mxu0 0.0
    %342 = vmatpush1.msra.mxu0 0.0
    %343 = vmatprep.subr.mxu0 0.0
    %344 = vmatpush1.msra.mxu0 0.0
    %345 = vmatprep.mubr.f32.mxu0 0.0
    %346 = vmatmul.mubr.f32.gmra.mrb[0].mxu0 %v270
    %v347 = vpop.f32.mrb[0].mxu0
    %v348 = vadd.f32 %v251, %v347
    %v349 = vpop.f32.mrb[0].mxu0
    %350 = vmatprep.mubr.f32.mxu0 0.0
    %351 = vmatmul.mubr.f32.gmra.mrb[0].mxu0 %v273
    %v352 = vpop.f32.mrb[0].mxu0
    %v353 = vadd.f32 %v256, %v352
    %v354 = vpop.f32.mrb[0].mxu0
    %355 = vmatprep.mubr.f32.mxu0 0.0
    %356 = vmatmul.mubr.f32.gmra.mrb[0].mxu0 %v276
    %v357 = vpop.f32.mrb[0].mxu0
    %v358 = vadd.f32 %v261, %v357
    %v359 = vpop.f32.mrb[0].mxu0
    %360 = vmatprep.mubr.f32.mxu0 0.0
    %361 = vmatmul.mubr.f32.gmra.mrb[0].mxu0 %v279
    %v362 = vpop.f32.mrb[0].mxu0
    %v363 = vadd.f32 %v266, %v362
    %v364 = vpop.f32.mrb[0].mxu0
    %365 = vdwg.mxu0
    %v366 = vrot.slane %v105, 4
    %v368 = vsel %vm147, %v366, %v105
    %v369 = vsub.f32 %v368, %v348
    %v370 = vsub.f32 %v368, %v353
    %v371 = vmul.f32 %v369, %v369
    %v372 = vmul.f32 %v370, %v370
    %v373 = vsub.f32 0.0, %v358
    %v374 = vsub.f32 0.0, %v363
    %v375 = vmul.f32 %v373, 1.442695
    %v376 = vpow.pop %v375
    %v377 = vmul.f32 %v374, 1.442695
    %v378 = vpow.pop %v377
    %v379 = vmul.f32 %v371, %v376
    %v380 = vmul.f32 %v372, %v378
    %v381 = vadd.f32 %v379, %v358
    %v382 = vadd.f32 %v380, %v363
    %v383 = vmul.f32 %v381, -0.5
    %v384 = vmul.f32 %v382, -0.5
    %v385 = vld [vmem:[#allocation11] sm:$0xf]
    %vm386 = vcmask 130048
    %v388 = vsel %vm386, %v385, 0
    %390 = vmatprep.subr.mxu0 0.0
    %391 = vmatpush1.msra.mxu0 %v383
    %392 = vmatprep.subr.mxu0 0.0
    %393 = vmatpush1.msra.mxu0 %v384
    %394 = vmatprep.subr.mxu0 0.0
    %395 = vmatpush1.msra.mxu0 0.0
    %396 = vmatprep.subr.mxu0 0.0
    %397 = vmatpush1.msra.mxu0 0.0
    %398 = vmatprep.subr.mxu0 0.0
    %399 = vmatpush1.msra.mxu0 0.0
    %400 = vmatprep.subr.mxu0 0.0
    %401 = vmatpush1.msra.mxu0 0.0
    %402 = vmatprep.subr.mxu0 0.0
    %403 = vmatpush1.msra.mxu0 0.0
    %404 = vmatprep.subr.mxu0 0.0
    %405 = vmatpush1.msra.mxu0 0.0
    %406 = vmatprep.subr.mxu0 0.0
    %407 = vmatpush1.msra.mxu0 0.0
    %408 = vmatprep.subr.mxu0 0.0
    %409 = vmatpush1.msra.mxu0 0.0
    %410 = vmatprep.subr.mxu0 0.0
    %411 = vmatpush1.msra.mxu0 0.0
    %412 = vmatprep.subr.mxu0 0.0
    %413 = vmatpush1.msra.mxu0 0.0
    %414 = vmatprep.subr.mxu0 0.0
    %415 = vmatpush1.msra.mxu0 0.0
    %416 = vmatprep.subr.mxu0 0.0
    %417 = vmatpush1.msra.mxu0 0.0
    %418 = vmatprep.subr.mxu0 0.0
    %419 = vmatpush1.msra.mxu0 0.0
    %420 = vmatprep.subr.mxu0 0.0
    %421 = vmatpush1.msra.mxu0 0.0
    %422 = vmatprep.subr.mxu0 0.0
    %423 = vmatpush1.msra.mxu0 0.0
    %424 = vmatprep.subr.mxu0 0.0
    %425 = vmatpush1.msra.mxu0 0.0
    %426 = vmatprep.subr.mxu0 0.0
    %427 = vmatpush1.msra.mxu0 0.0
    %428 = vmatprep.subr.mxu0 0.0
    %429 = vmatpush1.msra.mxu0 0.0
    %430 = vmatprep.subr.mxu0 0.0
    %431 = vmatpush1.msra.mxu0 0.0
    %432 = vmatprep.subr.mxu0 0.0
    %433 = vmatpush1.msra.mxu0 0.0
    %434 = vmatprep.subr.mxu0 0.0
    %435 = vmatpush1.msra.mxu0 0.0
    %436 = vmatprep.subr.mxu0 0.0
    %437 = vmatpush1.msra.mxu0 0.0
    %438 = vmatprep.subr.mxu0 0.0
    %439 = vmatpush1.msra.mxu0 0.0
    %440 = vmatprep.subr.mxu0 0.0
    %441 = vmatpush1.msra.mxu0 0.0
    %442 = vmatprep.subr.mxu0 0.0
    %443 = vmatpush1.msra.mxu0 0.0
    %444 = vmatprep.subr.mxu0 0.0
    %445 = vmatpush1.msra.mxu0 0.0
    %446 = vmatprep.subr.mxu0 0.0
    %447 = vmatpush1.msra.mxu0 0.0
    %448 = vmatprep.subr.mxu0 0.0
    %449 = vmatpush1.msra.mxu0 0.0
    %450 = vmatprep.subr.mxu0 0.0
    %451 = vmatpush1.msra.mxu0 0.0
    %452 = vmatprep.subr.mxu0 0.0
    %453 = vmatpush1.msra.mxu0 0.0
    %454 = vmatprep.mubr.f32.mxu0 0.0
    %455 = vmatmul.mubr.f32.gmra.mrb[0].mxu0 %v388
    %v456 = vpop.f32.mrb[0].mxu0
    %v457 = vadd.f32 0.0, %v456
    %v458 = vpop.f32.mrb[0].mxu0
    %459 = vdwg.mxu0
    %v460 = vsub.f32 %v457, 3.675754
    %vm461 = vcmask 125952
    %462 = vst.msk [vmem:[#allocation13] sm:$0xf] %vm461, %v460
    // Predicated region
    $region50: #{cartpole_hmmz_forward.2} parent=1 // pred_check
      _
    $region51: #{cartpole_hmmz_forward.2} parent=1 // pred_check_branch
      %464 = sbr.rel (0) target = $region53
    $region52: #{cartpole_hmmz_forward.2} parent=1 // pred_region
      %s466 = ssub.s32 64, 64
      %467 = vsyncadd [#allocation4], %s466
      %s469 = sshll.u32 [#allocation13], 4
      %s470 = int_to_ptr.vmem [resolvable:$true] %s469
      %472 = dma.vmem_to_hbm [thread:$0]  %s470, 64, %s6, [#allocation4]
    $region53: #{cartpole_hmmz_forward.2} parent=1 // pred_fallthru
      _
    // Predicated region
    $region54: #{cartpole_hmmz_forward.2} parent=1 // pred_check
      _
    $region55: #{cartpole_hmmz_forward.2} parent=1 // pred_check_branch
      %474 = sbr.rel (0) target = $region57
    $region56: #{cartpole_hmmz_forward.2} parent=1 // pred_region
      %475 = dma.done [#allocation4], 64
    $region57: #{cartpole_hmmz_forward.2} parent=1 // pred_fallthru
      _
    %476 = vsyncpa [#allocation3], 1
    %477 = vsyncpa [#allocation6], 1
    %478 = vsyncpa [#allocation9], 1
    %479 = vsyncpa [#allocation12], 1
    %480 = vsyncpa [#allocation4], 1

// kernel: cartpole_hmmz_forward.3
$region0: #{cartpole_hmmz_forward.3}
  #allocation0 [shape = 'u32[]', space=smem, size = 0x4, offset = 0x4, fixed_abs, tag = 'smem constant byte address 0x4 - core index']
  #allocation1 [shape = 'u32[144,128]{1,0:T(1,128)}', space=vmem, size = 0x12000, scoped, tag = 'internal scratch']
  #allocation2 [shape = 's32[8,4,2]{2,1,0:T(4,128)}', space=vmem, size = 0x4000, scoped, tag = 'scratch operand']
  %s0 = inlined_call_operand.hbm [shape: f32[8,4,2], index: 0, kind: input, shape index: {}]
  %s1 = inlined_call_operand.hbm [shape: f32[4,4], index: 1, kind: input, shape index: {}]
  %s2 = inlined_call_operand.hbm [shape: f32[4,4], index: 2, kind: input, shape index: {}]
  %s3 = inlined_call_operand.hbm [shape: f32[4], index: 3, kind: input, shape index: {}]
  %s4 = inlined_call_operand.hbm [shape: f32[1,2], index: 4, kind: output, shape index: {0}]
  %s5 = inlined_call_operand.hbm [shape: s32[8,1,2], index: 5, kind: output, shape index: {1}]
  %6 = xla_tuple %s4, %s5
  %s7 = sld [smem:[#allocation0]]
  $region50: #{cartpole_hmmz_forward.3} parent=0
    _
  %s9 = ssub.s32 1, %s7
  %s10 = scalar_select 0, %s9, %s7
  $region1: #{cartpole_hmmz_forward.3} parent=0
    #allocation3 [shape = 'u8[16384]{0}', space=vmem, size = 0x4000, scoped, tag = 'input window, operand 0, single buffered']
    #allocation4 [shape = 's32[1]{0}', space=sflag, size = 0x4, scoped, tag = 'scoped memory for cartpole_hmmz_forward.3']
    #allocation5 [shape = 's32[1]{0}', space=sflag, size = 0x4, scoped, tag = 'scoped memory for cartpole_hmmz_forward.3']
    #allocation6 [shape = 's32[1]{0}', space=sflag, size = 0x4, scoped, tag = 'scoped memory for cartpole_hmmz_forward.3']
    #allocation7 [shape = 'u8[2048]{0}', space=smem, size = 0x800, scoped, tag = 'input window, operand 1, single buffered']
    #allocation8 [shape = 'u8[2048]{0}', space=smem, size = 0x800, scoped, tag = 'input window, operand 2, single buffered']
    #allocation9 [shape = 's32[1]{0}', space=sflag, size = 0x4, scoped, tag = 'scoped memory for cartpole_hmmz_forward.3']
    #allocation10 [shape = 'u8[512]{0}', space=smem, size = 0x200, scoped, tag = 'input window, operand 3, single buffered']
    #allocation11 [shape = 'u8[512]{0}', space=vmem, size = 0x400, scoped, tag = 'output window, operand 0, single buffered']
    #allocation12 [shape = 'u8[4096]{0}', space=vmem, size = 0x1000, scoped, tag = 'output window, operand 1, single buffered']
    #allocation13 [shape = 's32[1]{0}', space=sflag, size = 0x4, scoped, tag = 'scoped memory for cartpole_hmmz_forward.3']
    %11 = vsyncpa [#allocation4], 0
    %12 = vsyncpa [#allocation6], 0
    %13 = vsyncpa [#allocation9], 0
    %14 = vsyncpa [#allocation5], 0
    %15 = vsyncpa [#allocation13], 0
    // Predicated region
    $region2: #{cartpole_hmmz_forward.3} parent=1 // pred_check
      _
    $region3: #{cartpole_hmmz_forward.3} parent=1 // pred_check_branch
      %17 = sbr.rel (0) target = $region5
    $region4: #{cartpole_hmmz_forward.3} parent=1 // pred_region
      %s19 = ssub.s32 512, 512
      %20 = vsyncadd [#allocation4], %s19
      %s21 = sshll.u32 [#allocation3], 4
      %s22 = int_to_ptr.vmem [resolvable:$true] %s21
      %27 = dma.hbm_to_vmem [thread:$0]  %s0, 512, %s22, [#allocation4], 64, 64, 4
    $region5: #{cartpole_hmmz_forward.3} parent=1 // pred_fallthru
      _
    // Predicated region
    $region6: #{cartpole_hmmz_forward.3} parent=1 // pred_check
      _
    $region7: #{cartpole_hmmz_forward.3} parent=1 // pred_check_branch
      %29 = sbr.rel (0) target = $region9
    $region8: #{cartpole_hmmz_forward.3} parent=1 // pred_region
      %s31 = ssub.s32 64, 64
      %32 = vsyncadd [#allocation6], %s31
      %35 = dma.hbm_to_smem %s1, 64, [#allocation7], [#allocation6]
    $region9: #{cartpole_hmmz_forward.3} parent=1 // pred_fallthru
      _
    // Predicated region
    $region10: #{cartpole_hmmz_forward.3} parent=1 // pred_check
      _
    $region11: #{cartpole_hmmz_forward.3} parent=1 // pred_check_branch
      %37 = sbr.rel (0) target = $region13
    $region12: #{cartpole_hmmz_forward.3} parent=1 // pred_region
      %s39 = ssub.s32 64, 64
      %40 = vsyncadd [#allocation9], %s39
      %43 = dma.hbm_to_smem %s2, 64, [#allocation8], [#allocation9]
    $region13: #{cartpole_hmmz_forward.3} parent=1 // pred_fallthru
      _
    // Predicated region
    $region14: #{cartpole_hmmz_forward.3} parent=1 // pred_check
      _
    $region15: #{cartpole_hmmz_forward.3} parent=1 // pred_check_branch
      %45 = sbr.rel (0) target = $region17
    $region16: #{cartpole_hmmz_forward.3} parent=1 // pred_region
      %s47 = ssub.s32 16, 16
      %48 = vsyncadd [#allocation9], %s47
      %51 = dma.hbm_to_smem %s3, 16, [#allocation10], [#allocation9]
    $region17: #{cartpole_hmmz_forward.3} parent=1 // pred_fallthru
      _
    // Predicated region
    $region18: #{cartpole_hmmz_forward.3} parent=1 // pred_check
      _
    $region19: #{cartpole_hmmz_forward.3} parent=1 // pred_check_branch
      %53 = sbr.rel (0) target = $region21
    $region20: #{cartpole_hmmz_forward.3} parent=1 // pred_region
      %54 = dma.done [#allocation4], 512
    $region21: #{cartpole_hmmz_forward.3} parent=1 // pred_fallthru
      _
    // Predicated region
    $region22: #{cartpole_hmmz_forward.3} parent=1 // pred_check
      _
    $region23: #{cartpole_hmmz_forward.3} parent=1 // pred_check_branch
      %56 = sbr.rel (0) target = $region25
    $region24: #{cartpole_hmmz_forward.3} parent=1 // pred_region
      %57 = dma.done [#allocation6], 64
    $region25: #{cartpole_hmmz_forward.3} parent=1 // pred_fallthru
      _
    // Predicated region
    $region26: #{cartpole_hmmz_forward.3} parent=1 // pred_check
      _
    $region27: #{cartpole_hmmz_forward.3} parent=1 // pred_check_branch
      %59 = sbr.rel (0) target = $region29
    $region28: #{cartpole_hmmz_forward.3} parent=1 // pred_region
      %60 = dma.done [#allocation9], 64
    $region29: #{cartpole_hmmz_forward.3} parent=1 // pred_fallthru
      _
    // Predicated region
    $region30: #{cartpole_hmmz_forward.3} parent=1 // pred_check
      _
    $region31: #{cartpole_hmmz_forward.3} parent=1 // pred_check_branch
      %62 = sbr.rel (0) target = $region33
    $region32: #{cartpole_hmmz_forward.3} parent=1 // pred_region
      %63 = dma.done [#allocation9], 16
    $region33: #{cartpole_hmmz_forward.3} parent=1 // pred_fallthru
      _
    %64 = sfence
    %s65 = sld [smem:[#allocation7]]
    %s66 = sld [smem:[#allocation7 + $0x1]]
    %s67 = sld [smem:[#allocation7 + $0x2]]
    %s68 = sld [smem:[#allocation7 + $0x3]]
    %s69 = sld [smem:[#allocation7 + $0x80]]
    %s70 = sld [smem:[#allocation7 + $0x81]]
    %s71 = sld [smem:[#allocation7 + $0x82]]
    %s72 = sld [smem:[#allocation7 + $0x83]]
    %s73 = sld [smem:[#allocation7 + $0x100]]
    %s74 = sld [smem:[#allocation7 + $0x101]]
    %s75 = sld [smem:[#allocation7 + $0x102]]
    %s76 = sld [smem:[#allocation7 + $0x103]]
    %s77 = sld [smem:[#allocation7 + $0x180]]
    %s78 = sld [smem:[#allocation7 + $0x181]]
    %s79 = sld [smem:[#allocation7 + $0x182]]
    %s80 = sld [smem:[#allocation7 + $0x183]]
    %s81 = sld [smem:[#allocation8]]
    %s82 = sld [smem:[#allocation8 + $0x1]]
    %s83 = sld [smem:[#allocation8 + $0x2]]
    %s84 = sld [smem:[#allocation8 + $0x3]]
    %s85 = sld [smem:[#allocation8 + $0x80]]
    %s86 = sld [smem:[#allocation8 + $0x81]]
    %s87 = sld [smem:[#allocation8 + $0x82]]
    %s88 = sld [smem:[#allocation8 + $0x83]]
    %s89 = sld [smem:[#allocation8 + $0x100]]
    %s90 = sld [smem:[#allocation8 + $0x101]]
    %s91 = sld [smem:[#allocation8 + $0x102]]
    %s92 = sld [smem:[#allocation8 + $0x103]]
    %s93 = sld [smem:[#allocation8 + $0x180]]
    %s94 = sld [smem:[#allocation8 + $0x181]]
    %s95 = sld [smem:[#allocation8 + $0x182]]
    %s96 = sld [smem:[#allocation8 + $0x183]]
    %s97 = sld [smem:[#allocation10]]
    %s98 = sld [smem:[#allocation10 + $0x1]]
    %s99 = sld [smem:[#allocation10 + $0x2]]
    %s100 = sld [smem:[#allocation10 + $0x3]]
    %v101 = vld [vmem:[#allocation3] sm:$0xf]
    %v102 = vstv %s97
    %v103 = vadd.f32 %v101, %v102
    %v104 = vstv %s98
    %v105 = vadd.f32 %v101, %v104
    %v106 = vstv %s99
    %v107 = vadd.f32 %v101, %v106
    %v108 = vstv %s100
    %v109 = vadd.f32 %v101, %v108
    %v111 = vrot.slane %v105, 1
    %v113 = vmax.f32 %v103, %v111
    %v115 = vrot.slane %v107, 2
    %v117 = vmax.f32 %v113, %v115
    %v119 = vrot.slane %v109, 3
    %v121 = vmax.f32 %v117, %v119
    %v122 = vsub.f32 %v103, %v121
    %v123 = vmul.f32 %v122, 1.442695
    %v124 = vpow.pop %v123
    %v126 = vrot.slane %v121, 7
    %v128 = vsub.f32 %v105, %v126
    %v129 = vmul.f32 %v128, 1.442695
    %v130 = vpow.pop %v129
    %v131 = vrot.slane %v121, 6
    %v133 = vsub.f32 %v107, %v131
    %v134 = vmul.f32 %v133, 1.442695
    %v135 = vpow.pop %v134
    %v136 = vrot.slane %v121, 5
    %v138 = vsub.f32 %v109, %v136
    %v139 = vmul.f32 %v138, 1.442695
    %v140 = vpow.pop %v139
    %v142 = vrot.slane %v130, 1
    %v144 = vadd.f32 %v124, %v142
    %v146 = vrot.slane %v135, 2
    %v148 = vadd.f32 %v144, %v146
    %v150 = vrot.slane %v140, 3
    %v152 = vadd.f32 %v148, %v150
    %v153 = vrcp.pop %v152
    %v154 = vmul.f32 %v152, %v153
    %v155 = vsub.f32 2.0, %v154
    %v156 = vmul.f32 %v153, %v155
    %v157 = vmul.f32 %v124, %v156
    %v159 = vrot.slane %v156, 7
    %v161 = vmul.f32 %v130, %v159
    %v162 = vrot.slane %v156, 6
    %v164 = vmul.f32 %v135, %v162
    %v165 = vrot.slane %v156, 5
    %v167 = vmul.f32 %v140, %v165
    %v168 = vlog2.pop %v152
    %v169 = vmul.f32 %v168, 0.6931472
    %v170 = vadd.f32 %v121, %v169
    %s171 = scalar_lea.vmem [#allocation3], 4
    %v172 = vld [vmem:[%s171] sm:$0xf]
    %v173 = vstv %s81
    %v174 = vmul.f32 %v157, %v173
    %v175 = vstv %s85
    %v176 = vmul.f32 %v161, %v175
    %v178 = vrot.slane %v176, 1
    %v180 = vadd.f32 %v174, %v178
    %v181 = vstv %s89
    %v182 = vmul.f32 %v164, %v181
    %v184 = vrot.slane %v182, 2
    %v186 = vadd.f32 %v180, %v184
    %v187 = vstv %s93
    %v188 = vmul.f32 %v167, %v187
    %v190 = vrot.slane %v188, 3
    %v192 = vadd.f32 %v186, %v190
    %v193 = vstv %s82
    %v194 = vmul.f32 %v157, %v193
    %v195 = vstv %s86
    %v196 = vmul.f32 %v161, %v195
    %v198 = vrot.slane %v196, 1
    %v200 = vadd.f32 %v194, %v198
    %v201 = vstv %s90
    %v202 = vmul.f32 %v164, %v201
    %v204 = vrot.slane %v202, 2
    %v206 = vadd.f32 %v200, %v204
    %v207 = vstv %s94
    %v208 = vmul.f32 %v167, %v207
    %v210 = vrot.slane %v208, 3
    %v212 = vadd.f32 %v206, %v210
    %v213 = vstv %s83
    %v214 = vmul.f32 %v157, %v213
    %v215 = vstv %s87
    %v216 = vmul.f32 %v161, %v215
    %v218 = vrot.slane %v216, 1
    %v220 = vadd.f32 %v214, %v218
    %v221 = vstv %s91
    %v222 = vmul.f32 %v164, %v221
    %v224 = vrot.slane %v222, 2
    %v226 = vadd.f32 %v220, %v224
    %v227 = vstv %s95
    %v228 = vmul.f32 %v167, %v227
    %v230 = vrot.slane %v228, 3
    %v232 = vadd.f32 %v226, %v230
    %v233 = vstv %s84
    %v234 = vmul.f32 %v157, %v233
    %v235 = vstv %s88
    %v236 = vmul.f32 %v161, %v235
    %v238 = vrot.slane %v236, 1
    %v240 = vadd.f32 %v234, %v238
    %v241 = vstv %s92
    %v242 = vmul.f32 %v164, %v241
    %v244 = vrot.slane %v242, 2
    %v246 = vadd.f32 %v240, %v244
    %v247 = vstv %s96
    %v248 = vmul.f32 %v167, %v247
    %v250 = vrot.slane %v248, 3
    %v252 = vadd.f32 %v246, %v250
    %v254 = vrot.slane %v172, 1
    %v256 = vmax.f32 %v172, %v254
    %v257 = vrot.slane %v172, 2
    %v259 = vmax.f32 %v256, %v257
    %v260 = vrot.slane %v172, 3
    %v262 = vmax.f32 %v259, %v260
    %v263 = vsub.f32 %v172, %v262
    %v264 = vmul.f32 %v263, 1.442695
    %v265 = vpow.pop %v264
    %v266 = vmul.f32 %v265, %v192
    %v268 = vrot.slane %v262, 7
    %v270 = vsub.f32 %v172, %v268
    %v271 = vmul.f32 %v270, 1.442695
    %v272 = vpow.pop %v271
    %v274 = vrot.slane %v212, 7
    %v276 = vmul.f32 %v272, %v274
    %v277 = vrot.slane %v262, 6
    %v279 = vsub.f32 %v172, %v277
    %v280 = vmul.f32 %v279, 1.442695
    %v281 = vpow.pop %v280
    %v283 = vrot.slane %v232, 6
    %v285 = vmul.f32 %v281, %v283
    %v286 = vrot.slane %v262, 5
    %v288 = vsub.f32 %v172, %v286
    %v289 = vmul.f32 %v288, 1.442695
    %v290 = vpow.pop %v289
    %v292 = vrot.slane %v252, 5
    %v294 = vmul.f32 %v290, %v292
    %v296 = vrot.slane %v276, 1
    %v298 = vadd.f32 %v266, %v296
    %v300 = vrot.slane %v285, 2
    %v302 = vadd.f32 %v298, %v300
    %v304 = vrot.slane %v294, 3
    %v306 = vadd.f32 %v302, %v304
    %v307 = vrcp.pop %v306
    %v308 = vmul.f32 %v306, %v307
    %v309 = vsub.f32 2.0, %v308
    %v310 = vmul.f32 %v307, %v309
    %v311 = vmul.f32 %v266, %v310
    %v313 = vrot.slane %v310, 7
    %v315 = vmul.f32 %v276, %v313
    %v316 = vrot.slane %v310, 6
    %v318 = vmul.f32 %v285, %v316
    %v319 = vrot.slane %v310, 5
    %v321 = vmul.f32 %v294, %v319
    %v322 = vadd.f32 %v170, %v262
    %v323 = vlog2.pop %v306
    %v324 = vmul.f32 %v323, 0.6931472
    %v325 = vadd.f32 %v322, %v324
    %v326 = vstv %s65
    %v327 = vadd.f32 %v122, %v326
    %v328 = vstv %s69
    %v329 = vadd.f32 %v128, %v328
    %v330 = vstv %s73
    %v331 = vadd.f32 %v133, %v330
    %v332 = vstv %s77
    %v333 = vadd.f32 %v138, %v332
    %v335 = vrot.slane %v327, 7
    %vm337 = vcmp.gt.f32.partialorder %v329, %v335
    %v338 = vsel %vm337, %v329, %v335
    %v339 = vsel %vm337, 1, 0
    %v341 = vrot.slane %v338, 7
    %vm343 = vcmp.gt.f32.partialorder %v331, %v341
    %v344 = vsel %vm343, %v331, %v341
    %v345 = vrot.slane %v339, 7
    %v346 = vsel %vm343, 2, %v345
    %v348 = vrot.slane %v344, 7
    %vm350 = vcmp.gt.f32.partialorder %v333, %v348
    %v351 = vsel %vm350, %v333, %v348
    %v352 = vrot.slane %v346, 7
    %v353 = vsel %vm350, 3, %v352
    %v354 = vrot.slane %v172, 5
    %v356 = vadd.f32 %v351, %v354
    %v357 = vstv %s66
    %v358 = vadd.f32 %v122, %v357
    %v359 = vstv %s70
    %v360 = vadd.f32 %v128, %v359
    %v361 = vstv %s74
    %v362 = vadd.f32 %v133, %v361
    %v363 = vstv %s78
    %v364 = vadd.f32 %v138, %v363
    %v366 = vrot.slane %v358, 7
    %vm368 = vcmp.gt.f32.partialorder %v360, %v366
    %v369 = vsel %vm368, %v360, %v366
    %v370 = vsel %vm368, 1, 0
    %v372 = vrot.slane %v369, 7
    %vm374 = vcmp.gt.f32.partialorder %v362, %v372
    %v375 = vsel %vm374, %v362, %v372
    %v376 = vrot.slane %v370, 7
    %v377 = vsel %vm374, 2, %v376
    %v379 = vrot.slane %v375, 7
    %vm381 = vcmp.gt.f32.partialorder %v364, %v379
    %v382 = vsel %vm381, %v364, %v379
    %v383 = vrot.slane %v377, 7
    %v384 = vsel %vm381, 3, %v383
    %v385 = vrot.slane %v172, 6
    %v387 = vadd.f32 %v382, %v385
    %v388 = vstv %s67
    %v389 = vadd.f32 %v122, %v388
    %v390 = vstv %s71
    %v391 = vadd.f32 %v128, %v390
    %v392 = vstv %s75
    %v393 = vadd.f32 %v133, %v392
    %v394 = vstv %s79
    %v395 = vadd.f32 %v138, %v394
    %v397 = vrot.slane %v389, 7
    %vm399 = vcmp.gt.f32.partialorder %v391, %v397
    %v400 = vsel %vm399, %v391, %v397
    %v401 = vsel %vm399, 1, 0
    %v403 = vrot.slane %v400, 7
    %vm405 = vcmp.gt.f32.partialorder %v393, %v403
    %v406 = vsel %vm405, %v393, %v403
    %v407 = vrot.slane %v401, 7
    %v408 = vsel %vm405, 2, %v407
    %v410 = vrot.slane %v406, 7
    %vm412 = vcmp.gt.f32.partialorder %v395, %v410
    %v413 = vsel %vm412, %v395, %v410
    %v414 = vrot.slane %v408, 7
    %v415 = vsel %vm412, 3, %v414
    %v416 = vrot.slane %v172, 7
    %v418 = vadd.f32 %v413, %v416
    %v419 = vstv %s68
    %v420 = vadd.f32 %v122, %v419
    %v421 = vstv %s72
    %v422 = vadd.f32 %v128, %v421
    %v423 = vstv %s76
    %v424 = vadd.f32 %v133, %v423
    %v425 = vstv %s80
    %v426 = vadd.f32 %v138, %v425
    %v428 = vrot.slane %v420, 7
    %vm430 = vcmp.gt.f32.partialorder %v422, %v428
    %v431 = vsel %vm430, %v422, %v428
    %v432 = vsel %vm430, 1, 0
    %v434 = vrot.slane %v431, 7
    %vm436 = vcmp.gt.f32.partialorder %v424, %v434
    %v437 = vsel %vm436, %v424, %v434
    %v438 = vrot.slane %v432, 7
    %v439 = vsel %vm436, 2, %v438
    %v441 = vrot.slane %v437, 7
    %vm443 = vcmp.gt.f32.partialorder %v426, %v441
    %v444 = vsel %vm443, %v426, %v441
    %v445 = vrot.slane %v439, 7
    %v446 = vsel %vm443, 3, %v445
    %v447 = vadd.f32 %v444, %v172
    %v448 = vrot.slane %v353, 3
    %v449 = vrot.slane %v384, 2
    %v450 = vrot.slane %v415, 1
    %vm451 = vcmask 1040384
    %v452 = vsel %vm451, %v448, %v449
    %vm453 = vcmask 1041408
    %v454 = vsel %vm453, %v452, %v450
    %vm455 = vcmask 1042432
    %v456 = vsel %vm455, %v454, %v446
    %s457 = scalar_lea.vmem [#allocation2], 4
    %vm458 = vcmask 11264
    %459 = vst.msk [vmem:[%s457] sm:$0xf] %vm458, %v456
    %v460 = vmax.f32 %v356, %v387
    %v461 = vmax.f32 %v460, %v418
    %v462 = vmax.f32 %v461, %v447
    %v463 = vsub.f32 %v356, %v462
    %v464 = vsub.f32 %v387, %v462
    %v465 = vsub.f32 %v418, %v462
    %v466 = vsub.f32 %v447, %v462
    %s467 = scalar_lea.vmem [#allocation3], 8
    %v468 = vld [vmem:[%s467] sm:$0xf]
    %v469 = vmul.f32 %v311, %v173
    %v470 = vmul.f32 %v315, %v175
    %v472 = vrot.slane %v470, 1
    %v474 = vadd.f32 %v469, %v472
    %v475 = vmul.f32 %v318, %v181
    %v477 = vrot.slane %v475, 2
    %v479 = vadd.f32 %v474, %v477
    %v480 = vmul.f32 %v321, %v187
    %v482 = vrot.slane %v480, 3
    %v484 = vadd.f32 %v479, %v482
    %v485 = vmul.f32 %v311, %v193
    %v486 = vmul.f32 %v315, %v195
    %v488 = vrot.slane %v486, 1
    %v490 = vadd.f32 %v485, %v488
    %v491 = vmul.f32 %v318, %v201
    %v493 = vrot.slane %v491, 2
    %v495 = vadd.f32 %v490, %v493
    %v496 = vmul.f32 %v321, %v207
    %v498 = vrot.slane %v496, 3
    %v500 = vadd.f32 %v495, %v498
    %v501 = vmul.f32 %v311, %v213
    %v502 = vmul.f32 %v315, %v215
    %v504 = vrot.slane %v502, 1
    %v506 = vadd.f32 %v501, %v504
    %v507 = vmul.f32 %v318, %v221
    %v509 = vrot.slane %v507, 2
    %v511 = vadd.f32 %v506, %v509
    %v512 = vmul.f32 %v321, %v227
    %v514 = vrot.slane %v512, 3
    %v516 = vadd.f32 %v511, %v514
    %v517 = vmul.f32 %v311, %v233
    %v518 = vmul.f32 %v315, %v235
    %v520 = vrot.slane %v518, 1
    %v522 = vadd.f32 %v517, %v520
    %v523 = vmul.f32 %v318, %v241
    %v525 = vrot.slane %v523, 2
    %v527 = vadd.f32 %v522, %v525
    %v528 = vmul.f32 %v321, %v247
    %v530 = vrot.slane %v528, 3
    %v532 = vadd.f32 %v527, %v530
    %v534 = vrot.slane %v468, 1
    %v536 = vmax.f32 %v468, %v534
    %v537 = vrot.slane %v468, 2
    %v539 = vmax.f32 %v536, %v537
    %v540 = vrot.slane %v468, 3
    %v542 = vmax.f32 %v539, %v540
    %v543 = vsub.f32 %v468, %v542
    %v544 = vmul.f32 %v543, 1.442695
    %v545 = vpow.pop %v544
    %v546 = vmul.f32 %v545, %v484
    %v548 = vrot.slane %v542, 7
    %v550 = vsub.f32 %v468, %v548
    %v551 = vmul.f32 %v550, 1.442695
    %v552 = vpow.pop %v551
    %v554 = vrot.slane %v500, 7
    %v556 = vmul.f32 %v552, %v554
    %v557 = vrot.slane %v542, 6
    %v559 = vsub.f32 %v468, %v557
    %v560 = vmul.f32 %v559, 1.442695
    %v561 = vpow.pop %v560
    %v563 = vrot.slane %v516, 6
    %v565 = vmul.f32 %v561, %v563
    %v566 = vrot.slane %v542, 5
    %v568 = vsub.f32 %v468, %v566
    %v569 = vmul.f32 %v568, 1.442695
    %v570 = vpow.pop %v569
    %v572 = vrot.slane %v532, 5
    %v574 = vmul.f32 %v570, %v572
    %v576 = vrot.slane %v556, 1
    %v578 = vadd.f32 %v546, %v576
    %v580 = vrot.slane %v565, 2
    %v582 = vadd.f32 %v578, %v580
    %v584 = vrot.slane %v574, 3
    %v586 = vadd.f32 %v582, %v584
    %v587 = vrcp.pop %v586
    %v588 = vmul.f32 %v586, %v587
    %v589 = vsub.f32 2.0, %v588
    %v590 = vmul.f32 %v587, %v589
    %v591 = vmul.f32 %v546, %v590
    %v593 = vrot.slane %v590, 7
    %v595 = vmul.f32 %v556, %v593
    %v596 = vrot.slane %v590, 6
    %v598 = vmul.f32 %v565, %v596
    %v599 = vrot.slane %v590, 5
    %v601 = vmul.f32 %v574, %v599
    %v602 = vadd.f32 %v325, %v542
    %v603 = vlog2.pop %v586
    %v604 = vmul.f32 %v603, 0.6931472
    %v605 = vadd.f32 %v602, %v604
    %v606 = vadd.f32 %v463, %v326
    %v607 = vadd.f32 %v464, %v328
    %v608 = vadd.f32 %v465, %v330
    %v609 = vadd.f32 %v466, %v332
    %vm610 = vcmp.gt.f32.partialorder %v607, %v606
    %v611 = vsel %vm610, %v607, %v606
    %v612 = vsel %vm610, 1, 0
    %vm613 = vcmp.gt.f32.partialorder %v608, %v611
    %v614 = vsel %vm613, %v608, %v611
    %v615 = vsel %vm613, 2, %v612
    %vm616 = vcmp.gt.f32.partialorder %v609, %v614
    %v617 = vsel %vm616, %v609, %v614
    %v618 = vsel %vm616, 3, %v615
    %v619 = vrot.slane %v468, 5
    %v621 = vadd.f32 %v617, %v619
    %v622 = vadd.f32 %v463, %v357
    %v623 = vadd.f32 %v464, %v359
    %v624 = vadd.f32 %v465, %v361
    %v625 = vadd.f32 %v466, %v363
    %vm626 = vcmp.gt.f32.partialorder %v623, %v622
    %v627 = vsel %vm626, %v623, %v622
    %v628 = vsel %vm626, 1, 0
    %vm629 = vcmp.gt.f32.partialorder %v624, %v627
    %v630 = vsel %vm629, %v624, %v627
    %v631 = vsel %vm629, 2, %v628
    %vm632 = vcmp.gt.f32.partialorder %v625, %v630
    %v633 = vsel %vm632, %v625, %v630
    %v634 = vsel %vm632, 3, %v631
    %v635 = vrot.slane %v468, 6
    %v637 = vadd.f32 %v633, %v635
    %v638 = vadd.f32 %v463, %v388
    %v639 = vadd.f32 %v464, %v390
    %v640 = vadd.f32 %v465, %v392
    %v641 = vadd.f32 %v466, %v394
    %vm642 = vcmp.gt.f32.partialorder %v639, %v638
    %v643 = vsel %vm642, %v639, %v638
    %v644 = vsel %vm642, 1, 0
    %vm645 = vcmp.gt.f32.partialorder %v640, %v643
    %v646 = vsel %vm645, %v640, %v643
    %v647 = vsel %vm645, 2, %v644
    %vm648 = vcmp.gt.f32.partialorder %v641, %v646
    %v649 = vsel %vm648, %v641, %v646
    %v650 = vsel %vm648, 3, %v647
    %v651 = vrot.slane %v468, 7
    %v653 = vadd.f32 %v649, %v651
    %v654 = vadd.f32 %v463, %v419
    %v655 = vadd.f32 %v464, %v421
    %v656 = vadd.f32 %v465, %v423
    %v657 = vadd.f32 %v466, %v425
    %vm658 = vcmp.gt.f32.partialorder %v655, %v654
    %v659 = vsel %vm658, %v655, %v654
    %v660 = vsel %vm658, 1, 0
    %vm661 = vcmp.gt.f32.partialorder %v656, %v659
    %v662 = vsel %vm661, %v656, %v659
    %v663 = vsel %vm661, 2, %v660
    %vm664 = vcmp.gt.f32.partialorder %v657, %v662
    %v665 = vsel %vm664, %v657, %v662
    %v666 = vsel %vm664, 3, %v663
    %v667 = vadd.f32 %v665, %v468
    %v668 = vrot.slane %v618, 3
    %v669 = vrot.slane %v634, 2
    %v670 = vrot.slane %v650, 1
    %v671 = vsel %vm451, %v668, %v669
    %v672 = vsel %vm453, %v671, %v670
    %v673 = vsel %vm455, %v672, %v666
    %s674 = scalar_lea.vmem [#allocation2], 8
    %675 = vst.msk [vmem:[%s674] sm:$0xf] %vm458, %v673
    %v676 = vmax.f32 %v621, %v637
    %v677 = vmax.f32 %v676, %v653
    %v678 = vmax.f32 %v677, %v667
    %v679 = vsub.f32 %v621, %v678
    %v680 = vsub.f32 %v637, %v678
    %v681 = vsub.f32 %v653, %v678
    %v682 = vsub.f32 %v667, %v678
    %s683 = scalar_lea.vmem [#allocation3], 12
    %v684 = vld [vmem:[%s683] sm:$0xf]
    %v685 = vmul.f32 %v591, %v173
    %v686 = vmul.f32 %v595, %v175
    %v688 = vrot.slane %v686, 1
    %v690 = vadd.f32 %v685, %v688
    %v691 = vmul.f32 %v598, %v181
    %v693 = vrot.slane %v691, 2
    %v695 = vadd.f32 %v690, %v693
    %v696 = vmul.f32 %v601, %v187
    %v698 = vrot.slane %v696, 3
    %v700 = vadd.f32 %v695, %v698
    %v701 = vmul.f32 %v591, %v193
    %v702 = vmul.f32 %v595, %v195
    %v704 = vrot.slane %v702, 1
    %v706 = vadd.f32 %v701, %v704
    %v707 = vmul.f32 %v598, %v201
    %v709 = vrot.slane %v707, 2
    %v711 = vadd.f32 %v706, %v709
    %v712 = vmul.f32 %v601, %v207
    %v714 = vrot.slane %v712, 3
    %v716 = vadd.f32 %v711, %v714
    %v717 = vmul.f32 %v591, %v213
    %v718 = vmul.f32 %v595, %v215
    %v720 = vrot.slane %v718, 1
    %v722 = vadd.f32 %v717, %v720
    %v723 = vmul.f32 %v598, %v221
    %v725 = vrot.slane %v723, 2
    %v727 = vadd.f32 %v722, %v725
    %v728 = vmul.f32 %v601, %v227
    %v730 = vrot.slane %v728, 3
    %v732 = vadd.f32 %v727, %v730
    %v733 = vmul.f32 %v591, %v233
    %v734 = vmul.f32 %v595, %v235
    %v736 = vrot.slane %v734, 1
    %v738 = vadd.f32 %v733, %v736
    %v739 = vmul.f32 %v598, %v241
    %v741 = vrot.slane %v739, 2
    %v743 = vadd.f32 %v738, %v741
    %v744 = vmul.f32 %v601, %v247
    %v746 = vrot.slane %v744, 3
    %v748 = vadd.f32 %v743, %v746
    %v750 = vrot.slane %v684, 1
    %v752 = vmax.f32 %v684, %v750
    %v753 = vrot.slane %v684, 2
    %v755 = vmax.f32 %v752, %v753
    %v756 = vrot.slane %v684, 3
    %v758 = vmax.f32 %v755, %v756
    %v759 = vsub.f32 %v684, %v758
    %v760 = vmul.f32 %v759, 1.442695
    %v761 = vpow.pop %v760
    %v762 = vmul.f32 %v761, %v700
    %v764 = vrot.slane %v758, 7
    %v766 = vsub.f32 %v684, %v764
    %v767 = vmul.f32 %v766, 1.442695
    %v768 = vpow.pop %v767
    %v770 = vrot.slane %v716, 7
    %v772 = vmul.f32 %v768, %v770
    %v773 = vrot.slane %v758, 6
    %v775 = vsub.f32 %v684, %v773
    %v776 = vmul.f32 %v775, 1.442695
    %v777 = vpow.pop %v776
    %v779 = vrot.slane %v732, 6
    %v781 = vmul.f32 %v777, %v779
    %v782 = vrot.slane %v758, 5
    %v784 = vsub.f32 %v684, %v782
    %v785 = vmul.f32 %v784, 1.442695
    %v786 = vpow.pop %v785
    %v788 = vrot.slane %v748, 5
    %v790 = vmul.f32 %v786, %v788
    %v792 = vrot.slane %v772, 1
    %v794 = vadd.f32 %v762, %v792
    %v796 = vrot.slane %v781, 2
    %v798 = vadd.f32 %v794, %v796
    %v800 = vrot.slane %v790, 3
    %v802 = vadd.f32 %v798, %v800
    %v803 = vrcp.pop %v802
    %v804 = vmul.f32 %v802, %v803
    %v805 = vsub.f32 2.0, %v804
    %v806 = vmul.f32 %v803, %v805
    %v807 = vmul.f32 %v762, %v806
    %v809 = vrot.slane %v806, 7
    %v811 = vmul.f32 %v772, %v809
    %v812 = vrot.slane %v806, 6
    %v814 = vmul.f32 %v781, %v812
    %v815 = vrot.slane %v806, 5
    %v817 = vmul.f32 %v790, %v815
    %v818 = vadd.f32 %v605, %v758
    %v819 = vlog2.pop %v802
    %v820 = vmul.f32 %v819, 0.6931472
    %v821 = vadd.f32 %v818, %v820
    %v822 = vadd.f32 %v679, %v326
    %v823 = vadd.f32 %v680, %v328
    %v824 = vadd.f32 %v681, %v330
    %v825 = vadd.f32 %v682, %v332
    %vm826 = vcmp.gt.f32.partialorder %v823, %v822
    %v827 = vsel %vm826, %v823, %v822
    %v828 = vsel %vm826, 1, 0
    %vm829 = vcmp.gt.f32.partialorder %v824, %v827
    %v830 = vsel %vm829, %v824, %v827
    %v831 = vsel %vm829, 2, %v828
    %vm832 = vcmp.gt.f32.partialorder %v825, %v830
    %v833 = vsel %vm832, %v825, %v830
    %v834 = vsel %vm832, 3, %v831
    %v835 = vrot.slane %v684, 5
    %v837 = vadd.f32 %v833, %v835
    %v838 = vadd.f32 %v679, %v357
    %v839 = vadd.f32 %v680, %v359
    %v840 = vadd.f32 %v681, %v361
    %v841 = vadd.f32 %v682, %v363
    %vm842 = vcmp.gt.f32.partialorder %v839, %v838
    %v843 = vsel %vm842, %v839, %v838
    %v844 = vsel %vm842, 1, 0
    %vm845 = vcmp.gt.f32.partialorder %v840, %v843
    %v846 = vsel %vm845, %v840, %v843
    %v847 = vsel %vm845, 2, %v844
    %vm848 = vcmp.gt.f32.partialorder %v841, %v846
    %v849 = vsel %vm848, %v841, %v846
    %v850 = vsel %vm848, 3, %v847
    %v851 = vrot.slane %v684, 6
    %v853 = vadd.f32 %v849, %v851
    %v854 = vadd.f32 %v679, %v388
    %v855 = vadd.f32 %v680, %v390
    %v856 = vadd.f32 %v681, %v392
    %v857 = vadd.f32 %v682, %v394
    %vm858 = vcmp.gt.f32.partialorder %v855, %v854
    %v859 = vsel %vm858, %v855, %v854
    %v860 = vsel %vm858, 1, 0
    %vm861 = vcmp.gt.f32.partialorder %v856, %v859
    %v862 = vsel %vm861, %v856, %v859
    %v863 = vsel %vm861, 2, %v860
    %vm864 = vcmp.gt.f32.partialorder %v857, %v862
    %v865 = vsel %vm864, %v857, %v862
    %v866 = vsel %vm864, 3, %v863
    %v867 = vrot.slane %v684, 7
    %v869 = vadd.f32 %v865, %v867
    %v870 = vadd.f32 %v679, %v419
    %v871 = vadd.f32 %v680, %v421
    %v872 = vadd.f32 %v681, %v423
    %v873 = vadd.f32 %v682, %v425
    %vm874 = vcmp.gt.f32.partialorder %v871, %v870
    %v875 = vsel %vm874, %v871, %v870
    %v876 = vsel %vm874, 1, 0
    %vm877 = vcmp.gt.f32.partialorder %v872, %v875
    %v878 = vsel %vm877, %v872, %v875
    %v879 = vsel %vm877, 2, %v876
    %vm880 = vcmp.gt.f32.partialorder %v873, %v878
    %v881 = vsel %vm880, %v873, %v878
    %v882 = vsel %vm880, 3, %v879
    %v883 = vadd.f32 %v881, %v684
    %v884 = vrot.slane %v834, 3
    %v885 = vrot.slane %v850, 2
    %v886 = vrot.slane %v866, 1
    %v887 = vsel %vm451, %v884, %v885
    %v888 = vsel %vm453, %v887, %v886
    %v889 = vsel %vm455, %v888, %v882
    %s890 = scalar_lea.vmem [#allocation2], 12
    %891 = vst.msk [vmem:[%s890] sm:$0xf] %vm458, %v889
    %v892 = vmax.f32 %v837, %v853
    %v893 = vmax.f32 %v892, %v869
    %v894 = vmax.f32 %v893, %v883
    %v895 = vsub.f32 %v837, %v894
    %v896 = vsub.f32 %v853, %v894
    %v897 = vsub.f32 %v869, %v894
    %v898 = vsub.f32 %v883, %v894
    %s899 = scalar_lea.vmem [#allocation3], 16
    %v900 = vld [vmem:[%s899] sm:$0xf]
    %v901 = vmul.f32 %v807, %v173
    %v902 = vmul.f32 %v811, %v175
    %v904 = vrot.slane %v902, 1
    %v906 = vadd.f32 %v901, %v904
    %v907 = vmul.f32 %v814, %v181
    %v909 = vrot.slane %v907, 2
    %v911 = vadd.f32 %v906, %v909
    %v912 = vmul.f32 %v817, %v187
    %v914 = vrot.slane %v912, 3
    %v916 = vadd.f32 %v911, %v914
    %v917 = vmul.f32 %v807, %v193
    %v918 = vmul.f32 %v811, %v195
    %v920 = vrot.slane %v918, 1
    %v922 = vadd.f32 %v917, %v920
    %v923 = vmul.f32 %v814, %v201
    %v925 = vrot.slane %v923, 2
    %v927 = vadd.f32 %v922, %v925
    %v928 = vmul.f32 %v817, %v207
    %v930 = vrot.slane %v928, 3
    %v932 = vadd.f32 %v927, %v930
    %v933 = vmul.f32 %v807, %v213
    %v934 = vmul.f32 %v811, %v215
    %v936 = vrot.slane %v934, 1
    %v938 = vadd.f32 %v933, %v936
    %v939 = vmul.f32 %v814, %v221
    %v941 = vrot.slane %v939, 2
    %v943 = vadd.f32 %v938, %v941
    %v944 = vmul.f32 %v817, %v227
    %v946 = vrot.slane %v944, 3
    %v948 = vadd.f32 %v943, %v946
    %v949 = vmul.f32 %v807, %v233
    %v950 = vmul.f32 %v811, %v235
    %v952 = vrot.slane %v950, 1
    %v954 = vadd.f32 %v949, %v952
    %v955 = vmul.f32 %v814, %v241
    %v957 = vrot.slane %v955, 2
    %v959 = vadd.f32 %v954, %v957
    %v960 = vmul.f32 %v817, %v247
    %v962 = vrot.slane %v960, 3
    %v964 = vadd.f32 %v959, %v962
    %v966 = vrot.slane %v900, 1
    %v968 = vmax.f32 %v900, %v966
    %v969 = vrot.slane %v900, 2
    %v971 = vmax.f32 %v968, %v969
    %v972 = vrot.slane %v900, 3
    %v974 = vmax.f32 %v971, %v972
    %v975 = vsub.f32 %v900, %v974
    %v976 = vmul.f32 %v975, 1.442695
    %v977 = vpow.pop %v976
    %v978 = vmul.f32 %v977, %v916
    %v980 = vrot.slane %v974, 7
    %v982 = vsub.f32 %v900, %v980
    %v983 = vmul.f32 %v982, 1.442695
    %v984 = vpow.pop %v983
    %v986 = vrot.slane %v932, 7
    %v988 = vmul.f32 %v984, %v986
    %v989 = vrot.slane %v974, 6
    %v991 = vsub.f32 %v900, %v989
    %v992 = vmul.f32 %v991, 1.442695
    %v993 = vpow.pop %v992
    %v995 = vrot.slane %v948, 6
    %v997 = vmul.f32 %v993, %v995
    %v998 = vrot.slane %v974, 5
    %v1000 = vsub.f32 %v900, %v998
    %v1001 = vmul.f32 %v1000, 1.442695
    %v1002 = vpow.pop %v1001
    %v1004 = vrot.slane %v964, 5
    %v1006 = vmul.f32 %v1002, %v1004
    %v1008 = vrot.slane %v988, 1
    %v1010 = vadd.f32 %v978, %v1008
    %v1012 = vrot.slane %v997, 2
    %v1014 = vadd.f32 %v1010, %v1012
    %v1016 = vrot.slane %v1006, 3
    %v1018 = vadd.f32 %v1014, %v1016
    %v1019 = vrcp.pop %v1018
    %v1020 = vmul.f32 %v1018, %v1019
    %v1021 = vsub.f32 2.0, %v1020
    %v1022 = vmul.f32 %v1019, %v1021
    %v1023 = vmul.f32 %v978, %v1022
    %v1025 = vrot.slane %v1022, 7
    %v1027 = vmul.f32 %v988, %v1025
    %v1028 = vrot.slane %v1022, 6
    %v1030 = vmul.f32 %v997, %v1028
    %v1031 = vrot.slane %v1022, 5
    %v1033 = vmul.f32 %v1006, %v1031
    %v1034 = vadd.f32 %v821, %v974
    %v1035 = vlog2.pop %v1018
    %v1036 = vmul.f32 %v1035, 0.6931472
    %v1037 = vadd.f32 %v1034, %v1036
    %v1038 = vadd.f32 %v895, %v326
    %v1039 = vadd.f32 %v896, %v328
    %v1040 = vadd.f32 %v897, %v330
    %v1041 = vadd.f32 %v898, %v332
    %vm1042 = vcmp.gt.f32.partialorder %v1039, %v1038
    %v1043 = vsel %vm1042, %v1039, %v1038
    %v1044 = vsel %vm1042, 1, 0
    %vm1045 = vcmp.gt.f32.partialorder %v1040, %v1043
    %v1046 = vsel %vm1045, %v1040, %v1043
    %v1047 = vsel %vm1045, 2, %v1044
    %vm1048 = vcmp.gt.f32.partialorder %v1041, %v1046
    %v1049 = vsel %vm1048, %v1041, %v1046
    %v1050 = vsel %vm1048, 3, %v1047
    %v1051 = vrot.slane %v900, 5
    %v1053 = vadd.f32 %v1049, %v1051
    %v1054 = vadd.f32 %v895, %v357
    %v1055 = vadd.f32 %v896, %v359
    %v1056 = vadd.f32 %v897, %v361
    %v1057 = vadd.f32 %v898, %v363
    %vm1058 = vcmp.gt.f32.partialorder %v1055, %v1054
    %v1059 = vsel %vm1058, %v1055, %v1054
    %v1060 = vsel %vm1058, 1, 0
    %vm1061 = vcmp.gt.f32.partialorder %v1056, %v1059
    %v1062 = vsel %vm1061, %v1056, %v1059
    %v1063 = vsel %vm1061, 2, %v1060
    %vm1064 = vcmp.gt.f32.partialorder %v1057, %v1062
    %v1065 = vsel %vm1064, %v1057, %v1062
    %v1066 = vsel %vm1064, 3, %v1063
    %v1067 = vrot.slane %v900, 6
    %v1069 = vadd.f32 %v1065, %v1067
    %v1070 = vadd.f32 %v895, %v388
    %v1071 = vadd.f32 %v896, %v390
    %v1072 = vadd.f32 %v897, %v392
    %v1073 = vadd.f32 %v898, %v394
    %vm1074 = vcmp.gt.f32.partialorder %v1071, %v1070
    %v1075 = vsel %vm1074, %v1071, %v1070
    %v1076 = vsel %vm1074, 1, 0
    %vm1077 = vcmp.gt.f32.partialorder %v1072, %v1075
    %v1078 = vsel %vm1077, %v1072, %v1075
    %v1079 = vsel %vm1077, 2, %v1076
    %vm1080 = vcmp.gt.f32.partialorder %v1073, %v1078
    %v1081 = vsel %vm1080, %v1073, %v1078
    %v1082 = vsel %vm1080, 3, %v1079
    %v1083 = vrot.slane %v900, 7
    %v1085 = vadd.f32 %v1081, %v1083
    %v1086 = vadd.f32 %v895, %v419
    %v1087 = vadd.f32 %v896, %v421
    %v1088 = vadd.f32 %v897, %v423
    %v1089 = vadd.f32 %v898, %v425
    %vm1090 = vcmp.gt.f32.partialorder %v1087, %v1086
    %v1091 = vsel %vm1090, %v1087, %v1086
    %v1092 = vsel %vm1090, 1, 0
    %vm1093 = vcmp.gt.f32.partialorder %v1088, %v1091
    %v1094 = vsel %vm1093, %v1088, %v1091
    %v1095 = vsel %vm1093, 2, %v1092
    %vm1096 = vcmp.gt.f32.partialorder %v1089, %v1094
    %v1097 = vsel %vm1096, %v1089, %v1094
    %v1098 = vsel %vm1096, 3, %v1095
    %v1099 = vadd.f32 %v1097, %v900
    %v1100 = vrot.slane %v1050, 3
    %v1101 = vrot.slane %v1066, 2
    %v1102 = vrot.slane %v1082, 1
    %v1103 = vsel %vm451, %v1100, %v1101
    %v1104 = vsel %vm453, %v1103, %v1102
    %v1105 = vsel %vm455, %v1104, %v1098
    %s1106 = scalar_lea.vmem [#allocation2], 16
    %1107 = vst.msk [vmem:[%s1106] sm:$0xf] %vm458, %v1105
    %v1108 = vmax.f32 %v1053, %v1069
    %v1109 = vmax.f32 %v1108, %v1085
    %v1110 = vmax.f32 %v1109, %v1099
    %v1111 = vsub.f32 %v1053, %v1110
    %v1112 = vsub.f32 %v1069, %v1110
    %v1113 = vsub.f32 %v1085, %v1110
    %v1114 = vsub.f32 %v1099, %v1110
    %s1115 = scalar_lea.vmem [#allocation3], 20
    %v1116 = vld [vmem:[%s1115] sm:$0xf]
    %v1117 = vmul.f32 %v1023, %v173
    %v1118 = vmul.f32 %v1027, %v175
    %v1120 = vrot.slane %v1118, 1
    %v1122 = vadd.f32 %v1117, %v1120
    %v1123 = vmul.f32 %v1030, %v181
    %v1125 = vrot.slane %v1123, 2
    %v1127 = vadd.f32 %v1122, %v1125
    %v1128 = vmul.f32 %v1033, %v187
    %v1130 = vrot.slane %v1128, 3
    %v1132 = vadd.f32 %v1127, %v1130
    %v1133 = vmul.f32 %v1023, %v193
    %v1134 = vmul.f32 %v1027, %v195
    %v1136 = vrot.slane %v1134, 1
    %v1138 = vadd.f32 %v1133, %v1136
    %v1139 = vmul.f32 %v1030, %v201
    %v1141 = vrot.slane %v1139, 2
    %v1143 = vadd.f32 %v1138, %v1141
    %v1144 = vmul.f32 %v1033, %v207
    %v1146 = vrot.slane %v1144, 3
    %v1148 = vadd.f32 %v1143, %v1146
    %v1149 = vmul.f32 %v1023, %v213
    %v1150 = vmul.f32 %v1027, %v215
    %v1152 = vrot.slane %v1150, 1
    %v1154 = vadd.f32 %v1149, %v1152
    %v1155 = vmul.f32 %v1030, %v221
    %v1157 = vrot.slane %v1155, 2
    %v1159 = vadd.f32 %v1154, %v1157
    %v1160 = vmul.f32 %v1033, %v227
    %v1162 = vrot.slane %v1160, 3
    %v1164 = vadd.f32 %v1159, %v1162
    %v1165 = vmul.f32 %v1023, %v233
    %v1166 = vmul.f32 %v1027, %v235
    %v1168 = vrot.slane %v1166, 1
    %v1170 = vadd.f32 %v1165, %v1168
    %v1171 = vmul.f32 %v1030, %v241
    %v1173 = vrot.slane %v1171, 2
    %v1175 = vadd.f32 %v1170, %v1173
    %v1176 = vmul.f32 %v1033, %v247
    %v1178 = vrot.slane %v1176, 3
    %v1180 = vadd.f32 %v1175, %v1178
    %v1182 = vrot.slane %v1116, 1
    %v1184 = vmax.f32 %v1116, %v1182
    %v1185 = vrot.slane %v1116, 2
    %v1187 = vmax.f32 %v1184, %v1185
    %v1188 = vrot.slane %v1116, 3
    %v1190 = vmax.f32 %v1187, %v1188
    %v1191 = vsub.f32 %v1116, %v1190
    %v1192 = vmul.f32 %v1191, 1.442695
    %v1193 = vpow.pop %v1192
    %v1194 = vmul.f32 %v1193, %v1132
    %v1196 = vrot.slane %v1190, 7
    %v1198 = vsub.f32 %v1116, %v1196
    %v1199 = vmul.f32 %v1198, 1.442695
    %v1200 = vpow.pop %v1199
    %v1202 = vrot.slane %v1148, 7
    %v1204 = vmul.f32 %v1200, %v1202
    %v1205 = vrot.slane %v1190, 6
    %v1207 = vsub.f32 %v1116, %v1205
    %v1208 = vmul.f32 %v1207, 1.442695
    %v1209 = vpow.pop %v1208
    %v1211 = vrot.slane %v1164, 6
    %v1213 = vmul.f32 %v1209, %v1211
    %v1214 = vrot.slane %v1190, 5
    %v1216 = vsub.f32 %v1116, %v1214
    %v1217 = vmul.f32 %v1216, 1.442695
    %v1218 = vpow.pop %v1217
    %v1220 = vrot.slane %v1180, 5
    %v1222 = vmul.f32 %v1218, %v1220
    %v1224 = vrot.slane %v1204, 1
    %v1226 = vadd.f32 %v1194, %v1224
    %v1228 = vrot.slane %v1213, 2
    %v1230 = vadd.f32 %v1226, %v1228
    %v1232 = vrot.slane %v1222, 3
    %v1234 = vadd.f32 %v1230, %v1232
    %v1235 = vrcp.pop %v1234
    %v1236 = vmul.f32 %v1234, %v1235
    %v1237 = vsub.f32 2.0, %v1236
    %v1238 = vmul.f32 %v1235, %v1237
    %v1239 = vmul.f32 %v1194, %v1238
    %v1241 = vrot.slane %v1238, 7
    %v1243 = vmul.f32 %v1204, %v1241
    %v1244 = vrot.slane %v1238, 6
    %v1246 = vmul.f32 %v1213, %v1244
    %v1247 = vrot.slane %v1238, 5
    %v1249 = vmul.f32 %v1222, %v1247
    %v1250 = vadd.f32 %v1037, %v1190
    %v1251 = vlog2.pop %v1234
    %v1252 = vmul.f32 %v1251, 0.6931472
    %v1253 = vadd.f32 %v1250, %v1252
    %v1254 = vadd.f32 %v1111, %v326
    %v1255 = vadd.f32 %v1112, %v328
    %v1256 = vadd.f32 %v1113, %v330
    %v1257 = vadd.f32 %v1114, %v332
    %vm1258 = vcmp.gt.f32.partialorder %v1255, %v1254
    %v1259 = vsel %vm1258, %v1255, %v1254
    %v1260 = vsel %vm1258, 1, 0
    %vm1261 = vcmp.gt.f32.partialorder %v1256, %v1259
    %v1262 = vsel %vm1261, %v1256, %v1259
    %v1263 = vsel %vm1261, 2, %v1260
    %vm1264 = vcmp.gt.f32.partialorder %v1257, %v1262
    %v1265 = vsel %vm1264, %v1257, %v1262
    %v1266 = vsel %vm1264, 3, %v1263
    %v1267 = vrot.slane %v1116, 5
    %v1269 = vadd.f32 %v1265, %v1267
    %v1270 = vadd.f32 %v1111, %v357
    %v1271 = vadd.f32 %v1112, %v359
    %v1272 = vadd.f32 %v1113, %v361
    %v1273 = vadd.f32 %v1114, %v363
    %vm1274 = vcmp.gt.f32.partialorder %v1271, %v1270
    %v1275 = vsel %vm1274, %v1271, %v1270
    %v1276 = vsel %vm1274, 1, 0
    %vm1277 = vcmp.gt.f32.partialorder %v1272, %v1275
    %v1278 = vsel %vm1277, %v1272, %v1275
    %v1279 = vsel %vm1277, 2, %v1276
    %vm1280 = vcmp.gt.f32.partialorder %v1273, %v1278
    %v1281 = vsel %vm1280, %v1273, %v1278
    %v1282 = vsel %vm1280, 3, %v1279
    %v1283 = vrot.slane %v1116, 6
    %v1285 = vadd.f32 %v1281, %v1283
    %v1286 = vadd.f32 %v1111, %v388
    %v1287 = vadd.f32 %v1112, %v390
    %v1288 = vadd.f32 %v1113, %v392
    %v1289 = vadd.f32 %v1114, %v394
    %vm1290 = vcmp.gt.f32.partialorder %v1287, %v1286
    %v1291 = vsel %vm1290, %v1287, %v1286
    %v1292 = vsel %vm1290, 1, 0
    %vm1293 = vcmp.gt.f32.partialorder %v1288, %v1291
    %v1294 = vsel %vm1293, %v1288, %v1291
    %v1295 = vsel %vm1293, 2, %v1292
    %vm1296 = vcmp.gt.f32.partialorder %v1289, %v1294
    %v1297 = vsel %vm1296, %v1289, %v1294
    %v1298 = vsel %vm1296, 3, %v1295
    %v1299 = vrot.slane %v1116, 7
    %v1301 = vadd.f32 %v1297, %v1299
    %v1302 = vadd.f32 %v1111, %v419
    %v1303 = vadd.f32 %v1112, %v421
    %v1304 = vadd.f32 %v1113, %v423
    %v1305 = vadd.f32 %v1114, %v425
    %vm1306 = vcmp.gt.f32.partialorder %v1303, %v1302
    %v1307 = vsel %vm1306, %v1303, %v1302
    %v1308 = vsel %vm1306, 1, 0
    %vm1309 = vcmp.gt.f32.partialorder %v1304, %v1307
    %v1310 = vsel %vm1309, %v1304, %v1307
    %v1311 = vsel %vm1309, 2, %v1308
    %vm1312 = vcmp.gt.f32.partialorder %v1305, %v1310
    %v1313 = vsel %vm1312, %v1305, %v1310
    %v1314 = vsel %vm1312, 3, %v1311
    %v1315 = vadd.f32 %v1313, %v1116
    %v1316 = vrot.slane %v1266, 3
    %v1317 = vrot.slane %v1282, 2
    %v1318 = vrot.slane %v1298, 1
    %v1319 = vsel %vm451, %v1316, %v1317
    %v1320 = vsel %vm453, %v1319, %v1318
    %v1321 = vsel %vm455, %v1320, %v1314
    %s1322 = scalar_lea.vmem [#allocation2], 20
    %1323 = vst.msk [vmem:[%s1322] sm:$0xf] %vm458, %v1321
    %v1324 = vmax.f32 %v1269, %v1285
    %v1325 = vmax.f32 %v1324, %v1301
    %v1326 = vmax.f32 %v1325, %v1315
    %v1327 = vsub.f32 %v1269, %v1326
    %v1328 = vsub.f32 %v1285, %v1326
    %v1329 = vsub.f32 %v1301, %v1326
    %v1330 = vsub.f32 %v1315, %v1326
    %s1331 = scalar_lea.vmem [#allocation3], 24
    %v1332 = vld [vmem:[%s1331] sm:$0xf]
    %v1333 = vmul.f32 %v1239, %v173
    %v1334 = vmul.f32 %v1243, %v175
    %v1336 = vrot.slane %v1334, 1
    %v1338 = vadd.f32 %v1333, %v1336
    %v1339 = vmul.f32 %v1246, %v181
    %v1341 = vrot.slane %v1339, 2
    %v1343 = vadd.f32 %v1338, %v1341
    %v1344 = vmul.f32 %v1249, %v187
    %v1346 = vrot.slane %v1344, 3
    %v1348 = vadd.f32 %v1343, %v1346
    %v1349 = vmul.f32 %v1239, %v193
    %v1350 = vmul.f32 %v1243, %v195
    %v1352 = vrot.slane %v1350, 1
    %v1354 = vadd.f32 %v1349, %v1352
    %v1355 = vmul.f32 %v1246, %v201
    %v1357 = vrot.slane %v1355, 2
    %v1359 = vadd.f32 %v1354, %v1357
    %v1360 = vmul.f32 %v1249, %v207
    %v1362 = vrot.slane %v1360, 3
    %v1364 = vadd.f32 %v1359, %v1362
    %v1365 = vmul.f32 %v1239, %v213
    %v1366 = vmul.f32 %v1243, %v215
    %v1368 = vrot.slane %v1366, 1
    %v1370 = vadd.f32 %v1365, %v1368
    %v1371 = vmul.f32 %v1246, %v221
    %v1373 = vrot.slane %v1371, 2
    %v1375 = vadd.f32 %v1370, %v1373
    %v1376 = vmul.f32 %v1249, %v227
    %v1378 = vrot.slane %v1376, 3
    %v1380 = vadd.f32 %v1375, %v1378
    %v1381 = vmul.f32 %v1239, %v233
    %v1382 = vmul.f32 %v1243, %v235
    %v1384 = vrot.slane %v1382, 1
    %v1386 = vadd.f32 %v1381, %v1384
    %v1387 = vmul.f32 %v1246, %v241
    %v1389 = vrot.slane %v1387, 2
    %v1391 = vadd.f32 %v1386, %v1389
    %v1392 = vmul.f32 %v1249, %v247
    %v1394 = vrot.slane %v1392, 3
    %v1396 = vadd.f32 %v1391, %v1394
    %v1398 = vrot.slane %v1332, 1
    %v1400 = vmax.f32 %v1332, %v1398
    %v1401 = vrot.slane %v1332, 2
    %v1403 = vmax.f32 %v1400, %v1401
    %v1404 = vrot.slane %v1332, 3
    %v1406 = vmax.f32 %v1403, %v1404
    %v1407 = vsub.f32 %v1332, %v1406
    %v1408 = vmul.f32 %v1407, 1.442695
    %v1409 = vpow.pop %v1408
    %v1410 = vmul.f32 %v1409, %v1348
    %v1412 = vrot.slane %v1406, 7
    %v1414 = vsub.f32 %v1332, %v1412
    %v1415 = vmul.f32 %v1414, 1.442695
    %v1416 = vpow.pop %v1415
    %v1418 = vrot.slane %v1364, 7
    %v1420 = vmul.f32 %v1416, %v1418
    %v1421 = vrot.slane %v1406, 6
    %v1423 = vsub.f32 %v1332, %v1421
    %v1424 = vmul.f32 %v1423, 1.442695
    %v1425 = vpow.pop %v1424
    %v1427 = vrot.slane %v1380, 6
    %v1429 = vmul.f32 %v1425, %v1427
    %v1430 = vrot.slane %v1406, 5
    %v1432 = vsub.f32 %v1332, %v1430
    %v1433 = vmul.f32 %v1432, 1.442695
    %v1434 = vpow.pop %v1433
    %v1436 = vrot.slane %v1396, 5
    %v1438 = vmul.f32 %v1434, %v1436
    %v1440 = vrot.slane %v1420, 1
    %v1442 = vadd.f32 %v1410, %v1440
    %v1444 = vrot.slane %v1429, 2
    %v1446 = vadd.f32 %v1442, %v1444
    %v1448 = vrot.slane %v1438, 3
    %v1450 = vadd.f32 %v1446, %v1448
    %v1451 = vrcp.pop %v1450
    %v1452 = vmul.f32 %v1450, %v1451
    %v1453 = vsub.f32 2.0, %v1452
    %v1454 = vmul.f32 %v1451, %v1453
    %v1455 = vmul.f32 %v1410, %v1454
    %v1457 = vrot.slane %v1454, 7
    %v1459 = vmul.f32 %v1420, %v1457
    %v1460 = vrot.slane %v1454, 6
    %v1462 = vmul.f32 %v1429, %v1460
    %v1463 = vrot.slane %v1454, 5
    %v1465 = vmul.f32 %v1438, %v1463
    %v1466 = vadd.f32 %v1253, %v1406
    %v1467 = vlog2.pop %v1450
    %v1468 = vmul.f32 %v1467, 0.6931472
    %v1469 = vadd.f32 %v1466, %v1468
    %v1470 = vadd.f32 %v1327, %v326
    %v1471 = vadd.f32 %v1328, %v328
    %v1472 = vadd.f32 %v1329, %v330
    %v1473 = vadd.f32 %v1330, %v332
    %vm1474 = vcmp.gt.f32.partialorder %v1471, %v1470
    %v1475 = vsel %vm1474, %v1471, %v1470
    %v1476 = vsel %vm1474, 1, 0
    %vm1477 = vcmp.gt.f32.partialorder %v1472, %v1475
    %v1478 = vsel %vm1477, %v1472, %v1475
    %v1479 = vsel %vm1477, 2, %v1476
    %vm1480 = vcmp.gt.f32.partialorder %v1473, %v1478
    %v1481 = vsel %vm1480, %v1473, %v1478
    %v1482 = vsel %vm1480, 3, %v1479
    %v1483 = vrot.slane %v1332, 5
    %v1485 = vadd.f32 %v1481, %v1483
    %v1486 = vadd.f32 %v1327, %v357
    %v1487 = vadd.f32 %v1328, %v359
    %v1488 = vadd.f32 %v1329, %v361
    %v1489 = vadd.f32 %v1330, %v363
    %vm1490 = vcmp.gt.f32.partialorder %v1487, %v1486
    %v1491 = vsel %vm1490, %v1487, %v1486
    %v1492 = vsel %vm1490, 1, 0
    %vm1493 = vcmp.gt.f32.partialorder %v1488, %v1491
    %v1494 = vsel %vm1493, %v1488, %v1491
    %v1495 = vsel %vm1493, 2, %v1492
    %vm1496 = vcmp.gt.f32.partialorder %v1489, %v1494
    %v1497 = vsel %vm1496, %v1489, %v1494
    %v1498 = vsel %vm1496, 3, %v1495
    %v1499 = vrot.slane %v1332, 6
    %v1501 = vadd.f32 %v1497, %v1499
    %v1502 = vadd.f32 %v1327, %v388
    %v1503 = vadd.f32 %v1328, %v390
    %v1504 = vadd.f32 %v1329, %v392
    %v1505 = vadd.f32 %v1330, %v394
    %vm1506 = vcmp.gt.f32.partialorder %v1503, %v1502
    %v1507 = vsel %vm1506, %v1503, %v1502
    %v1508 = vsel %vm1506, 1, 0
    %vm1509 = vcmp.gt.f32.partialorder %v1504, %v1507
    %v1510 = vsel %vm1509, %v1504, %v1507
    %v1511 = vsel %vm1509, 2, %v1508
    %vm1512 = vcmp.gt.f32.partialorder %v1505, %v1510
    %v1513 = vsel %vm1512, %v1505, %v1510
    %v1514 = vsel %vm1512, 3, %v1511
    %v1515 = vrot.slane %v1332, 7
    %v1517 = vadd.f32 %v1513, %v1515
    %v1518 = vadd.f32 %v1327, %v419
    %v1519 = vadd.f32 %v1328, %v421
    %v1520 = vadd.f32 %v1329, %v423
    %v1521 = vadd.f32 %v1330, %v425
    %vm1522 = vcmp.gt.f32.partialorder %v1519, %v1518
    %v1523 = vsel %vm1522, %v1519, %v1518
    %v1524 = vsel %vm1522, 1, 0
    %vm1525 = vcmp.gt.f32.partialorder %v1520, %v1523
    %v1526 = vsel %vm1525, %v1520, %v1523
    %v1527 = vsel %vm1525, 2, %v1524
    %vm1528 = vcmp.gt.f32.partialorder %v1521, %v1526
    %v1529 = vsel %vm1528, %v1521, %v1526
    %v1530 = vsel %vm1528, 3, %v1527
    %v1531 = vadd.f32 %v1529, %v1332
    %v1532 = vrot.slane %v1482, 3
    %v1533 = vrot.slane %v1498, 2
    %v1534 = vrot.slane %v1514, 1
    %v1535 = vsel %vm451, %v1532, %v1533
    %v1536 = vsel %vm453, %v1535, %v1534
    %v1537 = vsel %vm455, %v1536, %v1530
    %s1538 = scalar_lea.vmem [#allocation2], 24
    %1539 = vst.msk [vmem:[%s1538] sm:$0xf] %vm458, %v1537
    %v1540 = vmax.f32 %v1485, %v1501
    %v1541 = vmax.f32 %v1540, %v1517
    %v1542 = vmax.f32 %v1541, %v1531
    %v1543 = vsub.f32 %v1485, %v1542
    %v1544 = vsub.f32 %v1501, %v1542
    %v1545 = vsub.f32 %v1517, %v1542
    %v1546 = vsub.f32 %v1531, %v1542
    %s1547 = scalar_lea.vmem [#allocation3], 28
    %v1548 = vld [vmem:[%s1547] sm:$0xf]
    %v1549 = vmul.f32 %v1455, %v173
    %v1550 = vmul.f32 %v1459, %v175
    %v1552 = vrot.slane %v1550, 1
    %v1554 = vadd.f32 %v1549, %v1552
    %v1555 = vmul.f32 %v1462, %v181
    %v1557 = vrot.slane %v1555, 2
    %v1559 = vadd.f32 %v1554, %v1557
    %v1560 = vmul.f32 %v1465, %v187
    %v1562 = vrot.slane %v1560, 3
    %v1564 = vadd.f32 %v1559, %v1562
    %v1565 = vmul.f32 %v1455, %v193
    %v1566 = vmul.f32 %v1459, %v195
    %v1568 = vrot.slane %v1566, 1
    %v1570 = vadd.f32 %v1565, %v1568
    %v1571 = vmul.f32 %v1462, %v201
    %v1573 = vrot.slane %v1571, 2
    %v1575 = vadd.f32 %v1570, %v1573
    %v1576 = vmul.f32 %v1465, %v207
    %v1578 = vrot.slane %v1576, 3
    %v1580 = vadd.f32 %v1575, %v1578
    %v1581 = vmul.f32 %v1455, %v213
    %v1582 = vmul.f32 %v1459, %v215
    %v1584 = vrot.slane %v1582, 1
    %v1586 = vadd.f32 %v1581, %v1584
    %v1587 = vmul.f32 %v1462, %v221
    %v1589 = vrot.slane %v1587, 2
    %v1591 = vadd.f32 %v1586, %v1589
    %v1592 = vmul.f32 %v1465, %v227
    %v1594 = vrot.slane %v1592, 3
    %v1596 = vadd.f32 %v1591, %v1594
    %v1597 = vmul.f32 %v1455, %v233
    %v1598 = vmul.f32 %v1459, %v235
    %v1600 = vrot.slane %v1598, 1
    %v1602 = vadd.f32 %v1597, %v1600
    %v1603 = vmul.f32 %v1462, %v241
    %v1605 = vrot.slane %v1603, 2
    %v1607 = vadd.f32 %v1602, %v1605
    %v1608 = vmul.f32 %v1465, %v247
    %v1610 = vrot.slane %v1608, 3
    %v1612 = vadd.f32 %v1607, %v1610
    %v1614 = vrot.slane %v1548, 1
    %v1616 = vmax.f32 %v1548, %v1614
    %v1617 = vrot.slane %v1548, 2
    %v1619 = vmax.f32 %v1616, %v1617
    %v1620 = vrot.slane %v1548, 3
    %v1622 = vmax.f32 %v1619, %v1620
    %v1623 = vsub.f32 %v1548, %v1622
    %v1624 = vmul.f32 %v1623, 1.442695
    %v1625 = vpow.pop %v1624
    %v1626 = vmul.f32 %v1625, %v1564
    %v1628 = vrot.slane %v1622, 7
    %v1630 = vsub.f32 %v1548, %v1628
    %v1631 = vmul.f32 %v1630, 1.442695
    %v1632 = vpow.pop %v1631
    %v1634 = vrot.slane %v1580, 7
    %v1636 = vmul.f32 %v1632, %v1634
    %v1637 = vrot.slane %v1622, 6
    %v1639 = vsub.f32 %v1548, %v1637
    %v1640 = vmul.f32 %v1639, 1.442695
    %v1641 = vpow.pop %v1640
    %v1643 = vrot.slane %v1596, 6
    %v1645 = vmul.f32 %v1641, %v1643
    %v1646 = vrot.slane %v1622, 5
    %v1648 = vsub.f32 %v1548, %v1646
    %v1649 = vmul.f32 %v1648, 1.442695
    %v1650 = vpow.pop %v1649
    %v1652 = vrot.slane %v1612, 5
    %v1654 = vmul.f32 %v1650, %v1652
    %v1656 = vrot.slane %v1636, 1
    %v1658 = vadd.f32 %v1626, %v1656
    %v1660 = vrot.slane %v1645, 2
    %v1662 = vadd.f32 %v1658, %v1660
    %v1664 = vrot.slane %v1654, 3
    %v1666 = vadd.f32 %v1662, %v1664
    %v1667 = vadd.f32 %v1469, %v1622
    %v1668 = vlog2.pop %v1666
    %v1669 = vmul.f32 %v1668, 0.6931472
    %v1670 = vadd.f32 %v1667, %v1669
    %v1671 = vadd.f32 %v1543, %v326
    %v1672 = vadd.f32 %v1544, %v328
    %v1673 = vadd.f32 %v1545, %v330
    %v1674 = vadd.f32 %v1546, %v332
    %vm1675 = vcmp.gt.f32.partialorder %v1672, %v1671
    %v1676 = vsel %vm1675, %v1672, %v1671
    %v1677 = vsel %vm1675, 1, 0
    %vm1678 = vcmp.gt.f32.partialorder %v1673, %v1676
    %v1679 = vsel %vm1678, %v1673, %v1676
    %v1680 = vsel %vm1678, 2, %v1677
    %vm1681 = vcmp.gt.f32.partialorder %v1674, %v1679
    %v1682 = vsel %vm1681, %v1674, %v1679
    %v1683 = vsel %vm1681, 3, %v1680
    %v1684 = vrot.slane %v1548, 5
    %v1686 = vadd.f32 %v1682, %v1684
    %v1687 = vadd.f32 %v1543, %v357
    %v1688 = vadd.f32 %v1544, %v359
    %v1689 = vadd.f32 %v1545, %v361
    %v1690 = vadd.f32 %v1546, %v363
    %vm1691 = vcmp.gt.f32.partialorder %v1688, %v1687
    %v1692 = vsel %vm1691, %v1688, %v1687
    %v1693 = vsel %vm1691, 1, 0
    %vm1694 = vcmp.gt.f32.partialorder %v1689, %v1692
    %v1695 = vsel %vm1694, %v1689, %v1692
    %v1696 = vsel %vm1694, 2, %v1693
    %vm1697 = vcmp.gt.f32.partialorder %v1690, %v1695
    %v1698 = vsel %vm1697, %v1690, %v1695
    %v1699 = vsel %vm1697, 3, %v1696
    %v1700 = vrot.slane %v1548, 6
    %v1702 = vadd.f32 %v1698, %v1700
    %v1703 = vadd.f32 %v1543, %v388
    %v1704 = vadd.f32 %v1544, %v390
    %v1705 = vadd.f32 %v1545, %v392
    %v1706 = vadd.f32 %v1546, %v394
    %vm1707 = vcmp.gt.f32.partialorder %v1704, %v1703
    %v1708 = vsel %vm1707, %v1704, %v1703
    %v1709 = vsel %vm1707, 1, 0
    %vm1710 = vcmp.gt.f32.partialorder %v1705, %v1708
    %v1711 = vsel %vm1710, %v1705, %v1708
    %v1712 = vsel %vm1710, 2, %v1709
    %vm1713 = vcmp.gt.f32.partialorder %v1706, %v1711
    %v1714 = vsel %vm1713, %v1706, %v1711
    %v1715 = vsel %vm1713, 3, %v1712
    %v1716 = vrot.slane %v1548, 7
    %v1718 = vadd.f32 %v1714, %v1716
    %v1719 = vadd.f32 %v1543, %v419
    %v1720 = vadd.f32 %v1544, %v421
    %v1721 = vadd.f32 %v1545, %v423
    %v1722 = vadd.f32 %v1546, %v425
    %vm1723 = vcmp.gt.f32.partialorder %v1720, %v1719
    %v1724 = vsel %vm1723, %v1720, %v1719
    %v1725 = vsel %vm1723, 1, 0
    %vm1726 = vcmp.gt.f32.partialorder %v1721, %v1724
    %v1727 = vsel %vm1726, %v1721, %v1724
    %v1728 = vsel %vm1726, 2, %v1725
    %vm1729 = vcmp.gt.f32.partialorder %v1722, %v1727
    %v1730 = vsel %vm1729, %v1722, %v1727
    %v1731 = vsel %vm1729, 3, %v1728
    %v1732 = vadd.f32 %v1730, %v1548
    %v1733 = vrot.slane %v1683, 3
    %v1734 = vrot.slane %v1699, 2
    %v1735 = vrot.slane %v1715, 1
    %v1736 = vsel %vm451, %v1733, %v1734
    %v1737 = vsel %vm453, %v1736, %v1735
    %v1738 = vsel %vm455, %v1737, %v1731
    %s1739 = scalar_lea.vmem [#allocation2], 28
    %1740 = vst.msk [vmem:[%s1739] sm:$0xf] %vm458, %v1738
    %v1741 = vmax.f32 %v1686, %v1702
    %v1742 = vmax.f32 %v1741, %v1718
    %v1743 = vmax.f32 %v1742, %v1732
    %v1744 = vsub.f32 %v1686, %v1743
    %v1745 = vsub.f32 %v1702, %v1743
    %v1746 = vsub.f32 %v1718, %v1743
    %v1747 = vsub.f32 %v1732, %v1743
    %vm1748 = vcmask 8192
    %1749 = vst.msk [vmem:[#allocation11] sm:$0x1] %vm1748, %v1670
    %vm1750 = vcmp.gt.f32.partialorder %v1745, %v1744
    %v1751 = vsel %vm1750, %v1745, %v1744
    %v1752 = vsel %vm1750, 1, 0
    %vm1753 = vcmp.gt.f32.partialorder %v1746, %v1751
    %v1754 = vsel %vm1753, %v1746, %v1751
    %v1755 = vsel %vm1753, 2, %v1752
    %vm1756 = vcmp.gt.f32.partialorder %v1747, %v1754
    %v1757 = vsel %vm1756, 3, %v1755
    %s1758 = scalar_lea.vmem [#allocation12], 7
    %vm1759 = vcmask 11267
    %1760 = vst.msk [vmem:[%s1758 - $0x3] sm:$0x8] %vm1759, %v1757
    %v1761 = vld [vmem:[%s1739] sm:$0xf]
    %vm1762 = vcmp.eq.s32.totalorder %v1757, 1
    %v1763 = vrot.slane %v1761, 6
    %v1764 = vrot.slane %v1761, 5
    %v1765 = vsel %vm1762, %v1763, %v1764
    %vm1766 = vcmp.eq.s32.totalorder %v1757, 2
    %v1767 = vrot.slane %v1761, 7
    %v1768 = vsel %vm1766, %v1767, %v1765
    %vm1769 = vcmp.eq.s32.totalorder %v1757, 3
    %v1770 = vsel %vm1769, %v1761, %v1768
    %s1771 = scalar_lea.vmem [#allocation12], 6
    %1772 = vst.msk [vmem:[%s1771 - $0x3] sm:$0x8] %vm1759, %v1770
    %v1773 = vld [vmem:[%s1538] sm:$0xf]
    %vm1774 = vcmp.eq.s32.totalorder %v1770, 1
    %v1775 = vrot.slane %v1773, 6
    %v1776 = vrot.slane %v1773, 5
    %v1777 = vsel %vm1774, %v1775, %v1776
    %vm1778 = vcmp.eq.s32.totalorder %v1770, 2
    %v1779 = vrot.slane %v1773, 7
    %v1780 = vsel %vm1778, %v1779, %v1777
    %vm1781 = vcmp.eq.s32.totalorder %v1770, 3
    %v1782 = vsel %vm1781, %v1773, %v1780
    %s1783 = scalar_lea.vmem [#allocation12], 5
    %1784 = vst.msk [vmem:[%s1783 - $0x3] sm:$0x8] %vm1759, %v1782
    %v1785 = vld [vmem:[%s1322] sm:$0xf]
    %vm1786 = vcmp.eq.s32.totalorder %v1782, 1
    %v1787 = vrot.slane %v1785, 6
    %v1788 = vrot.slane %v1785, 5
    %v1789 = vsel %vm1786, %v1787, %v1788
    %vm1790 = vcmp.eq.s32.totalorder %v1782, 2
    %v1791 = vrot.slane %v1785, 7
    %v1792 = vsel %vm1790, %v1791, %v1789
    %vm1793 = vcmp.eq.s32.totalorder %v1782, 3
    %v1794 = vsel %vm1793, %v1785, %v1792
    %s1795 = scalar_lea.vmem [#allocation12], 4
    %1796 = vst.msk [vmem:[%s1795 - $0x3] sm:$0x8] %vm1759, %v1794
    %v1797 = vld [vmem:[%s1106] sm:$0xf]
    %vm1798 = vcmp.eq.s32.totalorder %v1794, 1
    %v1799 = vrot.slane %v1797, 6
    %v1800 = vrot.slane %v1797, 5
    %v1801 = vsel %vm1798, %v1799, %v1800
    %vm1802 = vcmp.eq.s32.totalorder %v1794, 2
    %v1803 = vrot.slane %v1797, 7
    %v1804 = vsel %vm1802, %v1803, %v1801
    %vm1805 = vcmp.eq.s32.totalorder %v1794, 3
    %v1806 = vsel %vm1805, %v1797, %v1804
    %s1807 = scalar_lea.vmem [#allocation12], 3
    %1808 = vst.msk [vmem:[%s1807 - $0x3] sm:$0x8] %vm1759, %v1806
    %v1809 = vld [vmem:[%s890] sm:$0xf]
    %vm1810 = vcmp.eq.s32.totalorder %v1806, 1
    %v1811 = vrot.slane %v1809, 6
    %v1812 = vrot.slane %v1809, 5
    %v1813 = vsel %vm1810, %v1811, %v1812
    %vm1814 = vcmp.eq.s32.totalorder %v1806, 2
    %v1815 = vrot.slane %v1809, 7
    %v1816 = vsel %vm1814, %v1815, %v1813
    %vm1817 = vcmp.eq.s32.totalorder %v1806, 3
    %v1818 = vsel %vm1817, %v1809, %v1816
    %s1819 = scalar_lea.vmem [#allocation12], 2
    %1820 = vst.msk [vmem:[%s1819 - $0x3] sm:$0x8] %vm1759, %v1818
    %v1821 = vld [vmem:[%s674] sm:$0xf]
    %vm1822 = vcmp.eq.s32.totalorder %v1818, 1
    %v1823 = vrot.slane %v1821, 6
    %v1824 = vrot.slane %v1821, 5
    %v1825 = vsel %vm1822, %v1823, %v1824
    %vm1826 = vcmp.eq.s32.totalorder %v1818, 2
    %v1827 = vrot.slane %v1821, 7
    %v1828 = vsel %vm1826, %v1827, %v1825
    %vm1829 = vcmp.eq.s32.totalorder %v1818, 3
    %v1830 = vsel %vm1829, %v1821, %v1828
    %s1831 = scalar_lea.vmem [#allocation12], 1
    %1832 = vst.msk [vmem:[%s1831 - $0x3] sm:$0x8] %vm1759, %v1830
    %v1833 = vld [vmem:[%s457] sm:$0xf]
    %vm1834 = vcmp.eq.s32.totalorder %v1830, 1
    %v1835 = vrot.slane %v1833, 6
    %v1836 = vrot.slane %v1833, 5
    %v1837 = vsel %vm1834, %v1835, %v1836
    %vm1838 = vcmp.eq.s32.totalorder %v1830, 2
    %v1839 = vrot.slane %v1833, 7
    %v1840 = vsel %vm1838, %v1839, %v1837
    %vm1841 = vcmp.eq.s32.totalorder %v1830, 3
    %v1842 = vsel %vm1841, %v1833, %v1840
    %1843 = vst.msk [vmem:[#allocation12 - $0x3] sm:$0x8] %vm1759, %v1842
    // Predicated region
    $region34: #{cartpole_hmmz_forward.3} parent=1 // pred_check
      _
    $region35: #{cartpole_hmmz_forward.3} parent=1 // pred_check_branch
      %1845 = sbr.rel (0) target = $region37
    $region36: #{cartpole_hmmz_forward.3} parent=1 // pred_region
      %s1847 = ssub.s32 16, 16
      %1848 = vsyncadd [#allocation5], %s1847
      %s1850 = sshll.u32 [#allocation11], 4
      %s1851 = int_to_ptr.vmem [resolvable:$true] %s1850
      %1853 = dma.vmem_to_hbm [thread:$0]  %s1851, 16, %s4, [#allocation5]
    $region37: #{cartpole_hmmz_forward.3} parent=1 // pred_fallthru
      _
    // Predicated region
    $region38: #{cartpole_hmmz_forward.3} parent=1 // pred_check
      _
    $region39: #{cartpole_hmmz_forward.3} parent=1 // pred_check_branch
      %1855 = sbr.rel (0) target = $region41
    $region40: #{cartpole_hmmz_forward.3} parent=1 // pred_region
      %s1857 = ssub.s32 128, 128
      %1858 = vsyncadd [#allocation13], %s1857
      %s1859 = sshll.u32 [#allocation12], 4
      %s1860 = int_to_ptr.vmem [resolvable:$true] %s1859
      %1865 = dma.vmem_to_hbm [thread:$0]  %s1860, 128, %s5, [#allocation13], 16, 16, 1
    $region41: #{cartpole_hmmz_forward.3} parent=1 // pred_fallthru
      _
    // Predicated region
    $region42: #{cartpole_hmmz_forward.3} parent=1 // pred_check
      _
    $region43: #{cartpole_hmmz_forward.3} parent=1 // pred_check_branch
      %1867 = sbr.rel (0) target = $region45
    $region44: #{cartpole_hmmz_forward.3} parent=1 // pred_region
      %1868 = dma.done [#allocation5], 16
    $region45: #{cartpole_hmmz_forward.3} parent=1 // pred_fallthru
      _
    // Predicated region
    $region46: #{cartpole_hmmz_forward.3} parent=1 // pred_check
      _
    $region47: #{cartpole_hmmz_forward.3} parent=1 // pred_check_branch
      %1870 = sbr.rel (0) target = $region49
    $region48: #{cartpole_hmmz_forward.3} parent=1 // pred_region
      %1871 = dma.done [#allocation13], 128
    $region49: #{cartpole_hmmz_forward.3} parent=1 // pred_fallthru
      _
    %1872 = vsyncpa [#allocation4], 1
    %1873 = vsyncpa [#allocation5], 1
    %1874 = vsyncpa [#allocation13], 1
    %1875 = vsyncpa [#allocation6], 1
    %1876 = vsyncpa [#allocation9], 1

</llo_original>
